<compile_context>
chip_gen: v7x
topology: tpu7x:2x2x1
jax: 0.10.0
libtpu: 0.0.40
codegen_flags: <defaults>
</compile_context>

<pallas_src>
import functools

import jax
import jax.numpy as jnp
from jax import lax
from jax.experimental import pallas as pl
from jax.experimental.pallas import tpu as pltpu

FPAD = 128  # lane-dense padded feature width used for every layer


# ----------------------------------------------------------------------------
# Fused GCN1 forward kernel (whole graph resident in VMEM)
# ----------------------------------------------------------------------------
def gcn1_kernel(x_ref, adj_ref,
                w1, b1, w2, b2, w3, b3, w4, b4,
                out_ref, *, num_classes):
    f32 = jnp.float32
    adj = adj_ref[...]            # (N, N) edge multiplicities (sum aggregation)
    h = x_ref[...]                # (N, FPAD)

    def sage(h, w_ref, b_ref):
        # Fused + reassociated SAGEConv (aggr='sum', normalize=True):
        #   hw  = h @ [W_l | W_r]          (single K=FPAD dot -> [hl | hr])
        #   out = A @ hl + hr + b          (adjacency dot on projected feats)
        hw = jnp.dot(h, w_ref[...], preferred_element_type=f32)      # (N, 2F)
        hl = hw[:, :FPAD]
        hr = hw[:, FPAD:]
        aggr = jnp.dot(adj, hl, preferred_element_type=f32)          # (N, F)
        out = aggr + hr + b_ref[...]
        # normalize=True -> F.normalize(out, p=2, dim=-1), eps=1e-12,
        # implemented as rsqrt (EUP) + multiply instead of sqrt + divide.
        sumsq = jnp.sum(out * out, axis=-1, keepdims=True)
        return out * lax.rsqrt(jnp.maximum(sumsq, 1e-24))

    # Layers 1-3: SAGEConv -> ReLU (dropout p=0.5 is identity in eval mode).
    h = jnp.maximum(sage(h, w1, b1), 0.0)
    h = jnp.maximum(sage(h, w2, b2), 0.0)
    h = jnp.maximum(sage(h, w3, b3), 0.0)

    # Layer 4: SAGEConv -> log_softmax over the real (unpadded) classes.
    h = sage(h, w4, b4)
    lane = lax.broadcasted_iota(jnp.int32, h.shape, 1)
    z = jnp.where(lane < num_classes, h, -1e30)       # mask padded class lanes
    m = jnp.max(z, axis=-1, keepdims=True)
    zs = z - m
    out_ref[...] = zs - jnp.log(jnp.sum(jnp.exp(zs), axis=-1, keepdims=True))


# ----------------------------------------------------------------------------
# Wrapper: pad to lane-dense widths, fuse W_l/W_r, size VMEM, call the kernel
# ----------------------------------------------------------------------------
def _pad2d(a, rows, cols):
    a = jnp.asarray(a, jnp.float32)
    return jnp.zeros((rows, cols), jnp.float32).at[: a.shape[0], : a.shape[1]].set(a)


def gcn1_forward(x, adj, params):
    """params: list of 4 tuples (W_l [F_in,F_out], W_r [F_in,F_out], b [F_out])."""
    N, _ = x.shape
    num_classes = params[-1][0].shape[1]

    x_p = _pad2d(x, N, FPAD)
    adj_f = jnp.asarray(adj, jnp.float32)

    flat = []
    for (wl, wr, b) in params:
        w_cat = jnp.concatenate(
            [_pad2d(wl, FPAD, FPAD), _pad2d(wr, FPAD, FPAD)], axis=1)  # (F, 2F)
        flat += [w_cat, _pad2d(b.reshape(1, -1), 1, FPAD)]

    # Scoped-VMEM budget from the actual resident footprint (inputs + weights
    # + output all stay in VMEM), generous multiplier for Mosaic temporaries,
    # clamped so the request is valid on v5e / v6e / v7x alike.
    resident = sum(int(a.size) * 4 for a in [x_p, adj_f] + flat) + N * FPAD * 4
    vmem_limit = int(min(max(8 * resident, 16 << 20), 32 << 20))

    n_in = 2 + len(flat)
    out_padded = pl.pallas_call(
        functools.partial(gcn1_kernel, num_classes=num_classes),
        out_shape=jax.ShapeDtypeStruct((N, FPAD), jnp.float32),
        in_specs=[pl.BlockSpec(memory_space=pltpu.MemorySpace.VMEM)] * n_in,
        out_specs=pl.BlockSpec(memory_space=pltpu.MemorySpace.VMEM),
        compiler_params=pltpu.CompilerParams(vmem_limit_bytes=vmem_limit),
    )(x_p, adj_f, *flat)
    return out_padded[:, :num_classes]


# ----------------------------------------------------------------------------
# Pure-JAX reference (dense adjacency, original association, f32 HIGHEST)
# ----------------------------------------------------------------------------
def reference_forward(x, adj, params):
    hi = jax.lax.Precision.HIGHEST
    h = x
    for i, (wl, wr, b) in enumerate(params):
        aggr = jnp.dot(adj, h, precision=hi)
        out = jnp.dot(aggr, wl, precision=hi) + jnp.dot(h, wr, precision=hi) + b
        norm = jnp.sqrt(jnp.sum(out * out, axis=-1, keepdims=True))
        out = out / jnp.maximum(norm, 1e-12)
        if i < len(params) - 1:
            out = jax.nn.relu(out)     # dropout (p=0.5) is identity in eval
        h = out
    return jax.nn.log_softmax(h, axis=-1)


if __name__ == "__main__":
    # Small synthetic graph: N nodes, E directed edges.
    N, E = 256, 2048
    in_c, hid_c, out_c = 32, 64, 16

    key = jax.random.PRNGKey(0)
    kx, ke1, ke2, *kp = jax.random.split(key, 3 + 12)

    x = jax.random.normal(kx, (N, in_c), dtype=jnp.float32)

    # data.edge_index -> dense adjacency (A[dst, src] = multiplicity) for sum aggr.
    src = jax.random.randint(ke1, (E,), 0, N)
    dst = jax.random.randint(ke2, (E,), 0, N)
    adj = jnp.zeros((N, N), jnp.float32).at[dst, src].add(1.0)

    # Deterministic SAGEConv parameters for the 4 layers.
    dims = [(in_c, hid_c), (hid_c, hid_c), (hid_c, hid_c), (hid_c, out_c)]
    params = []
    for li, (fi, fo) in enumerate(dims):
        kwl, kwr, kb = kp[3 * li], kp[3 * li + 1], kp[3 * li + 2]
        wl = 0.1 * jax.random.normal(kwl, (fi, fo), dtype=jnp.float32)
        wr = 0.1 * jax.random.normal(kwr, (fi, fo), dtype=jnp.float32)
        b = 0.1 * jax.random.normal(kb, (fo,), dtype=jnp.float32)
        params.append((wl, wr, b))

    out = gcn1_forward(x, adj, params)
    out = jax.block_until_ready(out)

    ref = reference_forward(x, adj, params)
    assert out.shape == (N, out_c), out.shape
    max_err = float(jnp.max(jnp.abs(out - ref)))
    assert jnp.allclose(out, ref, rtol=1e-3, atol=1e-3), max_err

    print("KERNEL_OK")
</pallas_src>

<mosaic_0001>
module attributes {stable_mosaic.version = 11 : i64} {
  func.func @gcn1_kernel(%arg0: memref<256x128xf32, #tpu.memory_space<vmem>>, %arg1: memref<256x256xf32, #tpu.memory_space<vmem>>, %arg2: memref<128x256xf32, #tpu.memory_space<vmem>>, %arg3: memref<1x128xf32, #tpu.memory_space<vmem>>, %arg4: memref<128x256xf32, #tpu.memory_space<vmem>>, %arg5: memref<1x128xf32, #tpu.memory_space<vmem>>, %arg6: memref<128x256xf32, #tpu.memory_space<vmem>>, %arg7: memref<1x128xf32, #tpu.memory_space<vmem>>, %arg8: memref<128x256xf32, #tpu.memory_space<vmem>>, %arg9: memref<1x128xf32, #tpu.memory_space<vmem>>, %arg10: memref<256x128xf32, #tpu.memory_space<vmem>>) attributes {dimension_semantics = [], scalar_prefetch = 0 : i64, scratch_operands = 0 : i64, tpu.core_type = #tpu.core_type<tc>} {
    %c0 = arith.constant 0 : index
    %c0_0 = arith.constant 0 : index
    %0 = vector.load %arg1[%c0, %c0_0] : memref<256x256xf32, #tpu.memory_space<vmem>>, vector<256x256xf32>
    %c0_1 = arith.constant 0 : index
    %c0_2 = arith.constant 0 : index
    %1 = vector.load %arg0[%c0_1, %c0_2] : memref<256x128xf32, #tpu.memory_space<vmem>>, vector<256x128xf32>
    %c0_3 = arith.constant 0 : index
    %c0_4 = arith.constant 0 : index
    %2 = vector.load %arg2[%c0_3, %c0_4] : memref<128x256xf32, #tpu.memory_space<vmem>>, vector<128x256xf32>
    %cst = arith.constant dense<0.000000e+00> : vector<256x256xf32>
    %3 = tpu.matmul %1, %2, %cst {dimension_numbers = #tpu.dot_dimension_numbers<[1], [0], [0], [1], [0, 0, 1, 1], [], []>} : vector<256x128xf32>, vector<128x256xf32>, vector<256x256xf32> -> vector<256x256xf32>
    %4 = vector.extract_strided_slice %3 {offsets = [0, 0], sizes = [256, 128], strides = [1, 1]} : vector<256x256xf32> to vector<256x128xf32>
    %5 = vector.extract_strided_slice %3 {offsets = [0, 128], sizes = [256, 128], strides = [1, 1]} : vector<256x256xf32> to vector<256x128xf32>
    %cst_5 = arith.constant dense<0.000000e+00> : vector<256x128xf32>
    %6 = tpu.matmul %0, %4, %cst_5 {dimension_numbers = #tpu.dot_dimension_numbers<[1], [0], [0], [1], [0, 0, 1, 1], [], []>} : vector<256x256xf32>, vector<256x128xf32>, vector<256x128xf32> -> vector<256x128xf32>
    %7 = arith.addf %6, %5 : vector<256x128xf32>
    %c0_6 = arith.constant 0 : index
    %c0_7 = arith.constant 0 : index
    %8 = vector.load %arg3[%c0_6, %c0_7] : memref<1x128xf32, #tpu.memory_space<vmem>>, vector<1x128xf32>
    %9 = vector.broadcast %8 : vector<1x128xf32> to vector<256x128xf32>
    %10 = arith.addf %7, %9 : vector<256x128xf32>
    %11 = arith.mulf %10, %10 : vector<256x128xf32>
    %cst_8 = arith.constant dense<0.000000e+00> : vector<256xf32>
    %12 = vector.multi_reduction <add>, %11, %cst_8 [1] : vector<256x128xf32> to vector<256xf32>
    %13 = vector.shape_cast %12 : vector<256xf32> to vector<256x1xf32>
    %cst_9 = arith.constant 1.000000e-24 : f32
    %14 = vector.broadcast %cst_9 : f32 to vector<256x1xf32>
    %15 = arith.maximumf %13, %14 : vector<256x1xf32>
    %16 = math.rsqrt %15 : vector<256x1xf32>
    %17 = vector.broadcast %16 : vector<256x1xf32> to vector<256x128xf32>
    %18 = arith.mulf %10, %17 : vector<256x128xf32>
    %cst_10 = arith.constant 0.000000e+00 : f32
    %19 = vector.broadcast %cst_10 : f32 to vector<256x128xf32>
    %20 = arith.maximumf %18, %19 : vector<256x128xf32>
    %c0_11 = arith.constant 0 : index
    %c0_12 = arith.constant 0 : index
    %21 = vector.load %arg4[%c0_11, %c0_12] : memref<128x256xf32, #tpu.memory_space<vmem>>, vector<128x256xf32>
    %cst_13 = arith.constant dense<0.000000e+00> : vector<256x256xf32>
    %22 = tpu.matmul %20, %21, %cst_13 {dimension_numbers = #tpu.dot_dimension_numbers<[1], [0], [0], [1], [0, 0, 1, 1], [], []>} : vector<256x128xf32>, vector<128x256xf32>, vector<256x256xf32> -> vector<256x256xf32>
    %23 = vector.extract_strided_slice %22 {offsets = [0, 0], sizes = [256, 128], strides = [1, 1]} : vector<256x256xf32> to vector<256x128xf32>
    %24 = vector.extract_strided_slice %22 {offsets = [0, 128], sizes = [256, 128], strides = [1, 1]} : vector<256x256xf32> to vector<256x128xf32>
    %cst_14 = arith.constant dense<0.000000e+00> : vector<256x128xf32>
    %25 = tpu.matmul %0, %23, %cst_14 {dimension_numbers = #tpu.dot_dimension_numbers<[1], [0], [0], [1], [0, 0, 1, 1], [], []>} : vector<256x256xf32>, vector<256x128xf32>, vector<256x128xf32> -> vector<256x128xf32>
    %26 = arith.addf %25, %24 : vector<256x128xf32>
    %c0_15 = arith.constant 0 : index
    %c0_16 = arith.constant 0 : index
    %27 = vector.load %arg5[%c0_15, %c0_16] : memref<1x128xf32, #tpu.memory_space<vmem>>, vector<1x128xf32>
    %28 = vector.broadcast %27 : vector<1x128xf32> to vector<256x128xf32>
    %29 = arith.addf %26, %28 : vector<256x128xf32>
    %30 = arith.mulf %29, %29 : vector<256x128xf32>
    %cst_17 = arith.constant dense<0.000000e+00> : vector<256xf32>
    %31 = vector.multi_reduction <add>, %30, %cst_17 [1] : vector<256x128xf32> to vector<256xf32>
    %32 = vector.shape_cast %31 : vector<256xf32> to vector<256x1xf32>
    %cst_18 = arith.constant 1.000000e-24 : f32
    %33 = vector.broadcast %cst_18 : f32 to vector<256x1xf32>
    %34 = arith.maximumf %32, %33 : vector<256x1xf32>
    %35 = math.rsqrt %34 : vector<256x1xf32>
    %36 = vector.broadcast %35 : vector<256x1xf32> to vector<256x128xf32>
    %37 = arith.mulf %29, %36 : vector<256x128xf32>
    %cst_19 = arith.constant 0.000000e+00 : f32
    %38 = vector.broadcast %cst_19 : f32 to vector<256x128xf32>
    %39 = arith.maximumf %37, %38 : vector<256x128xf32>
    %c0_20 = arith.constant 0 : index
    %c0_21 = arith.constant 0 : index
    %40 = vector.load %arg6[%c0_20, %c0_21] : memref<128x256xf32, #tpu.memory_space<vmem>>, vector<128x256xf32>
    %cst_22 = arith.constant dense<0.000000e+00> : vector<256x256xf32>
    %41 = tpu.matmul %39, %40, %cst_22 {dimension_numbers = #tpu.dot_dimension_numbers<[1], [0], [0], [1], [0, 0, 1, 1], [], []>} : vector<256x128xf32>, vector<128x256xf32>, vector<256x256xf32> -> vector<256x256xf32>
    %42 = vector.extract_strided_slice %41 {offsets = [0, 0], sizes = [256, 128], strides = [1, 1]} : vector<256x256xf32> to vector<256x128xf32>
    %43 = vector.extract_strided_slice %41 {offsets = [0, 128], sizes = [256, 128], strides = [1, 1]} : vector<256x256xf32> to vector<256x128xf32>
    %cst_23 = arith.constant dense<0.000000e+00> : vector<256x128xf32>
    %44 = tpu.matmul %0, %42, %cst_23 {dimension_numbers = #tpu.dot_dimension_numbers<[1], [0], [0], [1], [0, 0, 1, 1], [], []>} : vector<256x256xf32>, vector<256x128xf32>, vector<256x128xf32> -> vector<256x128xf32>
    %45 = arith.addf %44, %43 : vector<256x128xf32>
    %c0_24 = arith.constant 0 : index
    %c0_25 = arith.constant 0 : index
    %46 = vector.load %arg7[%c0_24, %c0_25] : memref<1x128xf32, #tpu.memory_space<vmem>>, vector<1x128xf32>
    %47 = vector.broadcast %46 : vector<1x128xf32> to vector<256x128xf32>
    %48 = arith.addf %45, %47 : vector<256x128xf32>
    %49 = arith.mulf %48, %48 : vector<256x128xf32>
    %cst_26 = arith.constant dense<0.000000e+00> : vector<256xf32>
    %50 = vector.multi_reduction <add>, %49, %cst_26 [1] : vector<256x128xf32> to vector<256xf32>
    %51 = vector.shape_cast %50 : vector<256xf32> to vector<256x1xf32>
    %cst_27 = arith.constant 1.000000e-24 : f32
    %52 = vector.broadcast %cst_27 : f32 to vector<256x1xf32>
    %53 = arith.maximumf %51, %52 : vector<256x1xf32>
    %54 = math.rsqrt %53 : vector<256x1xf32>
    %55 = vector.broadcast %54 : vector<256x1xf32> to vector<256x128xf32>
    %56 = arith.mulf %48, %55 : vector<256x128xf32>
    %cst_28 = arith.constant 0.000000e+00 : f32
    %57 = vector.broadcast %cst_28 : f32 to vector<256x128xf32>
    %58 = arith.maximumf %56, %57 : vector<256x128xf32>
    %c0_29 = arith.constant 0 : index
    %c0_30 = arith.constant 0 : index
    %59 = vector.load %arg8[%c0_29, %c0_30] : memref<128x256xf32, #tpu.memory_space<vmem>>, vector<128x256xf32>
    %cst_31 = arith.constant dense<0.000000e+00> : vector<256x256xf32>
    %60 = tpu.matmul %58, %59, %cst_31 {dimension_numbers = #tpu.dot_dimension_numbers<[1], [0], [0], [1], [0, 0, 1, 1], [], []>} : vector<256x128xf32>, vector<128x256xf32>, vector<256x256xf32> -> vector<256x256xf32>
    %61 = vector.extract_strided_slice %60 {offsets = [0, 0], sizes = [256, 128], strides = [1, 1]} : vector<256x256xf32> to vector<256x128xf32>
    %62 = vector.extract_strided_slice %60 {offsets = [0, 128], sizes = [256, 128], strides = [1, 1]} : vector<256x256xf32> to vector<256x128xf32>
    %cst_32 = arith.constant dense<0.000000e+00> : vector<256x128xf32>
    %63 = tpu.matmul %0, %61, %cst_32 {dimension_numbers = #tpu.dot_dimension_numbers<[1], [0], [0], [1], [0, 0, 1, 1], [], []>} : vector<256x256xf32>, vector<256x128xf32>, vector<256x128xf32> -> vector<256x128xf32>
    %64 = arith.addf %63, %62 : vector<256x128xf32>
    %c0_33 = arith.constant 0 : index
    %c0_34 = arith.constant 0 : index
    %65 = vector.load %arg9[%c0_33, %c0_34] : memref<1x128xf32, #tpu.memory_space<vmem>>, vector<1x128xf32>
    %66 = vector.broadcast %65 : vector<1x128xf32> to vector<256x128xf32>
    %67 = arith.addf %64, %66 : vector<256x128xf32>
    %68 = arith.mulf %67, %67 : vector<256x128xf32>
    %cst_35 = arith.constant dense<0.000000e+00> : vector<256xf32>
    %69 = vector.multi_reduction <add>, %68, %cst_35 [1] : vector<256x128xf32> to vector<256xf32>
    %70 = vector.shape_cast %69 : vector<256xf32> to vector<256x1xf32>
    %cst_36 = arith.constant 1.000000e-24 : f32
    %71 = vector.broadcast %cst_36 : f32 to vector<256x1xf32>
    %72 = arith.maximumf %70, %71 : vector<256x1xf32>
    %73 = math.rsqrt %72 : vector<256x1xf32>
    %74 = vector.broadcast %73 : vector<256x1xf32> to vector<256x128xf32>
    %75 = arith.mulf %67, %74 : vector<256x128xf32>
    %76 = tpu.iota {dimensions = array<i32: 1>} : vector<256x128xi32>
    %c16_i32 = arith.constant 16 : i32
    %77 = vector.broadcast %c16_i32 : i32 to vector<256x128xi32>
    %78 = arith.cmpi slt, %76, %77 : vector<256x128xi32>
    %cst_37 = arith.constant -1.000000e+30 : f32
    %79 = vector.broadcast %cst_37 : f32 to vector<256x128xf32>
    %80 = arith.select %78, %75, %79 : vector<256x128xi1>, vector<256x128xf32>
    %cst_38 = arith.constant dense<0xFF800000> : vector<256xf32>
    %81 = vector.multi_reduction <maximumf>, %80, %cst_38 [1] : vector<256x128xf32> to vector<256xf32>
    %82 = vector.shape_cast %81 : vector<256xf32> to vector<256x1xf32>
    %83 = vector.broadcast %82 : vector<256x1xf32> to vector<256x128xf32>
    %84 = arith.subf %80, %83 : vector<256x128xf32>
    %85 = math.exp %84 : vector<256x128xf32>
    %cst_39 = arith.constant dense<0.000000e+00> : vector<256xf32>
    %86 = vector.multi_reduction <add>, %85, %cst_39 [1] : vector<256x128xf32> to vector<256xf32>
    %87 = vector.shape_cast %86 : vector<256xf32> to vector<256x1xf32>
    %88 = math.log %87 : vector<256x1xf32>
    %89 = vector.broadcast %88 : vector<256x1xf32> to vector<256x128xf32>
    %90 = arith.subf %84, %89 : vector<256x128xf32>
    %c0_40 = arith.constant 0 : index
    %c0_41 = arith.constant 0 : index
    %91 = vector.load %arg10[%c0_40, %c0_41] : memref<256x128xf32, #tpu.memory_space<vmem>>, vector<256x128xf32>
    tpu.vector_store %arg10[%c0_40, %c0_41], %90 {strides = array<i32>} : memref<256x128xf32, #tpu.memory_space<vmem>>, vector<256x128xf32>,
    return
  }
}

</mosaic_0001>

<llo_original>
// kernel: tpu_custom_call.1
$region0: #{tpu_custom_call.1}
  #allocation0 [shape = 'u32[]', space=smem, size = 0x4, offset = 0x4, fixed_abs, tag = 'smem constant byte address 0x4 - core index']
  #allocation1 [shape = 'u32[144,128]{1,0:T(1,128)}', space=vmem, size = 0x12000, scoped, tag = 'internal scratch']
  %s0 = inlined_call_operand.hbm [shape: f32[256,128], index: 0, kind: input, shape index: {}]
  %s1 = inlined_call_operand.hbm [shape: f32[256,256], index: 1, kind: input, shape index: {}]
  %s2 = inlined_call_operand.hbm [shape: f32[128,256], index: 2, kind: input, shape index: {}]
  %s3 = inlined_call_operand.vmem [shape: f32[1,128], index: 3, kind: input, shape index: {}]
  %s4 = inlined_call_operand.hbm [shape: f32[128,256], index: 4, kind: input, shape index: {}]
  %s5 = inlined_call_operand.vmem [shape: f32[1,128], index: 5, kind: input, shape index: {}]
  %s6 = inlined_call_operand.hbm [shape: f32[128,256], index: 6, kind: input, shape index: {}]
  %s7 = inlined_call_operand.vmem [shape: f32[1,128], index: 7, kind: input, shape index: {}]
  %s8 = inlined_call_operand.hbm [shape: f32[128,256], index: 8, kind: input, shape index: {}]
  %s9 = inlined_call_operand.vmem [shape: f32[1,128], index: 9, kind: input, shape index: {}]
  %s10 = inlined_call_operand.hbm [shape: f32[256,128], index: 10, kind: output, shape index: {}]
  %s11 = sld [smem:[#allocation0]]
  $region74: #{tpu_custom_call.1} parent=0
    _
  %s13 = ssub.s32 1, %s11
  %s14 = scalar_select 0, %s13, %s11
  $region1: #{tpu_custom_call.1} parent=0
    #allocation2 [shape = 'u8[131072]{0}', space=vmem, size = 0x20000, scoped, tag = 'input window, operand 0, single buffered']
    #allocation3 [shape = 's32[1]{0}', space=sflag, size = 0x4, scoped, tag = 'scoped memory for tpu_custom_call.1']
    #allocation4 [shape = 's32[1]{0}', space=sflag, size = 0x4, scoped, tag = 'scoped memory for tpu_custom_call.1']
    #allocation5 [shape = 'u8[262144]{0}', space=vmem, size = 0x40000, scoped, tag = 'input window, operand 1, single buffered']
    #allocation6 [shape = 's32[1]{0}', space=sflag, size = 0x4, scoped, tag = 'scoped memory for tpu_custom_call.1']
    #allocation7 [shape = 'u8[131072]{0}', space=vmem, size = 0x20000, scoped, tag = 'input window, operand 2, single buffered']
    #allocation8 [shape = 'u8[131072]{0}', space=vmem, size = 0x20000, scoped, tag = 'input window, operand 4, single buffered']
    #allocation9 [shape = 's32[1]{0}', space=sflag, size = 0x4, scoped, tag = 'scoped memory for tpu_custom_call.1']
    #allocation10 [shape = 'u8[131072]{0}', space=vmem, size = 0x20000, scoped, tag = 'input window, operand 6, single buffered']
    #allocation11 [shape = 'u8[131072]{0}', space=vmem, size = 0x20000, scoped, tag = 'input window, operand 8, single buffered']
    #allocation12 [shape = 's32[1]{0}', space=sflag, size = 0x4, scoped, tag = 'scoped memory for tpu_custom_call.1']
    #allocation13 [shape = 'u8[131072]{0}', space=vmem, size = 0x20000, scoped, tag = 'output window, operand 0, single buffered']
    %15 = vsyncpa [#allocation3], 0
    %16 = vsyncpa [#allocation6], 0
    %17 = vsyncpa [#allocation9], 0
    %18 = vsyncpa [#allocation12], 0
    %19 = vsyncpa [#allocation4], 0
    // Predicated region
    $region2: #{tpu_custom_call.1} parent=1 // pred_check
      _
    $region3: #{tpu_custom_call.1} parent=1 // pred_check_branch
      %21 = sbr.rel (0) target = $region5
    $region4: #{tpu_custom_call.1} parent=1 // pred_region
      %s23 = ssub.s32 4096, 4096
      %24 = vsyncadd [#allocation3], %s23
      %s25 = sshll.u32 [#allocation2], 4
      %s26 = int_to_ptr.vmem [resolvable:$true] %s25
      %31 = dma.hbm_to_vmem [thread:$0]  %s0, 4096, %s26, [#allocation3], 128, 128, 8
    $region5: #{tpu_custom_call.1} parent=1 // pred_fallthru
      _
    // Predicated region
    $region6: #{tpu_custom_call.1} parent=1 // pred_check
      _
    $region7: #{tpu_custom_call.1} parent=1 // pred_check_branch
      %33 = sbr.rel (0) target = $region9
    $region8: #{tpu_custom_call.1} parent=1 // pred_region
      %s35 = ssub.s32 8192, 8192
      %36 = vsyncadd [#allocation6], %s35
      %s37 = sshll.u32 [#allocation5], 4
      %s38 = int_to_ptr.vmem [resolvable:$true] %s37
      %43 = dma.hbm_to_vmem [thread:$0]  %s1, 8192, %s38, [#allocation6], 256, 256, 16
    $region9: #{tpu_custom_call.1} parent=1 // pred_fallthru
      _
    // Predicated region
    $region10: #{tpu_custom_call.1} parent=1 // pred_check
      _
    $region11: #{tpu_custom_call.1} parent=1 // pred_check_branch
      %45 = sbr.rel (0) target = $region13
    $region12: #{tpu_custom_call.1} parent=1 // pred_region
      %s47 = ssub.s32 4096, 4096
      %48 = vsyncadd [#allocation6], %s47
      %s49 = sshll.u32 [#allocation7], 4
      %s50 = int_to_ptr.vmem [resolvable:$true] %s49
      %55 = dma.hbm_to_vmem [thread:$0]  %s2, 4096, %s50, [#allocation6], 256, 256, 16
    $region13: #{tpu_custom_call.1} parent=1 // pred_fallthru
      _
    // Predicated region
    $region14: #{tpu_custom_call.1} parent=1 // pred_check
      _
    $region15: #{tpu_custom_call.1} parent=1 // pred_check_branch
      %57 = sbr.rel (0) target = $region17
    $region16: #{tpu_custom_call.1} parent=1 // pred_region
      _
    $region17: #{tpu_custom_call.1} parent=1 // pred_fallthru
      _
    // Predicated region
    $region18: #{tpu_custom_call.1} parent=1 // pred_check
      _
    $region19: #{tpu_custom_call.1} parent=1 // pred_check_branch
      %59 = sbr.rel (0) target = $region21
    $region20: #{tpu_custom_call.1} parent=1 // pred_region
      %s61 = ssub.s32 4096, 4096
      %62 = vsyncadd [#allocation9], %s61
      %s63 = sshll.u32 [#allocation8], 4
      %s64 = int_to_ptr.vmem [resolvable:$true] %s63
      %69 = dma.hbm_to_vmem [thread:$0]  %s4, 4096, %s64, [#allocation9], 256, 256, 16
    $region21: #{tpu_custom_call.1} parent=1 // pred_fallthru
      _
    // Predicated region
    $region22: #{tpu_custom_call.1} parent=1 // pred_check
      _
    $region23: #{tpu_custom_call.1} parent=1 // pred_check_branch
      %71 = sbr.rel (0) target = $region25
    $region24: #{tpu_custom_call.1} parent=1 // pred_region
      _
    $region25: #{tpu_custom_call.1} parent=1 // pred_fallthru
      _
    // Predicated region
    $region26: #{tpu_custom_call.1} parent=1 // pred_check
      _
    $region27: #{tpu_custom_call.1} parent=1 // pred_check_branch
      %73 = sbr.rel (0) target = $region29
    $region28: #{tpu_custom_call.1} parent=1 // pred_region
      %s75 = ssub.s32 4096, 4096
      %76 = vsyncadd [#allocation9], %s75
      %s77 = sshll.u32 [#allocation10], 4
      %s78 = int_to_ptr.vmem [resolvable:$true] %s77
      %83 = dma.hbm_to_vmem [thread:$0]  %s6, 4096, %s78, [#allocation9], 256, 256, 16
    $region29: #{tpu_custom_call.1} parent=1 // pred_fallthru
      _
    // Predicated region
    $region30: #{tpu_custom_call.1} parent=1 // pred_check
      _
    $region31: #{tpu_custom_call.1} parent=1 // pred_check_branch
      %85 = sbr.rel (0) target = $region33
    $region32: #{tpu_custom_call.1} parent=1 // pred_region
      _
    $region33: #{tpu_custom_call.1} parent=1 // pred_fallthru
      _
    // Predicated region
    $region34: #{tpu_custom_call.1} parent=1 // pred_check
      _
    $region35: #{tpu_custom_call.1} parent=1 // pred_check_branch
      %87 = sbr.rel (0) target = $region37
    $region36: #{tpu_custom_call.1} parent=1 // pred_region
      %s89 = ssub.s32 4096, 4096
      %90 = vsyncadd [#allocation12], %s89
      %s91 = sshll.u32 [#allocation11], 4
      %s92 = int_to_ptr.vmem [resolvable:$true] %s91
      %97 = dma.hbm_to_vmem [thread:$0]  %s8, 4096, %s92, [#allocation12], 256, 256, 16
    $region37: #{tpu_custom_call.1} parent=1 // pred_fallthru
      _
    // Predicated region
    $region38: #{tpu_custom_call.1} parent=1 // pred_check
      _
    $region39: #{tpu_custom_call.1} parent=1 // pred_check_branch
      %99 = sbr.rel (0) target = $region41
    $region40: #{tpu_custom_call.1} parent=1 // pred_region
      _
    $region41: #{tpu_custom_call.1} parent=1 // pred_fallthru
      _
    // Predicated region
    $region42: #{tpu_custom_call.1} parent=1 // pred_check
      _
    $region43: #{tpu_custom_call.1} parent=1 // pred_check_branch
      %101 = sbr.rel (0) target = $region45
    $region44: #{tpu_custom_call.1} parent=1 // pred_region
      %102 = dma.done [#allocation3], 4096
    $region45: #{tpu_custom_call.1} parent=1 // pred_fallthru
      _
    // Predicated region
    $region46: #{tpu_custom_call.1} parent=1 // pred_check
      _
    $region47: #{tpu_custom_call.1} parent=1 // pred_check_branch
      %104 = sbr.rel (0) target = $region49
    $region48: #{tpu_custom_call.1} parent=1 // pred_region
      %105 = dma.done [#allocation6], 8192
    $region49: #{tpu_custom_call.1} parent=1 // pred_fallthru
      _
    // Predicated region
    $region50: #{tpu_custom_call.1} parent=1 // pred_check
      _
    $region51: #{tpu_custom_call.1} parent=1 // pred_check_branch
      %107 = sbr.rel (0) target = $region53
    $region52: #{tpu_custom_call.1} parent=1 // pred_region
      %108 = dma.done [#allocation6], 4096
    $region53: #{tpu_custom_call.1} parent=1 // pred_fallthru
      _
    // Predicated region
    $region54: #{tpu_custom_call.1} parent=1 // pred_check
      _
    $region55: #{tpu_custom_call.1} parent=1 // pred_check_branch
      %110 = sbr.rel (0) target = $region57
    $region56: #{tpu_custom_call.1} parent=1 // pred_region
      %111 = dma.done [#allocation9], 4096
    $region57: #{tpu_custom_call.1} parent=1 // pred_fallthru
      _
    // Predicated region
    $region58: #{tpu_custom_call.1} parent=1 // pred_check
      _
    $region59: #{tpu_custom_call.1} parent=1 // pred_check_branch
      %113 = sbr.rel (0) target = $region61
    $region60: #{tpu_custom_call.1} parent=1 // pred_region
      %114 = dma.done [#allocation9], 4096
    $region61: #{tpu_custom_call.1} parent=1 // pred_fallthru
      _
    // Predicated region
    $region62: #{tpu_custom_call.1} parent=1 // pred_check
      _
    $region63: #{tpu_custom_call.1} parent=1 // pred_check_branch
      %116 = sbr.rel (0) target = $region65
    $region64: #{tpu_custom_call.1} parent=1 // pred_region
      %117 = dma.done [#allocation12], 4096
    $region65: #{tpu_custom_call.1} parent=1 // pred_fallthru
      _
    %v118 = vld [vmem:[#allocation5] sm:$0xff]
    %v119 = vld [vmem:[#allocation5 + $0x8] sm:$0xff]
    %v120 = vld [vmem:[#allocation5 + $0x10] sm:$0xff]
    %v121 = vld [vmem:[#allocation5 + $0x18] sm:$0xff]
    %v122 = vld [vmem:[#allocation5 + $0x20] sm:$0xff]
    %v123 = vld [vmem:[#allocation5 + $0x28] sm:$0xff]
    %v124 = vld [vmem:[#allocation5 + $0x30] sm:$0xff]
    %v125 = vld [vmem:[#allocation5 + $0x38] sm:$0xff]
    %v126 = vld [vmem:[#allocation5 + $0x40] sm:$0xff]
    %v127 = vld [vmem:[#allocation5 + $0x48] sm:$0xff]
    %v128 = vld [vmem:[#allocation5 + $0x50] sm:$0xff]
    %v129 = vld [vmem:[#allocation5 + $0x58] sm:$0xff]
    %v130 = vld [vmem:[#allocation5 + $0x60] sm:$0xff]
    %v131 = vld [vmem:[#allocation5 + $0x68] sm:$0xff]
    %v132 = vld [vmem:[#allocation5 + $0x70] sm:$0xff]
    %v133 = vld [vmem:[#allocation5 + $0x78] sm:$0xff]
    %v134 = vld [vmem:[#allocation5 + $0x80] sm:$0xff]
    %v135 = vld [vmem:[#allocation5 + $0x88] sm:$0xff]
    %v136 = vld [vmem:[#allocation5 + $0x90] sm:$0xff]
    %v137 = vld [vmem:[#allocation5 + $0x98] sm:$0xff]
    %v138 = vld [vmem:[#allocation5 + $0xa0] sm:$0xff]
    %v139 = vld [vmem:[#allocation5 + $0xa8] sm:$0xff]
    %v140 = vld [vmem:[#allocation5 + $0xb0] sm:$0xff]
    %v141 = vld [vmem:[#allocation5 + $0xb8] sm:$0xff]
    %v142 = vld [vmem:[#allocation5 + $0xc0] sm:$0xff]
    %v143 = vld [vmem:[#allocation5 + $0xc8] sm:$0xff]
    %v144 = vld [vmem:[#allocation5 + $0xd0] sm:$0xff]
    %v145 = vld [vmem:[#allocation5 + $0xd8] sm:$0xff]
    %v146 = vld [vmem:[#allocation5 + $0xe0] sm:$0xff]
    %v147 = vld [vmem:[#allocation5 + $0xe8] sm:$0xff]
    %v148 = vld [vmem:[#allocation5 + $0xf0] sm:$0xff]
    %v149 = vld [vmem:[#allocation5 + $0xf8] sm:$0xff]
    %v150 = vld [vmem:[#allocation5 + $0x100] sm:$0xff]
    %v151 = vld [vmem:[#allocation5 + $0x108] sm:$0xff]
    %v152 = vld [vmem:[#allocation5 + $0x110] sm:$0xff]
    %v153 = vld [vmem:[#allocation5 + $0x118] sm:$0xff]
    %v154 = vld [vmem:[#allocation5 + $0x120] sm:$0xff]
    %v155 = vld [vmem:[#allocation5 + $0x128] sm:$0xff]
    %v156 = vld [vmem:[#allocation5 + $0x130] sm:$0xff]
    %v157 = vld [vmem:[#allocation5 + $0x138] sm:$0xff]
    %v158 = vld [vmem:[#allocation5 + $0x140] sm:$0xff]
    %v159 = vld [vmem:[#allocation5 + $0x148] sm:$0xff]
    %v160 = vld [vmem:[#allocation5 + $0x150] sm:$0xff]
    %v161 = vld [vmem:[#allocation5 + $0x158] sm:$0xff]
    %v162 = vld [vmem:[#allocation5 + $0x160] sm:$0xff]
    %v163 = vld [vmem:[#allocation5 + $0x168] sm:$0xff]
    %v164 = vld [vmem:[#allocation5 + $0x170] sm:$0xff]
    %v165 = vld [vmem:[#allocation5 + $0x178] sm:$0xff]
    %v166 = vld [vmem:[#allocation5 + $0x180] sm:$0xff]
    %v167 = vld [vmem:[#allocation5 + $0x188] sm:$0xff]
    %v168 = vld [vmem:[#allocation5 + $0x190] sm:$0xff]
    %v169 = vld [vmem:[#allocation5 + $0x198] sm:$0xff]
    %v170 = vld [vmem:[#allocation5 + $0x1a0] sm:$0xff]
    %v171 = vld [vmem:[#allocation5 + $0x1a8] sm:$0xff]
    %v172 = vld [vmem:[#allocation5 + $0x1b0] sm:$0xff]
    %v173 = vld [vmem:[#allocation5 + $0x1b8] sm:$0xff]
    %v174 = vld [vmem:[#allocation5 + $0x1c0] sm:$0xff]
    %v175 = vld [vmem:[#allocation5 + $0x1c8] sm:$0xff]
    %v176 = vld [vmem:[#allocation5 + $0x1d0] sm:$0xff]
    %v177 = vld [vmem:[#allocation5 + $0x1d8] sm:$0xff]
    %v178 = vld [vmem:[#allocation5 + $0x1e0] sm:$0xff]
    %v179 = vld [vmem:[#allocation5 + $0x1e8] sm:$0xff]
    %v180 = vld [vmem:[#allocation5 + $0x1f0] sm:$0xff]
    %v181 = vld [vmem:[#allocation5 + $0x1f8] sm:$0xff]
    %v182 = vld [vmem:[#allocation2] sm:$0xff]
    %v183 = vld [vmem:[#allocation2 + $0x8] sm:$0xff]
    %v184 = vld [vmem:[#allocation2 + $0x10] sm:$0xff]
    %v185 = vld [vmem:[#allocation2 + $0x18] sm:$0xff]
    %v186 = vld [vmem:[#allocation2 + $0x20] sm:$0xff]
    %v187 = vld [vmem:[#allocation2 + $0x28] sm:$0xff]
    %v188 = vld [vmem:[#allocation2 + $0x30] sm:$0xff]
    %v189 = vld [vmem:[#allocation2 + $0x38] sm:$0xff]
    %v190 = vld [vmem:[#allocation2 + $0x40] sm:$0xff]
    %v191 = vld [vmem:[#allocation2 + $0x48] sm:$0xff]
    %v192 = vld [vmem:[#allocation2 + $0x50] sm:$0xff]
    %v193 = vld [vmem:[#allocation2 + $0x58] sm:$0xff]
    %v194 = vld [vmem:[#allocation2 + $0x60] sm:$0xff]
    %v195 = vld [vmem:[#allocation2 + $0x68] sm:$0xff]
    %v196 = vld [vmem:[#allocation2 + $0x70] sm:$0xff]
    %v197 = vld [vmem:[#allocation2 + $0x78] sm:$0xff]
    %v198 = vld [vmem:[#allocation2 + $0x80] sm:$0xff]
    %v199 = vld [vmem:[#allocation2 + $0x88] sm:$0xff]
    %v200 = vld [vmem:[#allocation2 + $0x90] sm:$0xff]
    %v201 = vld [vmem:[#allocation2 + $0x98] sm:$0xff]
    %v202 = vld [vmem:[#allocation2 + $0xa0] sm:$0xff]
    %v203 = vld [vmem:[#allocation2 + $0xa8] sm:$0xff]
    %v204 = vld [vmem:[#allocation2 + $0xb0] sm:$0xff]
    %v205 = vld [vmem:[#allocation2 + $0xb8] sm:$0xff]
    %v206 = vld [vmem:[#allocation2 + $0xc0] sm:$0xff]
    %v207 = vld [vmem:[#allocation2 + $0xc8] sm:$0xff]
    %v208 = vld [vmem:[#allocation2 + $0xd0] sm:$0xff]
    %v209 = vld [vmem:[#allocation2 + $0xd8] sm:$0xff]
    %v210 = vld [vmem:[#allocation2 + $0xe0] sm:$0xff]
    %v211 = vld [vmem:[#allocation2 + $0xe8] sm:$0xff]
    %v212 = vld [vmem:[#allocation2 + $0xf0] sm:$0xff]
    %v213 = vld [vmem:[#allocation2 + $0xf8] sm:$0xff]
    %v214 = vld [vmem:[#allocation7] sm:$0xff]
    %v215 = vld [vmem:[#allocation7 + $0x8] sm:$0xff]
    %v216 = vld [vmem:[#allocation7 + $0x10] sm:$0xff]
    %v217 = vld [vmem:[#allocation7 + $0x18] sm:$0xff]
    %v218 = vld [vmem:[#allocation7 + $0x20] sm:$0xff]
    %v219 = vld [vmem:[#allocation7 + $0x28] sm:$0xff]
    %v220 = vld [vmem:[#allocation7 + $0x30] sm:$0xff]
    %v221 = vld [vmem:[#allocation7 + $0x38] sm:$0xff]
    %v222 = vld [vmem:[#allocation7 + $0x40] sm:$0xff]
    %v223 = vld [vmem:[#allocation7 + $0x48] sm:$0xff]
    %v224 = vld [vmem:[#allocation7 + $0x50] sm:$0xff]
    %v225 = vld [vmem:[#allocation7 + $0x58] sm:$0xff]
    %v226 = vld [vmem:[#allocation7 + $0x60] sm:$0xff]
    %v227 = vld [vmem:[#allocation7 + $0x68] sm:$0xff]
    %v228 = vld [vmem:[#allocation7 + $0x70] sm:$0xff]
    %v229 = vld [vmem:[#allocation7 + $0x78] sm:$0xff]
    %v230 = vld [vmem:[#allocation7 + $0x80] sm:$0xff]
    %v231 = vld [vmem:[#allocation7 + $0x88] sm:$0xff]
    %v232 = vld [vmem:[#allocation7 + $0x90] sm:$0xff]
    %v233 = vld [vmem:[#allocation7 + $0x98] sm:$0xff]
    %v234 = vld [vmem:[#allocation7 + $0xa0] sm:$0xff]
    %v235 = vld [vmem:[#allocation7 + $0xa8] sm:$0xff]
    %v236 = vld [vmem:[#allocation7 + $0xb0] sm:$0xff]
    %v237 = vld [vmem:[#allocation7 + $0xb8] sm:$0xff]
    %v238 = vld [vmem:[#allocation7 + $0xc0] sm:$0xff]
    %v239 = vld [vmem:[#allocation7 + $0xc8] sm:$0xff]
    %v240 = vld [vmem:[#allocation7 + $0xd0] sm:$0xff]
    %v241 = vld [vmem:[#allocation7 + $0xd8] sm:$0xff]
    %v242 = vld [vmem:[#allocation7 + $0xe0] sm:$0xff]
    %v243 = vld [vmem:[#allocation7 + $0xe8] sm:$0xff]
    %v244 = vld [vmem:[#allocation7 + $0xf0] sm:$0xff]
    %v245 = vld [vmem:[#allocation7 + $0xf8] sm:$0xff]
    %246 = vmatprep.subr.mxu0 %v215
    %247 = vmatpush1.msra.mxu0 %v214
    %248 = vmatprep.subr.mxu0 %v217
    %249 = vmatpush1.msra.mxu0 %v216
    %250 = vmatprep.subr.mxu0 %v219
    %251 = vmatpush1.msra.mxu0 %v218
    %252 = vmatprep.subr.mxu0 %v221
    %253 = vmatpush1.msra.mxu0 %v220
    %254 = vmatprep.subr.mxu0 %v223
    %255 = vmatpush1.msra.mxu0 %v222
    %256 = vmatprep.subr.mxu0 %v225
    %257 = vmatpush1.msra.mxu0 %v224
    %258 = vmatprep.subr.mxu0 %v227
    %259 = vmatpush1.msra.mxu0 %v226
    %260 = vmatprep.subr.mxu0 %v229
    %261 = vmatpush1.msra.mxu0 %v228
    %262 = vmatprep.subr.mxu0 %v231
    %263 = vmatpush1.msra.mxu0 %v230
    %264 = vmatprep.subr.mxu0 %v233
    %265 = vmatpush1.msra.mxu0 %v232
    %266 = vmatprep.subr.mxu0 %v235
    %267 = vmatpush1.msra.mxu0 %v234
    %268 = vmatprep.subr.mxu0 %v237
    %269 = vmatpush1.msra.mxu0 %v236
    %270 = vmatprep.subr.mxu0 %v239
    %271 = vmatpush1.msra.mxu0 %v238
    %272 = vmatprep.subr.mxu0 %v241
    %273 = vmatpush1.msra.mxu0 %v240
    %274 = vmatprep.subr.mxu0 %v243
    %275 = vmatpush1.msra.mxu0 %v242
    %276 = vmatprep.subr.mxu0 %v245
    %277 = vmatpush1.msra.mxu0 %v244
    %278 = vmatprep.subr.mxu0 0.0
    %279 = vmatpush1.msra.mxu0 0.0
    %280 = vmatprep.subr.mxu0 0.0
    %281 = vmatpush1.msra.mxu0 0.0
    %282 = vmatprep.subr.mxu0 0.0
    %283 = vmatpush1.msra.mxu0 0.0
    %284 = vmatprep.subr.mxu0 0.0
    %285 = vmatpush1.msra.mxu0 0.0
    %286 = vmatprep.subr.mxu0 0.0
    %287 = vmatpush1.msra.mxu0 0.0
    %288 = vmatprep.subr.mxu0 0.0
    %289 = vmatpush1.msra.mxu0 0.0
    %290 = vmatprep.subr.mxu0 0.0
    %291 = vmatpush1.msra.mxu0 0.0
    %292 = vmatprep.subr.mxu0 0.0
    %293 = vmatpush1.msra.mxu0 0.0
    %294 = vmatprep.subr.mxu0 0.0
    %295 = vmatpush1.msra.mxu0 0.0
    %296 = vmatprep.subr.mxu0 0.0
    %297 = vmatpush1.msra.mxu0 0.0
    %298 = vmatprep.subr.mxu0 0.0
    %299 = vmatpush1.msra.mxu0 0.0
    %300 = vmatprep.subr.mxu0 0.0
    %301 = vmatpush1.msra.mxu0 0.0
    %302 = vmatprep.subr.mxu0 0.0
    %303 = vmatpush1.msra.mxu0 0.0
    %304 = vmatprep.subr.mxu0 0.0
    %305 = vmatpush1.msra.mxu0 0.0
    %306 = vmatprep.subr.mxu0 0.0
    %307 = vmatpush1.msra.mxu0 0.0
    %308 = vmatprep.subr.mxu0 0.0
    %309 = vmatpush1.msra.mxu0 0.0
    %310 = vmatprep.mubr.f32.mxu0 0.0
    %311 = vmatmul.mubr.f32.gmra.mrb[0].mxu0 %v182
    %v312 = vpop.f32.mrb[0].mxu0
    %v313 = vadd.f32 0.0, %v312
    %v314 = vpop.f32.mrb[0].mxu0
    %v315 = vadd.f32 0.0, %v314
    %316 = vmatprep.mubr.f32.mxu0 0.0
    %317 = vmatmul.mubr.f32.gmra.mrb[0].mxu0 %v183
    %v318 = vpop.f32.mrb[0].mxu0
    %v319 = vadd.f32 0.0, %v318
    %v320 = vpop.f32.mrb[0].mxu0
    %v321 = vadd.f32 0.0, %v320
    %322 = vmatprep.mubr.f32.mxu0 0.0
    %323 = vmatmul.mubr.f32.gmra.mrb[0].mxu0 %v184
    %v324 = vpop.f32.mrb[0].mxu0
    %v325 = vadd.f32 0.0, %v324
    %v326 = vpop.f32.mrb[0].mxu0
    %v327 = vadd.f32 0.0, %v326
    %328 = vmatprep.mubr.f32.mxu0 0.0
    %329 = vmatmul.mubr.f32.gmra.mrb[0].mxu0 %v185
    %v330 = vpop.f32.mrb[0].mxu0
    %v331 = vadd.f32 0.0, %v330
    %v332 = vpop.f32.mrb[0].mxu0
    %v333 = vadd.f32 0.0, %v332
    %334 = vmatprep.mubr.f32.mxu0 0.0
    %335 = vmatmul.mubr.f32.gmra.mrb[0].mxu0 %v186
    %v336 = vpop.f32.mrb[0].mxu0
    %v337 = vadd.f32 0.0, %v336
    %v338 = vpop.f32.mrb[0].mxu0
    %v339 = vadd.f32 0.0, %v338
    %340 = vmatprep.mubr.f32.mxu0 0.0
    %341 = vmatmul.mubr.f32.gmra.mrb[0].mxu0 %v187
    %v342 = vpop.f32.mrb[0].mxu0
    %v343 = vadd.f32 0.0, %v342
    %v344 = vpop.f32.mrb[0].mxu0
    %v345 = vadd.f32 0.0, %v344
    %346 = vmatprep.mubr.f32.mxu0 0.0
    %347 = vmatmul.mubr.f32.gmra.mrb[0].mxu0 %v188
    %v348 = vpop.f32.mrb[0].mxu0
    %v349 = vadd.f32 0.0, %v348
    %v350 = vpop.f32.mrb[0].mxu0
    %v351 = vadd.f32 0.0, %v350
    %352 = vmatprep.mubr.f32.mxu0 0.0
    %353 = vmatmul.mubr.f32.gmra.mrb[0].mxu0 %v189
    %v354 = vpop.f32.mrb[0].mxu0
    %v355 = vadd.f32 0.0, %v354
    %v356 = vpop.f32.mrb[0].mxu0
    %v357 = vadd.f32 0.0, %v356
    %358 = vmatprep.mubr.f32.mxu0 0.0
    %359 = vmatmul.mubr.f32.gmra.mrb[0].mxu0 %v190
    %v360 = vpop.f32.mrb[0].mxu0
    %v361 = vadd.f32 0.0, %v360
    %v362 = vpop.f32.mrb[0].mxu0
    %v363 = vadd.f32 0.0, %v362
    %364 = vmatprep.mubr.f32.mxu0 0.0
    %365 = vmatmul.mubr.f32.gmra.mrb[0].mxu0 %v191
    %v366 = vpop.f32.mrb[0].mxu0
    %v367 = vadd.f32 0.0, %v366
    %v368 = vpop.f32.mrb[0].mxu0
    %v369 = vadd.f32 0.0, %v368
    %370 = vmatprep.mubr.f32.mxu0 0.0
    %371 = vmatmul.mubr.f32.gmra.mrb[0].mxu0 %v192
    %v372 = vpop.f32.mrb[0].mxu0
    %v373 = vadd.f32 0.0, %v372
    %v374 = vpop.f32.mrb[0].mxu0
    %v375 = vadd.f32 0.0, %v374
    %376 = vmatprep.mubr.f32.mxu0 0.0
    %377 = vmatmul.mubr.f32.gmra.mrb[0].mxu0 %v193
    %v378 = vpop.f32.mrb[0].mxu0
    %v379 = vadd.f32 0.0, %v378
    %v380 = vpop.f32.mrb[0].mxu0
    %v381 = vadd.f32 0.0, %v380
    %382 = vmatprep.mubr.f32.mxu0 0.0
    %383 = vmatmul.mubr.f32.gmra.mrb[0].mxu0 %v194
    %v384 = vpop.f32.mrb[0].mxu0
    %v385 = vadd.f32 0.0, %v384
    %v386 = vpop.f32.mrb[0].mxu0
    %v387 = vadd.f32 0.0, %v386
    %388 = vmatprep.mubr.f32.mxu0 0.0
    %389 = vmatmul.mubr.f32.gmra.mrb[0].mxu0 %v195
    %v390 = vpop.f32.mrb[0].mxu0
    %v391 = vadd.f32 0.0, %v390
    %v392 = vpop.f32.mrb[0].mxu0
    %v393 = vadd.f32 0.0, %v392
    %394 = vmatprep.mubr.f32.mxu0 0.0
    %395 = vmatmul.mubr.f32.gmra.mrb[0].mxu0 %v196
    %v396 = vpop.f32.mrb[0].mxu0
    %v397 = vadd.f32 0.0, %v396
    %v398 = vpop.f32.mrb[0].mxu0
    %v399 = vadd.f32 0.0, %v398
    %400 = vmatprep.mubr.f32.mxu0 0.0
    %401 = vmatmul.mubr.f32.gmra.mrb[0].mxu0 %v197
    %v402 = vpop.f32.mrb[0].mxu0
    %v403 = vadd.f32 0.0, %v402
    %v404 = vpop.f32.mrb[0].mxu0
    %v405 = vadd.f32 0.0, %v404
    %406 = vmatprep.mubr.f32.mxu0 0.0
    %407 = vmatmul.mubr.f32.gmra.mrb[0].mxu0 %v198
    %v408 = vpop.f32.mrb[0].mxu0
    %v409 = vadd.f32 0.0, %v408
    %v410 = vpop.f32.mrb[0].mxu0
    %v411 = vadd.f32 0.0, %v410
    %412 = vmatprep.mubr.f32.mxu0 0.0
    %413 = vmatmul.mubr.f32.gmra.mrb[0].mxu0 %v199
    %v414 = vpop.f32.mrb[0].mxu0
    %v415 = vadd.f32 0.0, %v414
    %v416 = vpop.f32.mrb[0].mxu0
    %v417 = vadd.f32 0.0, %v416
    %418 = vmatprep.mubr.f32.mxu0 0.0
    %419 = vmatmul.mubr.f32.gmra.mrb[0].mxu0 %v200
    %v420 = vpop.f32.mrb[0].mxu0
    %v421 = vadd.f32 0.0, %v420
    %v422 = vpop.f32.mrb[0].mxu0
    %v423 = vadd.f32 0.0, %v422
    %424 = vmatprep.mubr.f32.mxu0 0.0
    %425 = vmatmul.mubr.f32.gmra.mrb[0].mxu0 %v201
    %v426 = vpop.f32.mrb[0].mxu0
    %v427 = vadd.f32 0.0, %v426
    %v428 = vpop.f32.mrb[0].mxu0
    %v429 = vadd.f32 0.0, %v428
    %430 = vmatprep.mubr.f32.mxu0 0.0
    %431 = vmatmul.mubr.f32.gmra.mrb[0].mxu0 %v202
    %v432 = vpop.f32.mrb[0].mxu0
    %v433 = vadd.f32 0.0, %v432
    %v434 = vpop.f32.mrb[0].mxu0
    %v435 = vadd.f32 0.0, %v434
    %436 = vmatprep.mubr.f32.mxu0 0.0
    %437 = vmatmul.mubr.f32.gmra.mrb[0].mxu0 %v203
    %v438 = vpop.f32.mrb[0].mxu0
    %v439 = vadd.f32 0.0, %v438
    %v440 = vpop.f32.mrb[0].mxu0
    %v441 = vadd.f32 0.0, %v440
    %442 = vmatprep.mubr.f32.mxu0 0.0
    %443 = vmatmul.mubr.f32.gmra.mrb[0].mxu0 %v204
    %v444 = vpop.f32.mrb[0].mxu0
    %v445 = vadd.f32 0.0, %v444
    %v446 = vpop.f32.mrb[0].mxu0
    %v447 = vadd.f32 0.0, %v446
    %448 = vmatprep.mubr.f32.mxu0 0.0
    %449 = vmatmul.mubr.f32.gmra.mrb[0].mxu0 %v205
    %v450 = vpop.f32.mrb[0].mxu0
    %v451 = vadd.f32 0.0, %v450
    %v452 = vpop.f32.mrb[0].mxu0
    %v453 = vadd.f32 0.0, %v452
    %454 = vmatprep.mubr.f32.mxu0 0.0
    %455 = vmatmul.mubr.f32.gmra.mrb[0].mxu0 %v206
    %v456 = vpop.f32.mrb[0].mxu0
    %v457 = vadd.f32 0.0, %v456
    %v458 = vpop.f32.mrb[0].mxu0
    %v459 = vadd.f32 0.0, %v458
    %460 = vmatprep.mubr.f32.mxu0 0.0
    %461 = vmatmul.mubr.f32.gmra.mrb[0].mxu0 %v207
    %v462 = vpop.f32.mrb[0].mxu0
    %v463 = vadd.f32 0.0, %v462
    %v464 = vpop.f32.mrb[0].mxu0
    %v465 = vadd.f32 0.0, %v464
    %466 = vmatprep.mubr.f32.mxu0 0.0
    %467 = vmatmul.mubr.f32.gmra.mrb[0].mxu0 %v208
    %v468 = vpop.f32.mrb[0].mxu0
    %v469 = vadd.f32 0.0, %v468
    %v470 = vpop.f32.mrb[0].mxu0
    %v471 = vadd.f32 0.0, %v470
    %472 = vmatprep.mubr.f32.mxu0 0.0
    %473 = vmatmul.mubr.f32.gmra.mrb[0].mxu0 %v209
    %v474 = vpop.f32.mrb[0].mxu0
    %v475 = vadd.f32 0.0, %v474
    %v476 = vpop.f32.mrb[0].mxu0
    %v477 = vadd.f32 0.0, %v476
    %478 = vmatprep.mubr.f32.mxu0 0.0
    %479 = vmatmul.mubr.f32.gmra.mrb[0].mxu0 %v210
    %v480 = vpop.f32.mrb[0].mxu0
    %v481 = vadd.f32 0.0, %v480
    %v482 = vpop.f32.mrb[0].mxu0
    %v483 = vadd.f32 0.0, %v482
    %484 = vmatprep.mubr.f32.mxu0 0.0
    %485 = vmatmul.mubr.f32.gmra.mrb[0].mxu0 %v211
    %v486 = vpop.f32.mrb[0].mxu0
    %v487 = vadd.f32 0.0, %v486
    %v488 = vpop.f32.mrb[0].mxu0
    %v489 = vadd.f32 0.0, %v488
    %490 = vmatprep.mubr.f32.mxu0 0.0
    %491 = vmatmul.mubr.f32.gmra.mrb[0].mxu0 %v212
    %v492 = vpop.f32.mrb[0].mxu0
    %v493 = vadd.f32 0.0, %v492
    %v494 = vpop.f32.mrb[0].mxu0
    %v495 = vadd.f32 0.0, %v494
    %496 = vmatprep.mubr.f32.mxu0 0.0
    %497 = vmatmul.mubr.f32.gmra.mrb[0].mxu0 %v213
    %v498 = vpop.f32.mrb[0].mxu0
    %v499 = vadd.f32 0.0, %v498
    %v500 = vpop.f32.mrb[0].mxu0
    %v501 = vadd.f32 0.0, %v500
    %502 = vdwg.mxu0
    %503 = vmatprep.subr.mxu0 0.0
    %504 = vmatpush1.msra.mxu0 %v313
    %505 = vmatprep.subr.mxu0 0.0
    %506 = vmatpush1.msra.mxu0 %v319
    %507 = vmatprep.subr.mxu0 0.0
    %508 = vmatpush1.msra.mxu0 %v325
    %509 = vmatprep.subr.mxu0 0.0
    %510 = vmatpush1.msra.mxu0 %v331
    %511 = vmatprep.subr.mxu0 0.0
    %512 = vmatpush1.msra.mxu0 %v337
    %513 = vmatprep.subr.mxu0 0.0
    %514 = vmatpush1.msra.mxu0 %v343
    %515 = vmatprep.subr.mxu0 0.0
    %516 = vmatpush1.msra.mxu0 %v349
    %517 = vmatprep.subr.mxu0 0.0
    %518 = vmatpush1.msra.mxu0 %v355
    %519 = vmatprep.subr.mxu0 0.0
    %520 = vmatpush1.msra.mxu0 %v361
    %521 = vmatprep.subr.mxu0 0.0
    %522 = vmatpush1.msra.mxu0 %v367
    %523 = vmatprep.subr.mxu0 0.0
    %524 = vmatpush1.msra.mxu0 %v373
    %525 = vmatprep.subr.mxu0 0.0
    %526 = vmatpush1.msra.mxu0 %v379
    %527 = vmatprep.subr.mxu0 0.0
    %528 = vmatpush1.msra.mxu0 %v385
    %529 = vmatprep.subr.mxu0 0.0
    %530 = vmatpush1.msra.mxu0 %v391
    %531 = vmatprep.subr.mxu0 0.0
    %532 = vmatpush1.msra.mxu0 %v397
    %533 = vmatprep.subr.mxu0 0.0
    %534 = vmatpush1.msra.mxu0 %v403
    %535 = vmatprep.subr.mxu0 0.0
    %536 = vmatpush1.msra.mxu0 %v409
    %537 = vmatprep.subr.mxu0 0.0
    %538 = vmatpush1.msra.mxu0 %v415
    %539 = vmatprep.subr.mxu0 0.0
    %540 = vmatpush1.msra.mxu0 %v421
    %541 = vmatprep.subr.mxu0 0.0
    %542 = vmatpush1.msra.mxu0 %v427
    %543 = vmatprep.subr.mxu0 0.0
    %544 = vmatpush1.msra.mxu0 %v433
    %545 = vmatprep.subr.mxu0 0.0
    %546 = vmatpush1.msra.mxu0 %v439
    %547 = vmatprep.subr.mxu0 0.0
    %548 = vmatpush1.msra.mxu0 %v445
    %549 = vmatprep.subr.mxu0 0.0
    %550 = vmatpush1.msra.mxu0 %v451
    %551 = vmatprep.subr.mxu0 0.0
    %552 = vmatpush1.msra.mxu0 %v457
    %553 = vmatprep.subr.mxu0 0.0
    %554 = vmatpush1.msra.mxu0 %v463
    %555 = vmatprep.subr.mxu0 0.0
    %556 = vmatpush1.msra.mxu0 %v469
    %557 = vmatprep.subr.mxu0 0.0
    %558 = vmatpush1.msra.mxu0 %v475
    %559 = vmatprep.subr.mxu0 0.0
    %560 = vmatpush1.msra.mxu0 %v481
    %561 = vmatprep.subr.mxu0 0.0
    %562 = vmatpush1.msra.mxu0 %v487
    %563 = vmatprep.subr.mxu0 0.0
    %564 = vmatpush1.msra.mxu0 %v493
    %565 = vmatprep.subr.mxu0 0.0
    %566 = vmatpush1.msra.mxu0 %v499
    %567 = vmatprep.mubr.f32.mxu0 %v119
    %568 = vmatmul.mubr.f32.gmra.mrb[0].mxu0 %v118
    %v569 = vpop.f32.mrb[0].mxu0
    %v570 = vadd.f32 %v315, %v569
    %v571 = vpop.f32.mrb[0].mxu0
    %572 = vmatprep.mubr.f32.mxu0 %v121
    %573 = vmatmul.mubr.f32.gmra.mrb[0].mxu0 %v120
    %v574 = vpop.f32.mrb[0].mxu0
    %v575 = vadd.f32 %v321, %v574
    %v576 = vpop.f32.mrb[0].mxu0
    %577 = vmatprep.mubr.f32.mxu0 %v123
    %578 = vmatmul.mubr.f32.gmra.mrb[0].mxu0 %v122
    %v579 = vpop.f32.mrb[0].mxu0
    %v580 = vadd.f32 %v327, %v579
    %v581 = vpop.f32.mrb[0].mxu0
    %582 = vmatprep.mubr.f32.mxu0 %v125
    %583 = vmatmul.mubr.f32.gmra.mrb[0].mxu0 %v124
    %v584 = vpop.f32.mrb[0].mxu0
    %v585 = vadd.f32 %v333, %v584
    %v586 = vpop.f32.mrb[0].mxu0
    %587 = vmatprep.mubr.f32.mxu0 %v127
    %588 = vmatmul.mubr.f32.gmra.mrb[0].mxu0 %v126
    %v589 = vpop.f32.mrb[0].mxu0
    %v590 = vadd.f32 %v339, %v589
    %v591 = vpop.f32.mrb[0].mxu0
    %592 = vmatprep.mubr.f32.mxu0 %v129
    %593 = vmatmul.mubr.f32.gmra.mrb[0].mxu0 %v128
    %v594 = vpop.f32.mrb[0].mxu0
    %v595 = vadd.f32 %v345, %v594
    %v596 = vpop.f32.mrb[0].mxu0
    %597 = vmatprep.mubr.f32.mxu0 %v131
    %598 = vmatmul.mubr.f32.gmra.mrb[0].mxu0 %v130
    %v599 = vpop.f32.mrb[0].mxu0
    %v600 = vadd.f32 %v351, %v599
    %v601 = vpop.f32.mrb[0].mxu0
    %602 = vmatprep.mubr.f32.mxu0 %v133
    %603 = vmatmul.mubr.f32.gmra.mrb[0].mxu0 %v132
    %v604 = vpop.f32.mrb[0].mxu0
    %v605 = vadd.f32 %v357, %v604
    %v606 = vpop.f32.mrb[0].mxu0
    %607 = vmatprep.mubr.f32.mxu0 %v135
    %608 = vmatmul.mubr.f32.gmra.mrb[0].mxu0 %v134
    %v609 = vpop.f32.mrb[0].mxu0
    %v610 = vadd.f32 %v363, %v609
    %v611 = vpop.f32.mrb[0].mxu0
    %612 = vmatprep.mubr.f32.mxu0 %v137
    %613 = vmatmul.mubr.f32.gmra.mrb[0].mxu0 %v136
    %v614 = vpop.f32.mrb[0].mxu0
    %v615 = vadd.f32 %v369, %v614
    %v616 = vpop.f32.mrb[0].mxu0
    %617 = vmatprep.mubr.f32.mxu0 %v139
    %618 = vmatmul.mubr.f32.gmra.mrb[0].mxu0 %v138
    %v619 = vpop.f32.mrb[0].mxu0
    %v620 = vadd.f32 %v375, %v619
    %v621 = vpop.f32.mrb[0].mxu0
    %622 = vmatprep.mubr.f32.mxu0 %v141
    %623 = vmatmul.mubr.f32.gmra.mrb[0].mxu0 %v140
    %v624 = vpop.f32.mrb[0].mxu0
    %v625 = vadd.f32 %v381, %v624
    %v626 = vpop.f32.mrb[0].mxu0
    %627 = vmatprep.mubr.f32.mxu0 %v143
    %628 = vmatmul.mubr.f32.gmra.mrb[0].mxu0 %v142
    %v629 = vpop.f32.mrb[0].mxu0
    %v630 = vadd.f32 %v387, %v629
    %v631 = vpop.f32.mrb[0].mxu0
    %632 = vmatprep.mubr.f32.mxu0 %v145
    %633 = vmatmul.mubr.f32.gmra.mrb[0].mxu0 %v144
    %v634 = vpop.f32.mrb[0].mxu0
    %v635 = vadd.f32 %v393, %v634
    %v636 = vpop.f32.mrb[0].mxu0
    %637 = vmatprep.mubr.f32.mxu0 %v147
    %638 = vmatmul.mubr.f32.gmra.mrb[0].mxu0 %v146
    %v639 = vpop.f32.mrb[0].mxu0
    %v640 = vadd.f32 %v399, %v639
    %v641 = vpop.f32.mrb[0].mxu0
    %642 = vmatprep.mubr.f32.mxu0 %v149
    %643 = vmatmul.mubr.f32.gmra.mrb[0].mxu0 %v148
    %v644 = vpop.f32.mrb[0].mxu0
    %v645 = vadd.f32 %v405, %v644
    %v646 = vpop.f32.mrb[0].mxu0
    %647 = vmatprep.mubr.f32.mxu0 %v151
    %648 = vmatmul.mubr.f32.gmra.mrb[0].mxu0 %v150
    %v649 = vpop.f32.mrb[0].mxu0
    %v650 = vadd.f32 %v411, %v649
    %v651 = vpop.f32.mrb[0].mxu0
    %652 = vmatprep.mubr.f32.mxu0 %v153
    %653 = vmatmul.mubr.f32.gmra.mrb[0].mxu0 %v152
    %v654 = vpop.f32.mrb[0].mxu0
    %v655 = vadd.f32 %v417, %v654
    %v656 = vpop.f32.mrb[0].mxu0
    %657 = vmatprep.mubr.f32.mxu0 %v155
    %658 = vmatmul.mubr.f32.gmra.mrb[0].mxu0 %v154
    %v659 = vpop.f32.mrb[0].mxu0
    %v660 = vadd.f32 %v423, %v659
    %v661 = vpop.f32.mrb[0].mxu0
    %662 = vmatprep.mubr.f32.mxu0 %v157
    %663 = vmatmul.mubr.f32.gmra.mrb[0].mxu0 %v156
    %v664 = vpop.f32.mrb[0].mxu0
    %v665 = vadd.f32 %v429, %v664
    %v666 = vpop.f32.mrb[0].mxu0
    %667 = vmatprep.mubr.f32.mxu0 %v159
    %668 = vmatmul.mubr.f32.gmra.mrb[0].mxu0 %v158
    %v669 = vpop.f32.mrb[0].mxu0
    %v670 = vadd.f32 %v435, %v669
    %v671 = vpop.f32.mrb[0].mxu0
    %672 = vmatprep.mubr.f32.mxu0 %v161
    %673 = vmatmul.mubr.f32.gmra.mrb[0].mxu0 %v160
    %v674 = vpop.f32.mrb[0].mxu0
    %v675 = vadd.f32 %v441, %v674
    %v676 = vpop.f32.mrb[0].mxu0
    %677 = vmatprep.mubr.f32.mxu0 %v163
    %678 = vmatmul.mubr.f32.gmra.mrb[0].mxu0 %v162
    %v679 = vpop.f32.mrb[0].mxu0
    %v680 = vadd.f32 %v447, %v679
    %v681 = vpop.f32.mrb[0].mxu0
    %682 = vmatprep.mubr.f32.mxu0 %v165
    %683 = vmatmul.mubr.f32.gmra.mrb[0].mxu0 %v164
    %v684 = vpop.f32.mrb[0].mxu0
    %v685 = vadd.f32 %v453, %v684
    %v686 = vpop.f32.mrb[0].mxu0
    %687 = vmatprep.mubr.f32.mxu0 %v167
    %688 = vmatmul.mubr.f32.gmra.mrb[0].mxu0 %v166
    %v689 = vpop.f32.mrb[0].mxu0
    %v690 = vadd.f32 %v459, %v689
    %v691 = vpop.f32.mrb[0].mxu0
    %692 = vmatprep.mubr.f32.mxu0 %v169
    %693 = vmatmul.mubr.f32.gmra.mrb[0].mxu0 %v168
    %v694 = vpop.f32.mrb[0].mxu0
    %v695 = vadd.f32 %v465, %v694
    %v696 = vpop.f32.mrb[0].mxu0
    %697 = vmatprep.mubr.f32.mxu0 %v171
    %698 = vmatmul.mubr.f32.gmra.mrb[0].mxu0 %v170
    %v699 = vpop.f32.mrb[0].mxu0
    %v700 = vadd.f32 %v471, %v699
    %v701 = vpop.f32.mrb[0].mxu0
    %702 = vmatprep.mubr.f32.mxu0 %v173
    %703 = vmatmul.mubr.f32.gmra.mrb[0].mxu0 %v172
    %v704 = vpop.f32.mrb[0].mxu0
    %v705 = vadd.f32 %v477, %v704
    %v706 = vpop.f32.mrb[0].mxu0
    %707 = vmatprep.mubr.f32.mxu0 %v175
    %708 = vmatmul.mubr.f32.gmra.mrb[0].mxu0 %v174
    %v709 = vpop.f32.mrb[0].mxu0
    %v710 = vadd.f32 %v483, %v709
    %v711 = vpop.f32.mrb[0].mxu0
    %712 = vmatprep.mubr.f32.mxu0 %v177
    %713 = vmatmul.mubr.f32.gmra.mrb[0].mxu0 %v176
    %v714 = vpop.f32.mrb[0].mxu0
    %v715 = vadd.f32 %v489, %v714
    %v716 = vpop.f32.mrb[0].mxu0
    %717 = vmatprep.mubr.f32.mxu0 %v179
    %718 = vmatmul.mubr.f32.gmra.mrb[0].mxu0 %v178
    %v719 = vpop.f32.mrb[0].mxu0
    %v720 = vadd.f32 %v495, %v719
    %v721 = vpop.f32.mrb[0].mxu0
    %722 = vmatprep.mubr.f32.mxu0 %v181
    %723 = vmatmul.mubr.f32.gmra.mrb[0].mxu0 %v180
    %v724 = vpop.f32.mrb[0].mxu0
    %v725 = vadd.f32 %v501, %v724
    %v726 = vpop.f32.mrb[0].mxu0
    %727 = vdwg.mxu0
    %v728 = vld [vmem:[%s3] sm:$0x1]
    %v730 = vlaneseq
    %v731 = vshrl.u32 %v730, 7
    %v732 = vsub.s32 0, %v731
    %v733 = vrot.slane %v728, %v732
    %v735 = vadd.f32 %v570, %v733
    %v736 = vadd.f32 %v575, %v733
    %v737 = vadd.f32 %v580, %v733
    %v738 = vadd.f32 %v585, %v733
    %v739 = vadd.f32 %v590, %v733
    %v740 = vadd.f32 %v595, %v733
    %v741 = vadd.f32 %v600, %v733
    %v742 = vadd.f32 %v605, %v733
    %v743 = vadd.f32 %v610, %v733
    %v744 = vadd.f32 %v615, %v733
    %v745 = vadd.f32 %v620, %v733
    %v746 = vadd.f32 %v625, %v733
    %v747 = vadd.f32 %v630, %v733
    %v748 = vadd.f32 %v635, %v733
    %v749 = vadd.f32 %v640, %v733
    %v750 = vadd.f32 %v645, %v733
    %v751 = vadd.f32 %v650, %v733
    %v752 = vadd.f32 %v655, %v733
    %v753 = vadd.f32 %v660, %v733
    %v754 = vadd.f32 %v665, %v733
    %v755 = vadd.f32 %v670, %v733
    %v756 = vadd.f32 %v675, %v733
    %v757 = vadd.f32 %v680, %v733
    %v758 = vadd.f32 %v685, %v733
    %v759 = vadd.f32 %v690, %v733
    %v760 = vadd.f32 %v695, %v733
    %v761 = vadd.f32 %v700, %v733
    %v762 = vadd.f32 %v705, %v733
    %v763 = vadd.f32 %v710, %v733
    %v764 = vadd.f32 %v715, %v733
    %v765 = vadd.f32 %v720, %v733
    %v766 = vadd.f32 %v725, %v733
    %v767 = vmul.f32 %v735, %v735
    %v768 = vmul.f32 %v736, %v736
    %v769 = vmul.f32 %v737, %v737
    %v770 = vmul.f32 %v738, %v738
    %v771 = vmul.f32 %v739, %v739
    %v772 = vmul.f32 %v740, %v740
    %v773 = vmul.f32 %v741, %v741
    %v774 = vmul.f32 %v742, %v742
    %v775 = vmul.f32 %v743, %v743
    %v776 = vmul.f32 %v744, %v744
    %v777 = vmul.f32 %v745, %v745
    %v778 = vmul.f32 %v746, %v746
    %v779 = vmul.f32 %v747, %v747
    %v780 = vmul.f32 %v748, %v748
    %v781 = vmul.f32 %v749, %v749
    %v782 = vmul.f32 %v750, %v750
    %v783 = vmul.f32 %v751, %v751
    %v784 = vmul.f32 %v752, %v752
    %v785 = vmul.f32 %v753, %v753
    %v786 = vmul.f32 %v754, %v754
    %v787 = vmul.f32 %v755, %v755
    %v788 = vmul.f32 %v756, %v756
    %v789 = vmul.f32 %v757, %v757
    %v790 = vmul.f32 %v758, %v758
    %v791 = vmul.f32 %v759, %v759
    %v792 = vmul.f32 %v760, %v760
    %v793 = vmul.f32 %v761, %v761
    %v794 = vmul.f32 %v762, %v762
    %v795 = vmul.f32 %v763, %v763
    %v796 = vmul.f32 %v764, %v764
    %v797 = vmul.f32 %v765, %v765
    %v798 = vmul.f32 %v766, %v766
    %799 = vadd.xlane.f32.xlu0 %v767
    %v800 = vpop.xlane.xlu0 %799
    %801 = vadd.xlane.f32.xlu0 %v768
    %v802 = vpop.xlane.xlu0 %801
    %803 = vadd.xlane.f32.xlu0 %v769
    %v804 = vpop.xlane.xlu0 %803
    %805 = vadd.xlane.f32.xlu0 %v770
    %v806 = vpop.xlane.xlu0 %805
    %807 = vadd.xlane.f32.xlu0 %v771
    %v808 = vpop.xlane.xlu0 %807
    %809 = vadd.xlane.f32.xlu0 %v772
    %v810 = vpop.xlane.xlu0 %809
    %811 = vadd.xlane.f32.xlu0 %v773
    %v812 = vpop.xlane.xlu0 %811
    %813 = vadd.xlane.f32.xlu0 %v774
    %v814 = vpop.xlane.xlu0 %813
    %815 = vadd.xlane.f32.xlu0 %v775
    %v816 = vpop.xlane.xlu0 %815
    %817 = vadd.xlane.f32.xlu0 %v776
    %v818 = vpop.xlane.xlu0 %817
    %819 = vadd.xlane.f32.xlu0 %v777
    %v820 = vpop.xlane.xlu0 %819
    %821 = vadd.xlane.f32.xlu0 %v778
    %v822 = vpop.xlane.xlu0 %821
    %823 = vadd.xlane.f32.xlu0 %v779
    %v824 = vpop.xlane.xlu0 %823
    %825 = vadd.xlane.f32.xlu0 %v780
    %v826 = vpop.xlane.xlu0 %825
    %827 = vadd.xlane.f32.xlu0 %v781
    %v828 = vpop.xlane.xlu0 %827
    %829 = vadd.xlane.f32.xlu0 %v782
    %v830 = vpop.xlane.xlu0 %829
    %831 = vadd.xlane.f32.xlu0 %v783
    %v832 = vpop.xlane.xlu0 %831
    %833 = vadd.xlane.f32.xlu0 %v784
    %v834 = vpop.xlane.xlu0 %833
    %835 = vadd.xlane.f32.xlu0 %v785
    %v836 = vpop.xlane.xlu0 %835
    %837 = vadd.xlane.f32.xlu0 %v786
    %v838 = vpop.xlane.xlu0 %837
    %839 = vadd.xlane.f32.xlu0 %v787
    %v840 = vpop.xlane.xlu0 %839
    %841 = vadd.xlane.f32.xlu0 %v788
    %v842 = vpop.xlane.xlu0 %841
    %843 = vadd.xlane.f32.xlu0 %v789
    %v844 = vpop.xlane.xlu0 %843
    %845 = vadd.xlane.f32.xlu0 %v790
    %v846 = vpop.xlane.xlu0 %845
    %847 = vadd.xlane.f32.xlu0 %v791
    %v848 = vpop.xlane.xlu0 %847
    %849 = vadd.xlane.f32.xlu0 %v792
    %v850 = vpop.xlane.xlu0 %849
    %851 = vadd.xlane.f32.xlu0 %v793
    %v852 = vpop.xlane.xlu0 %851
    %853 = vadd.xlane.f32.xlu0 %v794
    %v854 = vpop.xlane.xlu0 %853
    %855 = vadd.xlane.f32.xlu0 %v795
    %v856 = vpop.xlane.xlu0 %855
    %857 = vadd.xlane.f32.xlu0 %v796
    %v858 = vpop.xlane.xlu0 %857
    %859 = vadd.xlane.f32.xlu0 %v797
    %v860 = vpop.xlane.xlu0 %859
    %861 = vadd.xlane.f32.xlu0 %v798
    %v862 = vpop.xlane.xlu0 %861
    %v863 = vmax.f32 %v800, 1e-24
    %v864 = vmax.f32 %v802, 1e-24
    %v865 = vmax.f32 %v804, 1e-24
    %v866 = vmax.f32 %v806, 1e-24
    %v867 = vmax.f32 %v808, 1e-24
    %v868 = vmax.f32 %v810, 1e-24
    %v869 = vmax.f32 %v812, 1e-24
    %v870 = vmax.f32 %v814, 1e-24
    %v871 = vmax.f32 %v816, 1e-24
    %v872 = vmax.f32 %v818, 1e-24
    %v873 = vmax.f32 %v820, 1e-24
    %v874 = vmax.f32 %v822, 1e-24
    %v875 = vmax.f32 %v824, 1e-24
    %v876 = vmax.f32 %v826, 1e-24
    %v877 = vmax.f32 %v828, 1e-24
    %v878 = vmax.f32 %v830, 1e-24
    %v879 = vmax.f32 %v832, 1e-24
    %v880 = vmax.f32 %v834, 1e-24
    %v881 = vmax.f32 %v836, 1e-24
    %v882 = vmax.f32 %v838, 1e-24
    %v883 = vmax.f32 %v840, 1e-24
    %v884 = vmax.f32 %v842, 1e-24
    %v885 = vmax.f32 %v844, 1e-24
    %v886 = vmax.f32 %v846, 1e-24
    %v887 = vmax.f32 %v848, 1e-24
    %v888 = vmax.f32 %v850, 1e-24
    %v889 = vmax.f32 %v852, 1e-24
    %v890 = vmax.f32 %v854, 1e-24
    %v891 = vmax.f32 %v856, 1e-24
    %v892 = vmax.f32 %v858, 1e-24
    %v893 = vmax.f32 %v860, 1e-24
    %v894 = vmax.f32 %v862, 1e-24
    %v895 = vrsqrt.pop %v863
    %v896 = vrsqrt.pop %v864
    %v897 = vrsqrt.pop %v865
    %v898 = vrsqrt.pop %v866
    %v899 = vrsqrt.pop %v867
    %v900 = vrsqrt.pop %v868
    %v901 = vrsqrt.pop %v869
    %v902 = vrsqrt.pop %v870
    %v903 = vrsqrt.pop %v871
    %v904 = vrsqrt.pop %v872
    %v905 = vrsqrt.pop %v873
    %v906 = vrsqrt.pop %v874
    %v907 = vrsqrt.pop %v875
    %v908 = vrsqrt.pop %v876
    %v909 = vrsqrt.pop %v877
    %v910 = vrsqrt.pop %v878
    %v911 = vrsqrt.pop %v879
    %v912 = vrsqrt.pop %v880
    %v913 = vrsqrt.pop %v881
    %v914 = vrsqrt.pop %v882
    %v915 = vrsqrt.pop %v883
    %v916 = vrsqrt.pop %v884
    %v917 = vrsqrt.pop %v885
    %v918 = vrsqrt.pop %v886
    %v919 = vrsqrt.pop %v887
    %v920 = vrsqrt.pop %v888
    %v921 = vrsqrt.pop %v889
    %v922 = vrsqrt.pop %v890
    %v923 = vrsqrt.pop %v891
    %v924 = vrsqrt.pop %v892
    %v925 = vrsqrt.pop %v893
    %v926 = vrsqrt.pop %v894
    %v927 = vmul.f32 %v735, %v895
    %v928 = vmul.f32 %v736, %v896
    %v929 = vmul.f32 %v737, %v897
    %v930 = vmul.f32 %v738, %v898
    %v931 = vmul.f32 %v739, %v899
    %v932 = vmul.f32 %v740, %v900
    %v933 = vmul.f32 %v741, %v901
    %v934 = vmul.f32 %v742, %v902
    %v935 = vmul.f32 %v743, %v903
    %v936 = vmul.f32 %v744, %v904
    %v937 = vmul.f32 %v745, %v905
    %v938 = vmul.f32 %v746, %v906
    %v939 = vmul.f32 %v747, %v907
    %v940 = vmul.f32 %v748, %v908
    %v941 = vmul.f32 %v749, %v909
    %v942 = vmul.f32 %v750, %v910
    %v943 = vmul.f32 %v751, %v911
    %v944 = vmul.f32 %v752, %v912
    %v945 = vmul.f32 %v753, %v913
    %v946 = vmul.f32 %v754, %v914
    %v947 = vmul.f32 %v755, %v915
    %v948 = vmul.f32 %v756, %v916
    %v949 = vmul.f32 %v757, %v917
    %v950 = vmul.f32 %v758, %v918
    %v951 = vmul.f32 %v759, %v919
    %v952 = vmul.f32 %v760, %v920
    %v953 = vmul.f32 %v761, %v921
    %v954 = vmul.f32 %v762, %v922
    %v955 = vmul.f32 %v763, %v923
    %v956 = vmul.f32 %v764, %v924
    %v957 = vmul.f32 %v765, %v925
    %v958 = vmul.f32 %v766, %v926
    %v959 = vmax.f32 %v927, 0.0
    %v960 = vmax.f32 %v928, 0.0
    %v961 = vmax.f32 %v929, 0.0
    %v962 = vmax.f32 %v930, 0.0
    %v963 = vmax.f32 %v931, 0.0
    %v964 = vmax.f32 %v932, 0.0
    %v965 = vmax.f32 %v933, 0.0
    %v966 = vmax.f32 %v934, 0.0
    %v967 = vmax.f32 %v935, 0.0
    %v968 = vmax.f32 %v936, 0.0
    %v969 = vmax.f32 %v937, 0.0
    %v970 = vmax.f32 %v938, 0.0
    %v971 = vmax.f32 %v939, 0.0
    %v972 = vmax.f32 %v940, 0.0
    %v973 = vmax.f32 %v941, 0.0
    %v974 = vmax.f32 %v942, 0.0
    %v975 = vmax.f32 %v943, 0.0
    %v976 = vmax.f32 %v944, 0.0
    %v977 = vmax.f32 %v945, 0.0
    %v978 = vmax.f32 %v946, 0.0
    %v979 = vmax.f32 %v947, 0.0
    %v980 = vmax.f32 %v948, 0.0
    %v981 = vmax.f32 %v949, 0.0
    %v982 = vmax.f32 %v950, 0.0
    %v983 = vmax.f32 %v951, 0.0
    %v984 = vmax.f32 %v952, 0.0
    %v985 = vmax.f32 %v953, 0.0
    %v986 = vmax.f32 %v954, 0.0
    %v987 = vmax.f32 %v955, 0.0
    %v988 = vmax.f32 %v956, 0.0
    %v989 = vmax.f32 %v957, 0.0
    %v990 = vmax.f32 %v958, 0.0
    %v991 = vld [vmem:[#allocation8] sm:$0xff]
    %v992 = vld [vmem:[#allocation8 + $0x8] sm:$0xff]
    %v993 = vld [vmem:[#allocation8 + $0x10] sm:$0xff]
    %v994 = vld [vmem:[#allocation8 + $0x18] sm:$0xff]
    %v995 = vld [vmem:[#allocation8 + $0x20] sm:$0xff]
    %v996 = vld [vmem:[#allocation8 + $0x28] sm:$0xff]
    %v997 = vld [vmem:[#allocation8 + $0x30] sm:$0xff]
    %v998 = vld [vmem:[#allocation8 + $0x38] sm:$0xff]
    %v999 = vld [vmem:[#allocation8 + $0x40] sm:$0xff]
    %v1000 = vld [vmem:[#allocation8 + $0x48] sm:$0xff]
    %v1001 = vld [vmem:[#allocation8 + $0x50] sm:$0xff]
    %v1002 = vld [vmem:[#allocation8 + $0x58] sm:$0xff]
    %v1003 = vld [vmem:[#allocation8 + $0x60] sm:$0xff]
    %v1004 = vld [vmem:[#allocation8 + $0x68] sm:$0xff]
    %v1005 = vld [vmem:[#allocation8 + $0x70] sm:$0xff]
    %v1006 = vld [vmem:[#allocation8 + $0x78] sm:$0xff]
    %v1007 = vld [vmem:[#allocation8 + $0x80] sm:$0xff]
    %v1008 = vld [vmem:[#allocation8 + $0x88] sm:$0xff]
    %v1009 = vld [vmem:[#allocation8 + $0x90] sm:$0xff]
    %v1010 = vld [vmem:[#allocation8 + $0x98] sm:$0xff]
    %v1011 = vld [vmem:[#allocation8 + $0xa0] sm:$0xff]
    %v1012 = vld [vmem:[#allocation8 + $0xa8] sm:$0xff]
    %v1013 = vld [vmem:[#allocation8 + $0xb0] sm:$0xff]
    %v1014 = vld [vmem:[#allocation8 + $0xb8] sm:$0xff]
    %v1015 = vld [vmem:[#allocation8 + $0xc0] sm:$0xff]
    %v1016 = vld [vmem:[#allocation8 + $0xc8] sm:$0xff]
    %v1017 = vld [vmem:[#allocation8 + $0xd0] sm:$0xff]
    %v1018 = vld [vmem:[#allocation8 + $0xd8] sm:$0xff]
    %v1019 = vld [vmem:[#allocation8 + $0xe0] sm:$0xff]
    %v1020 = vld [vmem:[#allocation8 + $0xe8] sm:$0xff]
    %v1021 = vld [vmem:[#allocation8 + $0xf0] sm:$0xff]
    %v1022 = vld [vmem:[#allocation8 + $0xf8] sm:$0xff]
    %1023 = vmatprep.subr.mxu0 %v992
    %1024 = vmatpush1.msra.mxu0 %v991
    %1025 = vmatprep.subr.mxu0 %v994
    %1026 = vmatpush1.msra.mxu0 %v993
    %1027 = vmatprep.subr.mxu0 %v996
    %1028 = vmatpush1.msra.mxu0 %v995
    %1029 = vmatprep.subr.mxu0 %v998
    %1030 = vmatpush1.msra.mxu0 %v997
    %1031 = vmatprep.subr.mxu0 %v1000
    %1032 = vmatpush1.msra.mxu0 %v999
    %1033 = vmatprep.subr.mxu0 %v1002
    %1034 = vmatpush1.msra.mxu0 %v1001
    %1035 = vmatprep.subr.mxu0 %v1004
    %1036 = vmatpush1.msra.mxu0 %v1003
    %1037 = vmatprep.subr.mxu0 %v1006
    %1038 = vmatpush1.msra.mxu0 %v1005
    %1039 = vmatprep.subr.mxu0 %v1008
    %1040 = vmatpush1.msra.mxu0 %v1007
    %1041 = vmatprep.subr.mxu0 %v1010
    %1042 = vmatpush1.msra.mxu0 %v1009
    %1043 = vmatprep.subr.mxu0 %v1012
    %1044 = vmatpush1.msra.mxu0 %v1011
    %1045 = vmatprep.subr.mxu0 %v1014
    %1046 = vmatpush1.msra.mxu0 %v1013
    %1047 = vmatprep.subr.mxu0 %v1016
    %1048 = vmatpush1.msra.mxu0 %v1015
    %1049 = vmatprep.subr.mxu0 %v1018
    %1050 = vmatpush1.msra.mxu0 %v1017
    %1051 = vmatprep.subr.mxu0 %v1020
    %1052 = vmatpush1.msra.mxu0 %v1019
    %1053 = vmatprep.subr.mxu0 %v1022
    %1054 = vmatpush1.msra.mxu0 %v1021
    %1055 = vmatprep.subr.mxu0 0.0
    %1056 = vmatpush1.msra.mxu0 0.0
    %1057 = vmatprep.subr.mxu0 0.0
    %1058 = vmatpush1.msra.mxu0 0.0
    %1059 = vmatprep.subr.mxu0 0.0
    %1060 = vmatpush1.msra.mxu0 0.0
    %1061 = vmatprep.subr.mxu0 0.0
    %1062 = vmatpush1.msra.mxu0 0.0
    %1063 = vmatprep.subr.mxu0 0.0
    %1064 = vmatpush1.msra.mxu0 0.0
    %1065 = vmatprep.subr.mxu0 0.0
    %1066 = vmatpush1.msra.mxu0 0.0
    %1067 = vmatprep.subr.mxu0 0.0
    %1068 = vmatpush1.msra.mxu0 0.0
    %1069 = vmatprep.subr.mxu0 0.0
    %1070 = vmatpush1.msra.mxu0 0.0
    %1071 = vmatprep.subr.mxu0 0.0
    %1072 = vmatpush1.msra.mxu0 0.0
    %1073 = vmatprep.subr.mxu0 0.0
    %1074 = vmatpush1.msra.mxu0 0.0
    %1075 = vmatprep.subr.mxu0 0.0
    %1076 = vmatpush1.msra.mxu0 0.0
    %1077 = vmatprep.subr.mxu0 0.0
    %1078 = vmatpush1.msra.mxu0 0.0
    %1079 = vmatprep.subr.mxu0 0.0
    %1080 = vmatpush1.msra.mxu0 0.0
    %1081 = vmatprep.subr.mxu0 0.0
    %1082 = vmatpush1.msra.mxu0 0.0
    %1083 = vmatprep.subr.mxu0 0.0
    %1084 = vmatpush1.msra.mxu0 0.0
    %1085 = vmatprep.subr.mxu0 0.0
    %1086 = vmatpush1.msra.mxu0 0.0
    %1087 = vmatprep.mubr.f32.mxu0 0.0
    %1088 = vmatmul.mubr.f32.gmra.mrb[0].mxu0 %v959
    %v1089 = vpop.f32.mrb[0].mxu0
    %v1090 = vadd.f32 0.0, %v1089
    %v1091 = vpop.f32.mrb[0].mxu0
    %v1092 = vadd.f32 0.0, %v1091
    %1093 = vmatprep.mubr.f32.mxu0 0.0
    %1094 = vmatmul.mubr.f32.gmra.mrb[0].mxu0 %v960
    %v1095 = vpop.f32.mrb[0].mxu0
    %v1096 = vadd.f32 0.0, %v1095
    %v1097 = vpop.f32.mrb[0].mxu0
    %v1098 = vadd.f32 0.0, %v1097
    %1099 = vmatprep.mubr.f32.mxu0 0.0
    %1100 = vmatmul.mubr.f32.gmra.mrb[0].mxu0 %v961
    %v1101 = vpop.f32.mrb[0].mxu0
    %v1102 = vadd.f32 0.0, %v1101
    %v1103 = vpop.f32.mrb[0].mxu0
    %v1104 = vadd.f32 0.0, %v1103
    %1105 = vmatprep.mubr.f32.mxu0 0.0
    %1106 = vmatmul.mubr.f32.gmra.mrb[0].mxu0 %v962
    %v1107 = vpop.f32.mrb[0].mxu0
    %v1108 = vadd.f32 0.0, %v1107
    %v1109 = vpop.f32.mrb[0].mxu0
    %v1110 = vadd.f32 0.0, %v1109
    %1111 = vmatprep.mubr.f32.mxu0 0.0
    %1112 = vmatmul.mubr.f32.gmra.mrb[0].mxu0 %v963
    %v1113 = vpop.f32.mrb[0].mxu0
    %v1114 = vadd.f32 0.0, %v1113
    %v1115 = vpop.f32.mrb[0].mxu0
    %v1116 = vadd.f32 0.0, %v1115
    %1117 = vmatprep.mubr.f32.mxu0 0.0
    %1118 = vmatmul.mubr.f32.gmra.mrb[0].mxu0 %v964
    %v1119 = vpop.f32.mrb[0].mxu0
    %v1120 = vadd.f32 0.0, %v1119
    %v1121 = vpop.f32.mrb[0].mxu0
    %v1122 = vadd.f32 0.0, %v1121
    %1123 = vmatprep.mubr.f32.mxu0 0.0
    %1124 = vmatmul.mubr.f32.gmra.mrb[0].mxu0 %v965
    %v1125 = vpop.f32.mrb[0].mxu0
    %v1126 = vadd.f32 0.0, %v1125
    %v1127 = vpop.f32.mrb[0].mxu0
    %v1128 = vadd.f32 0.0, %v1127
    %1129 = vmatprep.mubr.f32.mxu0 0.0
    %1130 = vmatmul.mubr.f32.gmra.mrb[0].mxu0 %v966
    %v1131 = vpop.f32.mrb[0].mxu0
    %v1132 = vadd.f32 0.0, %v1131
    %v1133 = vpop.f32.mrb[0].mxu0
    %v1134 = vadd.f32 0.0, %v1133
    %1135 = vmatprep.mubr.f32.mxu0 0.0
    %1136 = vmatmul.mubr.f32.gmra.mrb[0].mxu0 %v967
    %v1137 = vpop.f32.mrb[0].mxu0
    %v1138 = vadd.f32 0.0, %v1137
    %v1139 = vpop.f32.mrb[0].mxu0
    %v1140 = vadd.f32 0.0, %v1139
    %1141 = vmatprep.mubr.f32.mxu0 0.0
    %1142 = vmatmul.mubr.f32.gmra.mrb[0].mxu0 %v968
    %v1143 = vpop.f32.mrb[0].mxu0
    %v1144 = vadd.f32 0.0, %v1143
    %v1145 = vpop.f32.mrb[0].mxu0
    %v1146 = vadd.f32 0.0, %v1145
    %1147 = vmatprep.mubr.f32.mxu0 0.0
    %1148 = vmatmul.mubr.f32.gmra.mrb[0].mxu0 %v969
    %v1149 = vpop.f32.mrb[0].mxu0
    %v1150 = vadd.f32 0.0, %v1149
    %v1151 = vpop.f32.mrb[0].mxu0
    %v1152 = vadd.f32 0.0, %v1151
    %1153 = vmatprep.mubr.f32.mxu0 0.0
    %1154 = vmatmul.mubr.f32.gmra.mrb[0].mxu0 %v970
    %v1155 = vpop.f32.mrb[0].mxu0
    %v1156 = vadd.f32 0.0, %v1155
    %v1157 = vpop.f32.mrb[0].mxu0
    %v1158 = vadd.f32 0.0, %v1157
    %1159 = vmatprep.mubr.f32.mxu0 0.0
    %1160 = vmatmul.mubr.f32.gmra.mrb[0].mxu0 %v971
    %v1161 = vpop.f32.mrb[0].mxu0
    %v1162 = vadd.f32 0.0, %v1161
    %v1163 = vpop.f32.mrb[0].mxu0
    %v1164 = vadd.f32 0.0, %v1163
    %1165 = vmatprep.mubr.f32.mxu0 0.0
    %1166 = vmatmul.mubr.f32.gmra.mrb[0].mxu0 %v972
    %v1167 = vpop.f32.mrb[0].mxu0
    %v1168 = vadd.f32 0.0, %v1167
    %v1169 = vpop.f32.mrb[0].mxu0
    %v1170 = vadd.f32 0.0, %v1169
    %1171 = vmatprep.mubr.f32.mxu0 0.0
    %1172 = vmatmul.mubr.f32.gmra.mrb[0].mxu0 %v973
    %v1173 = vpop.f32.mrb[0].mxu0
    %v1174 = vadd.f32 0.0, %v1173
    %v1175 = vpop.f32.mrb[0].mxu0
    %v1176 = vadd.f32 0.0, %v1175
    %1177 = vmatprep.mubr.f32.mxu0 0.0
    %1178 = vmatmul.mubr.f32.gmra.mrb[0].mxu0 %v974
    %v1179 = vpop.f32.mrb[0].mxu0
    %v1180 = vadd.f32 0.0, %v1179
    %v1181 = vpop.f32.mrb[0].mxu0
    %v1182 = vadd.f32 0.0, %v1181
    %1183 = vmatprep.mubr.f32.mxu0 0.0
    %1184 = vmatmul.mubr.f32.gmra.mrb[0].mxu0 %v975
    %v1185 = vpop.f32.mrb[0].mxu0
    %v1186 = vadd.f32 0.0, %v1185
    %v1187 = vpop.f32.mrb[0].mxu0
    %v1188 = vadd.f32 0.0, %v1187
    %1189 = vmatprep.mubr.f32.mxu0 0.0
    %1190 = vmatmul.mubr.f32.gmra.mrb[0].mxu0 %v976
    %v1191 = vpop.f32.mrb[0].mxu0
    %v1192 = vadd.f32 0.0, %v1191
    %v1193 = vpop.f32.mrb[0].mxu0
    %v1194 = vadd.f32 0.0, %v1193
    %1195 = vmatprep.mubr.f32.mxu0 0.0
    %1196 = vmatmul.mubr.f32.gmra.mrb[0].mxu0 %v977
    %v1197 = vpop.f32.mrb[0].mxu0
    %v1198 = vadd.f32 0.0, %v1197
    %v1199 = vpop.f32.mrb[0].mxu0
    %v1200 = vadd.f32 0.0, %v1199
    %1201 = vmatprep.mubr.f32.mxu0 0.0
    %1202 = vmatmul.mubr.f32.gmra.mrb[0].mxu0 %v978
    %v1203 = vpop.f32.mrb[0].mxu0
    %v1204 = vadd.f32 0.0, %v1203
    %v1205 = vpop.f32.mrb[0].mxu0
    %v1206 = vadd.f32 0.0, %v1205
    %1207 = vmatprep.mubr.f32.mxu0 0.0
    %1208 = vmatmul.mubr.f32.gmra.mrb[0].mxu0 %v979
    %v1209 = vpop.f32.mrb[0].mxu0
    %v1210 = vadd.f32 0.0, %v1209
    %v1211 = vpop.f32.mrb[0].mxu0
    %v1212 = vadd.f32 0.0, %v1211
    %1213 = vmatprep.mubr.f32.mxu0 0.0
    %1214 = vmatmul.mubr.f32.gmra.mrb[0].mxu0 %v980
    %v1215 = vpop.f32.mrb[0].mxu0
    %v1216 = vadd.f32 0.0, %v1215
    %v1217 = vpop.f32.mrb[0].mxu0
    %v1218 = vadd.f32 0.0, %v1217
    %1219 = vmatprep.mubr.f32.mxu0 0.0
    %1220 = vmatmul.mubr.f32.gmra.mrb[0].mxu0 %v981
    %v1221 = vpop.f32.mrb[0].mxu0
    %v1222 = vadd.f32 0.0, %v1221
    %v1223 = vpop.f32.mrb[0].mxu0
    %v1224 = vadd.f32 0.0, %v1223
    %1225 = vmatprep.mubr.f32.mxu0 0.0
    %1226 = vmatmul.mubr.f32.gmra.mrb[0].mxu0 %v982
    %v1227 = vpop.f32.mrb[0].mxu0
    %v1228 = vadd.f32 0.0, %v1227
    %v1229 = vpop.f32.mrb[0].mxu0
    %v1230 = vadd.f32 0.0, %v1229
    %1231 = vmatprep.mubr.f32.mxu0 0.0
    %1232 = vmatmul.mubr.f32.gmra.mrb[0].mxu0 %v983
    %v1233 = vpop.f32.mrb[0].mxu0
    %v1234 = vadd.f32 0.0, %v1233
    %v1235 = vpop.f32.mrb[0].mxu0
    %v1236 = vadd.f32 0.0, %v1235
    %1237 = vmatprep.mubr.f32.mxu0 0.0
    %1238 = vmatmul.mubr.f32.gmra.mrb[0].mxu0 %v984
    %v1239 = vpop.f32.mrb[0].mxu0
    %v1240 = vadd.f32 0.0, %v1239
    %v1241 = vpop.f32.mrb[0].mxu0
    %v1242 = vadd.f32 0.0, %v1241
    %1243 = vmatprep.mubr.f32.mxu0 0.0
    %1244 = vmatmul.mubr.f32.gmra.mrb[0].mxu0 %v985
    %v1245 = vpop.f32.mrb[0].mxu0
    %v1246 = vadd.f32 0.0, %v1245
    %v1247 = vpop.f32.mrb[0].mxu0
    %v1248 = vadd.f32 0.0, %v1247
    %1249 = vmatprep.mubr.f32.mxu0 0.0
    %1250 = vmatmul.mubr.f32.gmra.mrb[0].mxu0 %v986
    %v1251 = vpop.f32.mrb[0].mxu0
    %v1252 = vadd.f32 0.0, %v1251
    %v1253 = vpop.f32.mrb[0].mxu0
    %v1254 = vadd.f32 0.0, %v1253
    %1255 = vmatprep.mubr.f32.mxu0 0.0
    %1256 = vmatmul.mubr.f32.gmra.mrb[0].mxu0 %v987
    %v1257 = vpop.f32.mrb[0].mxu0
    %v1258 = vadd.f32 0.0, %v1257
    %v1259 = vpop.f32.mrb[0].mxu0
    %v1260 = vadd.f32 0.0, %v1259
    %1261 = vmatprep.mubr.f32.mxu0 0.0
    %1262 = vmatmul.mubr.f32.gmra.mrb[0].mxu0 %v988
    %v1263 = vpop.f32.mrb[0].mxu0
    %v1264 = vadd.f32 0.0, %v1263
    %v1265 = vpop.f32.mrb[0].mxu0
    %v1266 = vadd.f32 0.0, %v1265
    %1267 = vmatprep.mubr.f32.mxu0 0.0
    %1268 = vmatmul.mubr.f32.gmra.mrb[0].mxu0 %v989
    %v1269 = vpop.f32.mrb[0].mxu0
    %v1270 = vadd.f32 0.0, %v1269
    %v1271 = vpop.f32.mrb[0].mxu0
    %v1272 = vadd.f32 0.0, %v1271
    %1273 = vmatprep.mubr.f32.mxu0 0.0
    %1274 = vmatmul.mubr.f32.gmra.mrb[0].mxu0 %v990
    %v1275 = vpop.f32.mrb[0].mxu0
    %v1276 = vadd.f32 0.0, %v1275
    %v1277 = vpop.f32.mrb[0].mxu0
    %v1278 = vadd.f32 0.0, %v1277
    %1279 = vdwg.mxu0
    %1280 = vmatprep.subr.mxu0 0.0
    %1281 = vmatpush1.msra.mxu0 %v1090
    %1282 = vmatprep.subr.mxu0 0.0
    %1283 = vmatpush1.msra.mxu0 %v1096
    %1284 = vmatprep.subr.mxu0 0.0
    %1285 = vmatpush1.msra.mxu0 %v1102
    %1286 = vmatprep.subr.mxu0 0.0
    %1287 = vmatpush1.msra.mxu0 %v1108
    %1288 = vmatprep.subr.mxu0 0.0
    %1289 = vmatpush1.msra.mxu0 %v1114
    %1290 = vmatprep.subr.mxu0 0.0
    %1291 = vmatpush1.msra.mxu0 %v1120
    %1292 = vmatprep.subr.mxu0 0.0
    %1293 = vmatpush1.msra.mxu0 %v1126
    %1294 = vmatprep.subr.mxu0 0.0
    %1295 = vmatpush1.msra.mxu0 %v1132
    %1296 = vmatprep.subr.mxu0 0.0
    %1297 = vmatpush1.msra.mxu0 %v1138
    %1298 = vmatprep.subr.mxu0 0.0
    %1299 = vmatpush1.msra.mxu0 %v1144
    %1300 = vmatprep.subr.mxu0 0.0
    %1301 = vmatpush1.msra.mxu0 %v1150
    %1302 = vmatprep.subr.mxu0 0.0
    %1303 = vmatpush1.msra.mxu0 %v1156
    %1304 = vmatprep.subr.mxu0 0.0
    %1305 = vmatpush1.msra.mxu0 %v1162
    %1306 = vmatprep.subr.mxu0 0.0
    %1307 = vmatpush1.msra.mxu0 %v1168
    %1308 = vmatprep.subr.mxu0 0.0
    %1309 = vmatpush1.msra.mxu0 %v1174
    %1310 = vmatprep.subr.mxu0 0.0
    %1311 = vmatpush1.msra.mxu0 %v1180
    %1312 = vmatprep.subr.mxu0 0.0
    %1313 = vmatpush1.msra.mxu0 %v1186
    %1314 = vmatprep.subr.mxu0 0.0
    %1315 = vmatpush1.msra.mxu0 %v1192
    %1316 = vmatprep.subr.mxu0 0.0
    %1317 = vmatpush1.msra.mxu0 %v1198
    %1318 = vmatprep.subr.mxu0 0.0
    %1319 = vmatpush1.msra.mxu0 %v1204
    %1320 = vmatprep.subr.mxu0 0.0
    %1321 = vmatpush1.msra.mxu0 %v1210
    %1322 = vmatprep.subr.mxu0 0.0
    %1323 = vmatpush1.msra.mxu0 %v1216
    %1324 = vmatprep.subr.mxu0 0.0
    %1325 = vmatpush1.msra.mxu0 %v1222
    %1326 = vmatprep.subr.mxu0 0.0
    %1327 = vmatpush1.msra.mxu0 %v1228
    %1328 = vmatprep.subr.mxu0 0.0
    %1329 = vmatpush1.msra.mxu0 %v1234
    %1330 = vmatprep.subr.mxu0 0.0
    %1331 = vmatpush1.msra.mxu0 %v1240
    %1332 = vmatprep.subr.mxu0 0.0
    %1333 = vmatpush1.msra.mxu0 %v1246
    %1334 = vmatprep.subr.mxu0 0.0
    %1335 = vmatpush1.msra.mxu0 %v1252
    %1336 = vmatprep.subr.mxu0 0.0
    %1337 = vmatpush1.msra.mxu0 %v1258
    %1338 = vmatprep.subr.mxu0 0.0
    %1339 = vmatpush1.msra.mxu0 %v1264
    %1340 = vmatprep.subr.mxu0 0.0
    %1341 = vmatpush1.msra.mxu0 %v1270
    %1342 = vmatprep.subr.mxu0 0.0
    %1343 = vmatpush1.msra.mxu0 %v1276
    %1344 = vmatprep.mubr.f32.mxu0 %v119
    %1345 = vmatmul.mubr.f32.gmra.mrb[0].mxu0 %v118
    %v1346 = vpop.f32.mrb[0].mxu0
    %v1347 = vadd.f32 %v1092, %v1346
    %v1348 = vpop.f32.mrb[0].mxu0
    %1349 = vmatprep.mubr.f32.mxu0 %v121
    %1350 = vmatmul.mubr.f32.gmra.mrb[0].mxu0 %v120
    %v1351 = vpop.f32.mrb[0].mxu0
    %v1352 = vadd.f32 %v1098, %v1351
    %v1353 = vpop.f32.mrb[0].mxu0
    %1354 = vmatprep.mubr.f32.mxu0 %v123
    %1355 = vmatmul.mubr.f32.gmra.mrb[0].mxu0 %v122
    %v1356 = vpop.f32.mrb[0].mxu0
    %v1357 = vadd.f32 %v1104, %v1356
    %v1358 = vpop.f32.mrb[0].mxu0
    %1359 = vmatprep.mubr.f32.mxu0 %v125
    %1360 = vmatmul.mubr.f32.gmra.mrb[0].mxu0 %v124
    %v1361 = vpop.f32.mrb[0].mxu0
    %v1362 = vadd.f32 %v1110, %v1361
    %v1363 = vpop.f32.mrb[0].mxu0
    %1364 = vmatprep.mubr.f32.mxu0 %v127
    %1365 = vmatmul.mubr.f32.gmra.mrb[0].mxu0 %v126
    %v1366 = vpop.f32.mrb[0].mxu0
    %v1367 = vadd.f32 %v1116, %v1366
    %v1368 = vpop.f32.mrb[0].mxu0
    %1369 = vmatprep.mubr.f32.mxu0 %v129
    %1370 = vmatmul.mubr.f32.gmra.mrb[0].mxu0 %v128
    %v1371 = vpop.f32.mrb[0].mxu0
    %v1372 = vadd.f32 %v1122, %v1371
    %v1373 = vpop.f32.mrb[0].mxu0
    %1374 = vmatprep.mubr.f32.mxu0 %v131
    %1375 = vmatmul.mubr.f32.gmra.mrb[0].mxu0 %v130
    %v1376 = vpop.f32.mrb[0].mxu0
    %v1377 = vadd.f32 %v1128, %v1376
    %v1378 = vpop.f32.mrb[0].mxu0
    %1379 = vmatprep.mubr.f32.mxu0 %v133
    %1380 = vmatmul.mubr.f32.gmra.mrb[0].mxu0 %v132
    %v1381 = vpop.f32.mrb[0].mxu0
    %v1382 = vadd.f32 %v1134, %v1381
    %v1383 = vpop.f32.mrb[0].mxu0
    %1384 = vmatprep.mubr.f32.mxu0 %v135
    %1385 = vmatmul.mubr.f32.gmra.mrb[0].mxu0 %v134
    %v1386 = vpop.f32.mrb[0].mxu0
    %v1387 = vadd.f32 %v1140, %v1386
    %v1388 = vpop.f32.mrb[0].mxu0
    %1389 = vmatprep.mubr.f32.mxu0 %v137
    %1390 = vmatmul.mubr.f32.gmra.mrb[0].mxu0 %v136
    %v1391 = vpop.f32.mrb[0].mxu0
    %v1392 = vadd.f32 %v1146, %v1391
    %v1393 = vpop.f32.mrb[0].mxu0
    %1394 = vmatprep.mubr.f32.mxu0 %v139
    %1395 = vmatmul.mubr.f32.gmra.mrb[0].mxu0 %v138
    %v1396 = vpop.f32.mrb[0].mxu0
    %v1397 = vadd.f32 %v1152, %v1396
    %v1398 = vpop.f32.mrb[0].mxu0
    %1399 = vmatprep.mubr.f32.mxu0 %v141
    %1400 = vmatmul.mubr.f32.gmra.mrb[0].mxu0 %v140
    %v1401 = vpop.f32.mrb[0].mxu0
    %v1402 = vadd.f32 %v1158, %v1401
    %v1403 = vpop.f32.mrb[0].mxu0
    %1404 = vmatprep.mubr.f32.mxu0 %v143
    %1405 = vmatmul.mubr.f32.gmra.mrb[0].mxu0 %v142
    %v1406 = vpop.f32.mrb[0].mxu0
    %v1407 = vadd.f32 %v1164, %v1406
    %v1408 = vpop.f32.mrb[0].mxu0
    %1409 = vmatprep.mubr.f32.mxu0 %v145
    %1410 = vmatmul.mubr.f32.gmra.mrb[0].mxu0 %v144
    %v1411 = vpop.f32.mrb[0].mxu0
    %v1412 = vadd.f32 %v1170, %v1411
    %v1413 = vpop.f32.mrb[0].mxu0
    %1414 = vmatprep.mubr.f32.mxu0 %v147
    %1415 = vmatmul.mubr.f32.gmra.mrb[0].mxu0 %v146
    %v1416 = vpop.f32.mrb[0].mxu0
    %v1417 = vadd.f32 %v1176, %v1416
    %v1418 = vpop.f32.mrb[0].mxu0
    %1419 = vmatprep.mubr.f32.mxu0 %v149
    %1420 = vmatmul.mubr.f32.gmra.mrb[0].mxu0 %v148
    %v1421 = vpop.f32.mrb[0].mxu0
    %v1422 = vadd.f32 %v1182, %v1421
    %v1423 = vpop.f32.mrb[0].mxu0
    %1424 = vmatprep.mubr.f32.mxu0 %v151
    %1425 = vmatmul.mubr.f32.gmra.mrb[0].mxu0 %v150
    %v1426 = vpop.f32.mrb[0].mxu0
    %v1427 = vadd.f32 %v1188, %v1426
    %v1428 = vpop.f32.mrb[0].mxu0
    %1429 = vmatprep.mubr.f32.mxu0 %v153
    %1430 = vmatmul.mubr.f32.gmra.mrb[0].mxu0 %v152
    %v1431 = vpop.f32.mrb[0].mxu0
    %v1432 = vadd.f32 %v1194, %v1431
    %v1433 = vpop.f32.mrb[0].mxu0
    %1434 = vmatprep.mubr.f32.mxu0 %v155
    %1435 = vmatmul.mubr.f32.gmra.mrb[0].mxu0 %v154
    %v1436 = vpop.f32.mrb[0].mxu0
    %v1437 = vadd.f32 %v1200, %v1436
    %v1438 = vpop.f32.mrb[0].mxu0
    %1439 = vmatprep.mubr.f32.mxu0 %v157
    %1440 = vmatmul.mubr.f32.gmra.mrb[0].mxu0 %v156
    %v1441 = vpop.f32.mrb[0].mxu0
    %v1442 = vadd.f32 %v1206, %v1441
    %v1443 = vpop.f32.mrb[0].mxu0
    %1444 = vmatprep.mubr.f32.mxu0 %v159
    %1445 = vmatmul.mubr.f32.gmra.mrb[0].mxu0 %v158
    %v1446 = vpop.f32.mrb[0].mxu0
    %v1447 = vadd.f32 %v1212, %v1446
    %v1448 = vpop.f32.mrb[0].mxu0
    %1449 = vmatprep.mubr.f32.mxu0 %v161
    %1450 = vmatmul.mubr.f32.gmra.mrb[0].mxu0 %v160
    %v1451 = vpop.f32.mrb[0].mxu0
    %v1452 = vadd.f32 %v1218, %v1451
    %v1453 = vpop.f32.mrb[0].mxu0
    %1454 = vmatprep.mubr.f32.mxu0 %v163
    %1455 = vmatmul.mubr.f32.gmra.mrb[0].mxu0 %v162
    %v1456 = vpop.f32.mrb[0].mxu0
    %v1457 = vadd.f32 %v1224, %v1456
    %v1458 = vpop.f32.mrb[0].mxu0
    %1459 = vmatprep.mubr.f32.mxu0 %v165
    %1460 = vmatmul.mubr.f32.gmra.mrb[0].mxu0 %v164
    %v1461 = vpop.f32.mrb[0].mxu0
    %v1462 = vadd.f32 %v1230, %v1461
    %v1463 = vpop.f32.mrb[0].mxu0
    %1464 = vmatprep.mubr.f32.mxu0 %v167
    %1465 = vmatmul.mubr.f32.gmra.mrb[0].mxu0 %v166
    %v1466 = vpop.f32.mrb[0].mxu0
    %v1467 = vadd.f32 %v1236, %v1466
    %v1468 = vpop.f32.mrb[0].mxu0
    %1469 = vmatprep.mubr.f32.mxu0 %v169
    %1470 = vmatmul.mubr.f32.gmra.mrb[0].mxu0 %v168
    %v1471 = vpop.f32.mrb[0].mxu0
    %v1472 = vadd.f32 %v1242, %v1471
    %v1473 = vpop.f32.mrb[0].mxu0
    %1474 = vmatprep.mubr.f32.mxu0 %v171
    %1475 = vmatmul.mubr.f32.gmra.mrb[0].mxu0 %v170
    %v1476 = vpop.f32.mrb[0].mxu0
    %v1477 = vadd.f32 %v1248, %v1476
    %v1478 = vpop.f32.mrb[0].mxu0
    %1479 = vmatprep.mubr.f32.mxu0 %v173
    %1480 = vmatmul.mubr.f32.gmra.mrb[0].mxu0 %v172
    %v1481 = vpop.f32.mrb[0].mxu0
    %v1482 = vadd.f32 %v1254, %v1481
    %v1483 = vpop.f32.mrb[0].mxu0
    %1484 = vmatprep.mubr.f32.mxu0 %v175
    %1485 = vmatmul.mubr.f32.gmra.mrb[0].mxu0 %v174
    %v1486 = vpop.f32.mrb[0].mxu0
    %v1487 = vadd.f32 %v1260, %v1486
    %v1488 = vpop.f32.mrb[0].mxu0
    %1489 = vmatprep.mubr.f32.mxu0 %v177
    %1490 = vmatmul.mubr.f32.gmra.mrb[0].mxu0 %v176
    %v1491 = vpop.f32.mrb[0].mxu0
    %v1492 = vadd.f32 %v1266, %v1491
    %v1493 = vpop.f32.mrb[0].mxu0
    %1494 = vmatprep.mubr.f32.mxu0 %v179
    %1495 = vmatmul.mubr.f32.gmra.mrb[0].mxu0 %v178
    %v1496 = vpop.f32.mrb[0].mxu0
    %v1497 = vadd.f32 %v1272, %v1496
    %v1498 = vpop.f32.mrb[0].mxu0
    %1499 = vmatprep.mubr.f32.mxu0 %v181
    %1500 = vmatmul.mubr.f32.gmra.mrb[0].mxu0 %v180
    %v1501 = vpop.f32.mrb[0].mxu0
    %v1502 = vadd.f32 %v1278, %v1501
    %v1503 = vpop.f32.mrb[0].mxu0
    %1504 = vdwg.mxu0
    %v1505 = vld [vmem:[%s5] sm:$0x1]
    %v1507 = vlaneseq
    %v1508 = vshrl.u32 %v1507, 7
    %v1509 = vsub.s32 0, %v1508
    %v1510 = vrot.slane %v1505, %v1509
    %v1512 = vadd.f32 %v1347, %v1510
    %v1513 = vadd.f32 %v1352, %v1510
    %v1514 = vadd.f32 %v1357, %v1510
    %v1515 = vadd.f32 %v1362, %v1510
    %v1516 = vadd.f32 %v1367, %v1510
    %v1517 = vadd.f32 %v1372, %v1510
    %v1518 = vadd.f32 %v1377, %v1510
    %v1519 = vadd.f32 %v1382, %v1510
    %v1520 = vadd.f32 %v1387, %v1510
    %v1521 = vadd.f32 %v1392, %v1510
    %v1522 = vadd.f32 %v1397, %v1510
    %v1523 = vadd.f32 %v1402, %v1510
    %v1524 = vadd.f32 %v1407, %v1510
    %v1525 = vadd.f32 %v1412, %v1510
    %v1526 = vadd.f32 %v1417, %v1510
    %v1527 = vadd.f32 %v1422, %v1510
    %v1528 = vadd.f32 %v1427, %v1510
    %v1529 = vadd.f32 %v1432, %v1510
    %v1530 = vadd.f32 %v1437, %v1510
    %v1531 = vadd.f32 %v1442, %v1510
    %v1532 = vadd.f32 %v1447, %v1510
    %v1533 = vadd.f32 %v1452, %v1510
    %v1534 = vadd.f32 %v1457, %v1510
    %v1535 = vadd.f32 %v1462, %v1510
    %v1536 = vadd.f32 %v1467, %v1510
    %v1537 = vadd.f32 %v1472, %v1510
    %v1538 = vadd.f32 %v1477, %v1510
    %v1539 = vadd.f32 %v1482, %v1510
    %v1540 = vadd.f32 %v1487, %v1510
    %v1541 = vadd.f32 %v1492, %v1510
    %v1542 = vadd.f32 %v1497, %v1510
    %v1543 = vadd.f32 %v1502, %v1510
    %v1544 = vmul.f32 %v1512, %v1512
    %v1545 = vmul.f32 %v1513, %v1513
    %v1546 = vmul.f32 %v1514, %v1514
    %v1547 = vmul.f32 %v1515, %v1515
    %v1548 = vmul.f32 %v1516, %v1516
    %v1549 = vmul.f32 %v1517, %v1517
    %v1550 = vmul.f32 %v1518, %v1518
    %v1551 = vmul.f32 %v1519, %v1519
    %v1552 = vmul.f32 %v1520, %v1520
    %v1553 = vmul.f32 %v1521, %v1521
    %v1554 = vmul.f32 %v1522, %v1522
    %v1555 = vmul.f32 %v1523, %v1523
    %v1556 = vmul.f32 %v1524, %v1524
    %v1557 = vmul.f32 %v1525, %v1525
    %v1558 = vmul.f32 %v1526, %v1526
    %v1559 = vmul.f32 %v1527, %v1527
    %v1560 = vmul.f32 %v1528, %v1528
    %v1561 = vmul.f32 %v1529, %v1529
    %v1562 = vmul.f32 %v1530, %v1530
    %v1563 = vmul.f32 %v1531, %v1531
    %v1564 = vmul.f32 %v1532, %v1532
    %v1565 = vmul.f32 %v1533, %v1533
    %v1566 = vmul.f32 %v1534, %v1534
    %v1567 = vmul.f32 %v1535, %v1535
    %v1568 = vmul.f32 %v1536, %v1536
    %v1569 = vmul.f32 %v1537, %v1537
    %v1570 = vmul.f32 %v1538, %v1538
    %v1571 = vmul.f32 %v1539, %v1539
    %v1572 = vmul.f32 %v1540, %v1540
    %v1573 = vmul.f32 %v1541, %v1541
    %v1574 = vmul.f32 %v1542, %v1542
    %v1575 = vmul.f32 %v1543, %v1543
    %1576 = vadd.xlane.f32.xlu0 %v1544
    %v1577 = vpop.xlane.xlu0 %1576
    %1578 = vadd.xlane.f32.xlu0 %v1545
    %v1579 = vpop.xlane.xlu0 %1578
    %1580 = vadd.xlane.f32.xlu0 %v1546
    %v1581 = vpop.xlane.xlu0 %1580
    %1582 = vadd.xlane.f32.xlu0 %v1547
    %v1583 = vpop.xlane.xlu0 %1582
    %1584 = vadd.xlane.f32.xlu0 %v1548
    %v1585 = vpop.xlane.xlu0 %1584
    %1586 = vadd.xlane.f32.xlu0 %v1549
    %v1587 = vpop.xlane.xlu0 %1586
    %1588 = vadd.xlane.f32.xlu0 %v1550
    %v1589 = vpop.xlane.xlu0 %1588
    %1590 = vadd.xlane.f32.xlu0 %v1551
    %v1591 = vpop.xlane.xlu0 %1590
    %1592 = vadd.xlane.f32.xlu0 %v1552
    %v1593 = vpop.xlane.xlu0 %1592
    %1594 = vadd.xlane.f32.xlu0 %v1553
    %v1595 = vpop.xlane.xlu0 %1594
    %1596 = vadd.xlane.f32.xlu0 %v1554
    %v1597 = vpop.xlane.xlu0 %1596
    %1598 = vadd.xlane.f32.xlu0 %v1555
    %v1599 = vpop.xlane.xlu0 %1598
    %1600 = vadd.xlane.f32.xlu0 %v1556
    %v1601 = vpop.xlane.xlu0 %1600
    %1602 = vadd.xlane.f32.xlu0 %v1557
    %v1603 = vpop.xlane.xlu0 %1602
    %1604 = vadd.xlane.f32.xlu0 %v1558
    %v1605 = vpop.xlane.xlu0 %1604
    %1606 = vadd.xlane.f32.xlu0 %v1559
    %v1607 = vpop.xlane.xlu0 %1606
    %1608 = vadd.xlane.f32.xlu0 %v1560
    %v1609 = vpop.xlane.xlu0 %1608
    %1610 = vadd.xlane.f32.xlu0 %v1561
    %v1611 = vpop.xlane.xlu0 %1610
    %1612 = vadd.xlane.f32.xlu0 %v1562
    %v1613 = vpop.xlane.xlu0 %1612
    %1614 = vadd.xlane.f32.xlu0 %v1563
    %v1615 = vpop.xlane.xlu0 %1614
    %1616 = vadd.xlane.f32.xlu0 %v1564
    %v1617 = vpop.xlane.xlu0 %1616
    %1618 = vadd.xlane.f32.xlu0 %v1565
    %v1619 = vpop.xlane.xlu0 %1618
    %1620 = vadd.xlane.f32.xlu0 %v1566
    %v1621 = vpop.xlane.xlu0 %1620
    %1622 = vadd.xlane.f32.xlu0 %v1567
    %v1623 = vpop.xlane.xlu0 %1622
    %1624 = vadd.xlane.f32.xlu0 %v1568
    %v1625 = vpop.xlane.xlu0 %1624
    %1626 = vadd.xlane.f32.xlu0 %v1569
    %v1627 = vpop.xlane.xlu0 %1626
    %1628 = vadd.xlane.f32.xlu0 %v1570
    %v1629 = vpop.xlane.xlu0 %1628
    %1630 = vadd.xlane.f32.xlu0 %v1571
    %v1631 = vpop.xlane.xlu0 %1630
    %1632 = vadd.xlane.f32.xlu0 %v1572
    %v1633 = vpop.xlane.xlu0 %1632
    %1634 = vadd.xlane.f32.xlu0 %v1573
    %v1635 = vpop.xlane.xlu0 %1634
    %1636 = vadd.xlane.f32.xlu0 %v1574
    %v1637 = vpop.xlane.xlu0 %1636
    %1638 = vadd.xlane.f32.xlu0 %v1575
    %v1639 = vpop.xlane.xlu0 %1638
    %v1640 = vmax.f32 %v1577, 1e-24
    %v1641 = vmax.f32 %v1579, 1e-24
    %v1642 = vmax.f32 %v1581, 1e-24
    %v1643 = vmax.f32 %v1583, 1e-24
    %v1644 = vmax.f32 %v1585, 1e-24
    %v1645 = vmax.f32 %v1587, 1e-24
    %v1646 = vmax.f32 %v1589, 1e-24
    %v1647 = vmax.f32 %v1591, 1e-24
    %v1648 = vmax.f32 %v1593, 1e-24
    %v1649 = vmax.f32 %v1595, 1e-24
    %v1650 = vmax.f32 %v1597, 1e-24
    %v1651 = vmax.f32 %v1599, 1e-24
    %v1652 = vmax.f32 %v1601, 1e-24
    %v1653 = vmax.f32 %v1603, 1e-24
    %v1654 = vmax.f32 %v1605, 1e-24
    %v1655 = vmax.f32 %v1607, 1e-24
    %v1656 = vmax.f32 %v1609, 1e-24
    %v1657 = vmax.f32 %v1611, 1e-24
    %v1658 = vmax.f32 %v1613, 1e-24
    %v1659 = vmax.f32 %v1615, 1e-24
    %v1660 = vmax.f32 %v1617, 1e-24
    %v1661 = vmax.f32 %v1619, 1e-24
    %v1662 = vmax.f32 %v1621, 1e-24
    %v1663 = vmax.f32 %v1623, 1e-24
    %v1664 = vmax.f32 %v1625, 1e-24
    %v1665 = vmax.f32 %v1627, 1e-24
    %v1666 = vmax.f32 %v1629, 1e-24
    %v1667 = vmax.f32 %v1631, 1e-24
    %v1668 = vmax.f32 %v1633, 1e-24
    %v1669 = vmax.f32 %v1635, 1e-24
    %v1670 = vmax.f32 %v1637, 1e-24
    %v1671 = vmax.f32 %v1639, 1e-24
    %v1672 = vrsqrt.pop %v1640
    %v1673 = vrsqrt.pop %v1641
    %v1674 = vrsqrt.pop %v1642
    %v1675 = vrsqrt.pop %v1643
    %v1676 = vrsqrt.pop %v1644
    %v1677 = vrsqrt.pop %v1645
    %v1678 = vrsqrt.pop %v1646
    %v1679 = vrsqrt.pop %v1647
    %v1680 = vrsqrt.pop %v1648
    %v1681 = vrsqrt.pop %v1649
    %v1682 = vrsqrt.pop %v1650
    %v1683 = vrsqrt.pop %v1651
    %v1684 = vrsqrt.pop %v1652
    %v1685 = vrsqrt.pop %v1653
    %v1686 = vrsqrt.pop %v1654
    %v1687 = vrsqrt.pop %v1655
    %v1688 = vrsqrt.pop %v1656
    %v1689 = vrsqrt.pop %v1657
    %v1690 = vrsqrt.pop %v1658
    %v1691 = vrsqrt.pop %v1659
    %v1692 = vrsqrt.pop %v1660
    %v1693 = vrsqrt.pop %v1661
    %v1694 = vrsqrt.pop %v1662
    %v1695 = vrsqrt.pop %v1663
    %v1696 = vrsqrt.pop %v1664
    %v1697 = vrsqrt.pop %v1665
    %v1698 = vrsqrt.pop %v1666
    %v1699 = vrsqrt.pop %v1667
    %v1700 = vrsqrt.pop %v1668
    %v1701 = vrsqrt.pop %v1669
    %v1702 = vrsqrt.pop %v1670
    %v1703 = vrsqrt.pop %v1671
    %v1704 = vmul.f32 %v1512, %v1672
    %v1705 = vmul.f32 %v1513, %v1673
    %v1706 = vmul.f32 %v1514, %v1674
    %v1707 = vmul.f32 %v1515, %v1675
    %v1708 = vmul.f32 %v1516, %v1676
    %v1709 = vmul.f32 %v1517, %v1677
    %v1710 = vmul.f32 %v1518, %v1678
    %v1711 = vmul.f32 %v1519, %v1679
    %v1712 = vmul.f32 %v1520, %v1680
    %v1713 = vmul.f32 %v1521, %v1681
    %v1714 = vmul.f32 %v1522, %v1682
    %v1715 = vmul.f32 %v1523, %v1683
    %v1716 = vmul.f32 %v1524, %v1684
    %v1717 = vmul.f32 %v1525, %v1685
    %v1718 = vmul.f32 %v1526, %v1686
    %v1719 = vmul.f32 %v1527, %v1687
    %v1720 = vmul.f32 %v1528, %v1688
    %v1721 = vmul.f32 %v1529, %v1689
    %v1722 = vmul.f32 %v1530, %v1690
    %v1723 = vmul.f32 %v1531, %v1691
    %v1724 = vmul.f32 %v1532, %v1692
    %v1725 = vmul.f32 %v1533, %v1693
    %v1726 = vmul.f32 %v1534, %v1694
    %v1727 = vmul.f32 %v1535, %v1695
    %v1728 = vmul.f32 %v1536, %v1696
    %v1729 = vmul.f32 %v1537, %v1697
    %v1730 = vmul.f32 %v1538, %v1698
    %v1731 = vmul.f32 %v1539, %v1699
    %v1732 = vmul.f32 %v1540, %v1700
    %v1733 = vmul.f32 %v1541, %v1701
    %v1734 = vmul.f32 %v1542, %v1702
    %v1735 = vmul.f32 %v1543, %v1703
    %v1736 = vmax.f32 %v1704, 0.0
    %v1737 = vmax.f32 %v1705, 0.0
    %v1738 = vmax.f32 %v1706, 0.0
    %v1739 = vmax.f32 %v1707, 0.0
    %v1740 = vmax.f32 %v1708, 0.0
    %v1741 = vmax.f32 %v1709, 0.0
    %v1742 = vmax.f32 %v1710, 0.0
    %v1743 = vmax.f32 %v1711, 0.0
    %v1744 = vmax.f32 %v1712, 0.0
    %v1745 = vmax.f32 %v1713, 0.0
    %v1746 = vmax.f32 %v1714, 0.0
    %v1747 = vmax.f32 %v1715, 0.0
    %v1748 = vmax.f32 %v1716, 0.0
    %v1749 = vmax.f32 %v1717, 0.0
    %v1750 = vmax.f32 %v1718, 0.0
    %v1751 = vmax.f32 %v1719, 0.0
    %v1752 = vmax.f32 %v1720, 0.0
    %v1753 = vmax.f32 %v1721, 0.0
    %v1754 = vmax.f32 %v1722, 0.0
    %v1755 = vmax.f32 %v1723, 0.0
    %v1756 = vmax.f32 %v1724, 0.0
    %v1757 = vmax.f32 %v1725, 0.0
    %v1758 = vmax.f32 %v1726, 0.0
    %v1759 = vmax.f32 %v1727, 0.0
    %v1760 = vmax.f32 %v1728, 0.0
    %v1761 = vmax.f32 %v1729, 0.0
    %v1762 = vmax.f32 %v1730, 0.0
    %v1763 = vmax.f32 %v1731, 0.0
    %v1764 = vmax.f32 %v1732, 0.0
    %v1765 = vmax.f32 %v1733, 0.0
    %v1766 = vmax.f32 %v1734, 0.0
    %v1767 = vmax.f32 %v1735, 0.0
    %v1768 = vld [vmem:[#allocation10] sm:$0xff]
    %v1769 = vld [vmem:[#allocation10 + $0x8] sm:$0xff]
    %v1770 = vld [vmem:[#allocation10 + $0x10] sm:$0xff]
    %v1771 = vld [vmem:[#allocation10 + $0x18] sm:$0xff]
    %v1772 = vld [vmem:[#allocation10 + $0x20] sm:$0xff]
    %v1773 = vld [vmem:[#allocation10 + $0x28] sm:$0xff]
    %v1774 = vld [vmem:[#allocation10 + $0x30] sm:$0xff]
    %v1775 = vld [vmem:[#allocation10 + $0x38] sm:$0xff]
    %v1776 = vld [vmem:[#allocation10 + $0x40] sm:$0xff]
    %v1777 = vld [vmem:[#allocation10 + $0x48] sm:$0xff]
    %v1778 = vld [vmem:[#allocation10 + $0x50] sm:$0xff]
    %v1779 = vld [vmem:[#allocation10 + $0x58] sm:$0xff]
    %v1780 = vld [vmem:[#allocation10 + $0x60] sm:$0xff]
    %v1781 = vld [vmem:[#allocation10 + $0x68] sm:$0xff]
    %v1782 = vld [vmem:[#allocation10 + $0x70] sm:$0xff]
    %v1783 = vld [vmem:[#allocation10 + $0x78] sm:$0xff]
    %v1784 = vld [vmem:[#allocation10 + $0x80] sm:$0xff]
    %v1785 = vld [vmem:[#allocation10 + $0x88] sm:$0xff]
    %v1786 = vld [vmem:[#allocation10 + $0x90] sm:$0xff]
    %v1787 = vld [vmem:[#allocation10 + $0x98] sm:$0xff]
    %v1788 = vld [vmem:[#allocation10 + $0xa0] sm:$0xff]
    %v1789 = vld [vmem:[#allocation10 + $0xa8] sm:$0xff]
    %v1790 = vld [vmem:[#allocation10 + $0xb0] sm:$0xff]
    %v1791 = vld [vmem:[#allocation10 + $0xb8] sm:$0xff]
    %v1792 = vld [vmem:[#allocation10 + $0xc0] sm:$0xff]
    %v1793 = vld [vmem:[#allocation10 + $0xc8] sm:$0xff]
    %v1794 = vld [vmem:[#allocation10 + $0xd0] sm:$0xff]
    %v1795 = vld [vmem:[#allocation10 + $0xd8] sm:$0xff]
    %v1796 = vld [vmem:[#allocation10 + $0xe0] sm:$0xff]
    %v1797 = vld [vmem:[#allocation10 + $0xe8] sm:$0xff]
    %v1798 = vld [vmem:[#allocation10 + $0xf0] sm:$0xff]
    %v1799 = vld [vmem:[#allocation10 + $0xf8] sm:$0xff]
    %1800 = vmatprep.subr.mxu0 %v1769
    %1801 = vmatpush1.msra.mxu0 %v1768
    %1802 = vmatprep.subr.mxu0 %v1771
    %1803 = vmatpush1.msra.mxu0 %v1770
    %1804 = vmatprep.subr.mxu0 %v1773
    %1805 = vmatpush1.msra.mxu0 %v1772
    %1806 = vmatprep.subr.mxu0 %v1775
    %1807 = vmatpush1.msra.mxu0 %v1774
    %1808 = vmatprep.subr.mxu0 %v1777
    %1809 = vmatpush1.msra.mxu0 %v1776
    %1810 = vmatprep.subr.mxu0 %v1779
    %1811 = vmatpush1.msra.mxu0 %v1778
    %1812 = vmatprep.subr.mxu0 %v1781
    %1813 = vmatpush1.msra.mxu0 %v1780
    %1814 = vmatprep.subr.mxu0 %v1783
    %1815 = vmatpush1.msra.mxu0 %v1782
    %1816 = vmatprep.subr.mxu0 %v1785
    %1817 = vmatpush1.msra.mxu0 %v1784
    %1818 = vmatprep.subr.mxu0 %v1787
    %1819 = vmatpush1.msra.mxu0 %v1786
    %1820 = vmatprep.subr.mxu0 %v1789
    %1821 = vmatpush1.msra.mxu0 %v1788
    %1822 = vmatprep.subr.mxu0 %v1791
    %1823 = vmatpush1.msra.mxu0 %v1790
    %1824 = vmatprep.subr.mxu0 %v1793
    %1825 = vmatpush1.msra.mxu0 %v1792
    %1826 = vmatprep.subr.mxu0 %v1795
    %1827 = vmatpush1.msra.mxu0 %v1794
    %1828 = vmatprep.subr.mxu0 %v1797
    %1829 = vmatpush1.msra.mxu0 %v1796
    %1830 = vmatprep.subr.mxu0 %v1799
    %1831 = vmatpush1.msra.mxu0 %v1798
    %1832 = vmatprep.subr.mxu0 0.0
    %1833 = vmatpush1.msra.mxu0 0.0
    %1834 = vmatprep.subr.mxu0 0.0
    %1835 = vmatpush1.msra.mxu0 0.0
    %1836 = vmatprep.subr.mxu0 0.0
    %1837 = vmatpush1.msra.mxu0 0.0
    %1838 = vmatprep.subr.mxu0 0.0
    %1839 = vmatpush1.msra.mxu0 0.0
    %1840 = vmatprep.subr.mxu0 0.0
    %1841 = vmatpush1.msra.mxu0 0.0
    %1842 = vmatprep.subr.mxu0 0.0
    %1843 = vmatpush1.msra.mxu0 0.0
    %1844 = vmatprep.subr.mxu0 0.0
    %1845 = vmatpush1.msra.mxu0 0.0
    %1846 = vmatprep.subr.mxu0 0.0
    %1847 = vmatpush1.msra.mxu0 0.0
    %1848 = vmatprep.subr.mxu0 0.0
    %1849 = vmatpush1.msra.mxu0 0.0
    %1850 = vmatprep.subr.mxu0 0.0
    %1851 = vmatpush1.msra.mxu0 0.0
    %1852 = vmatprep.subr.mxu0 0.0
    %1853 = vmatpush1.msra.mxu0 0.0
    %1854 = vmatprep.subr.mxu0 0.0
    %1855 = vmatpush1.msra.mxu0 0.0
    %1856 = vmatprep.subr.mxu0 0.0
    %1857 = vmatpush1.msra.mxu0 0.0
    %1858 = vmatprep.subr.mxu0 0.0
    %1859 = vmatpush1.msra.mxu0 0.0
    %1860 = vmatprep.subr.mxu0 0.0
    %1861 = vmatpush1.msra.mxu0 0.0
    %1862 = vmatprep.subr.mxu0 0.0
    %1863 = vmatpush1.msra.mxu0 0.0
    %1864 = vmatprep.mubr.f32.mxu0 0.0
    %1865 = vmatmul.mubr.f32.gmra.mrb[0].mxu0 %v1736
    %v1866 = vpop.f32.mrb[0].mxu0
    %v1867 = vadd.f32 0.0, %v1866
    %v1868 = vpop.f32.mrb[0].mxu0
    %v1869 = vadd.f32 0.0, %v1868
    %1870 = vmatprep.mubr.f32.mxu0 0.0
    %1871 = vmatmul.mubr.f32.gmra.mrb[0].mxu0 %v1737
    %v1872 = vpop.f32.mrb[0].mxu0
    %v1873 = vadd.f32 0.0, %v1872
    %v1874 = vpop.f32.mrb[0].mxu0
    %v1875 = vadd.f32 0.0, %v1874
    %1876 = vmatprep.mubr.f32.mxu0 0.0
    %1877 = vmatmul.mubr.f32.gmra.mrb[0].mxu0 %v1738
    %v1878 = vpop.f32.mrb[0].mxu0
    %v1879 = vadd.f32 0.0, %v1878
    %v1880 = vpop.f32.mrb[0].mxu0
    %v1881 = vadd.f32 0.0, %v1880
    %1882 = vmatprep.mubr.f32.mxu0 0.0
    %1883 = vmatmul.mubr.f32.gmra.mrb[0].mxu0 %v1739
    %v1884 = vpop.f32.mrb[0].mxu0
    %v1885 = vadd.f32 0.0, %v1884
    %v1886 = vpop.f32.mrb[0].mxu0
    %v1887 = vadd.f32 0.0, %v1886
    %1888 = vmatprep.mubr.f32.mxu0 0.0
    %1889 = vmatmul.mubr.f32.gmra.mrb[0].mxu0 %v1740
    %v1890 = vpop.f32.mrb[0].mxu0
    %v1891 = vadd.f32 0.0, %v1890
    %v1892 = vpop.f32.mrb[0].mxu0
    %v1893 = vadd.f32 0.0, %v1892
    %1894 = vmatprep.mubr.f32.mxu0 0.0
    %1895 = vmatmul.mubr.f32.gmra.mrb[0].mxu0 %v1741
    %v1896 = vpop.f32.mrb[0].mxu0
    %v1897 = vadd.f32 0.0, %v1896
    %v1898 = vpop.f32.mrb[0].mxu0
    %v1899 = vadd.f32 0.0, %v1898
    %1900 = vmatprep.mubr.f32.mxu0 0.0
    %1901 = vmatmul.mubr.f32.gmra.mrb[0].mxu0 %v1742
    %v1902 = vpop.f32.mrb[0].mxu0
    %v1903 = vadd.f32 0.0, %v1902
    %v1904 = vpop.f32.mrb[0].mxu0
    %v1905 = vadd.f32 0.0, %v1904
    %1906 = vmatprep.mubr.f32.mxu0 0.0
    %1907 = vmatmul.mubr.f32.gmra.mrb[0].mxu0 %v1743
    %v1908 = vpop.f32.mrb[0].mxu0
    %v1909 = vadd.f32 0.0, %v1908
    %v1910 = vpop.f32.mrb[0].mxu0
    %v1911 = vadd.f32 0.0, %v1910
    %1912 = vmatprep.mubr.f32.mxu0 0.0
    %1913 = vmatmul.mubr.f32.gmra.mrb[0].mxu0 %v1744
    %v1914 = vpop.f32.mrb[0].mxu0
    %v1915 = vadd.f32 0.0, %v1914
    %v1916 = vpop.f32.mrb[0].mxu0
    %v1917 = vadd.f32 0.0, %v1916
    %1918 = vmatprep.mubr.f32.mxu0 0.0
    %1919 = vmatmul.mubr.f32.gmra.mrb[0].mxu0 %v1745
    %v1920 = vpop.f32.mrb[0].mxu0
    %v1921 = vadd.f32 0.0, %v1920
    %v1922 = vpop.f32.mrb[0].mxu0
    %v1923 = vadd.f32 0.0, %v1922
    %1924 = vmatprep.mubr.f32.mxu0 0.0
    %1925 = vmatmul.mubr.f32.gmra.mrb[0].mxu0 %v1746
    %v1926 = vpop.f32.mrb[0].mxu0
    %v1927 = vadd.f32 0.0, %v1926
    %v1928 = vpop.f32.mrb[0].mxu0
    %v1929 = vadd.f32 0.0, %v1928
    %1930 = vmatprep.mubr.f32.mxu0 0.0
    %1931 = vmatmul.mubr.f32.gmra.mrb[0].mxu0 %v1747
    %v1932 = vpop.f32.mrb[0].mxu0
    %v1933 = vadd.f32 0.0, %v1932
    %v1934 = vpop.f32.mrb[0].mxu0
    %v1935 = vadd.f32 0.0, %v1934
    %1936 = vmatprep.mubr.f32.mxu0 0.0
    %1937 = vmatmul.mubr.f32.gmra.mrb[0].mxu0 %v1748
    %v1938 = vpop.f32.mrb[0].mxu0
    %v1939 = vadd.f32 0.0, %v1938
    %v1940 = vpop.f32.mrb[0].mxu0
    %v1941 = vadd.f32 0.0, %v1940
    %1942 = vmatprep.mubr.f32.mxu0 0.0
    %1943 = vmatmul.mubr.f32.gmra.mrb[0].mxu0 %v1749
    %v1944 = vpop.f32.mrb[0].mxu0
    %v1945 = vadd.f32 0.0, %v1944
    %v1946 = vpop.f32.mrb[0].mxu0
    %v1947 = vadd.f32 0.0, %v1946
    %1948 = vmatprep.mubr.f32.mxu0 0.0
    %1949 = vmatmul.mubr.f32.gmra.mrb[0].mxu0 %v1750
    %v1950 = vpop.f32.mrb[0].mxu0
    %v1951 = vadd.f32 0.0, %v1950
    %v1952 = vpop.f32.mrb[0].mxu0
    %v1953 = vadd.f32 0.0, %v1952
    %1954 = vmatprep.mubr.f32.mxu0 0.0
    %1955 = vmatmul.mubr.f32.gmra.mrb[0].mxu0 %v1751
    %v1956 = vpop.f32.mrb[0].mxu0
    %v1957 = vadd.f32 0.0, %v1956
    %v1958 = vpop.f32.mrb[0].mxu0
    %v1959 = vadd.f32 0.0, %v1958
    %1960 = vmatprep.mubr.f32.mxu0 0.0
    %1961 = vmatmul.mubr.f32.gmra.mrb[0].mxu0 %v1752
    %v1962 = vpop.f32.mrb[0].mxu0
    %v1963 = vadd.f32 0.0, %v1962
    %v1964 = vpop.f32.mrb[0].mxu0
    %v1965 = vadd.f32 0.0, %v1964
    %1966 = vmatprep.mubr.f32.mxu0 0.0
    %1967 = vmatmul.mubr.f32.gmra.mrb[0].mxu0 %v1753
    %v1968 = vpop.f32.mrb[0].mxu0
    %v1969 = vadd.f32 0.0, %v1968
    %v1970 = vpop.f32.mrb[0].mxu0
    %v1971 = vadd.f32 0.0, %v1970
    %1972 = vmatprep.mubr.f32.mxu0 0.0
    %1973 = vmatmul.mubr.f32.gmra.mrb[0].mxu0 %v1754
    %v1974 = vpop.f32.mrb[0].mxu0
    %v1975 = vadd.f32 0.0, %v1974
    %v1976 = vpop.f32.mrb[0].mxu0
    %v1977 = vadd.f32 0.0, %v1976
    %1978 = vmatprep.mubr.f32.mxu0 0.0
    %1979 = vmatmul.mubr.f32.gmra.mrb[0].mxu0 %v1755
    %v1980 = vpop.f32.mrb[0].mxu0
    %v1981 = vadd.f32 0.0, %v1980
    %v1982 = vpop.f32.mrb[0].mxu0
    %v1983 = vadd.f32 0.0, %v1982
    %1984 = vmatprep.mubr.f32.mxu0 0.0
    %1985 = vmatmul.mubr.f32.gmra.mrb[0].mxu0 %v1756
    %v1986 = vpop.f32.mrb[0].mxu0
    %v1987 = vadd.f32 0.0, %v1986
    %v1988 = vpop.f32.mrb[0].mxu0
    %v1989 = vadd.f32 0.0, %v1988
    %1990 = vmatprep.mubr.f32.mxu0 0.0
    %1991 = vmatmul.mubr.f32.gmra.mrb[0].mxu0 %v1757
    %v1992 = vpop.f32.mrb[0].mxu0
    %v1993 = vadd.f32 0.0, %v1992
    %v1994 = vpop.f32.mrb[0].mxu0
    %v1995 = vadd.f32 0.0, %v1994
    %1996 = vmatprep.mubr.f32.mxu0 0.0
    %1997 = vmatmul.mubr.f32.gmra.mrb[0].mxu0 %v1758
    %v1998 = vpop.f32.mrb[0].mxu0
    %v1999 = vadd.f32 0.0, %v1998
    %v2000 = vpop.f32.mrb[0].mxu0
    %v2001 = vadd.f32 0.0, %v2000
    %2002 = vmatprep.mubr.f32.mxu0 0.0
    %2003 = vmatmul.mubr.f32.gmra.mrb[0].mxu0 %v1759
    %v2004 = vpop.f32.mrb[0].mxu0
    %v2005 = vadd.f32 0.0, %v2004
    %v2006 = vpop.f32.mrb[0].mxu0
    %v2007 = vadd.f32 0.0, %v2006
    %2008 = vmatprep.mubr.f32.mxu0 0.0
    %2009 = vmatmul.mubr.f32.gmra.mrb[0].mxu0 %v1760
    %v2010 = vpop.f32.mrb[0].mxu0
    %v2011 = vadd.f32 0.0, %v2010
    %v2012 = vpop.f32.mrb[0].mxu0
    %v2013 = vadd.f32 0.0, %v2012
    %2014 = vmatprep.mubr.f32.mxu0 0.0
    %2015 = vmatmul.mubr.f32.gmra.mrb[0].mxu0 %v1761
    %v2016 = vpop.f32.mrb[0].mxu0
    %v2017 = vadd.f32 0.0, %v2016
    %v2018 = vpop.f32.mrb[0].mxu0
    %v2019 = vadd.f32 0.0, %v2018
    %2020 = vmatprep.mubr.f32.mxu0 0.0
    %2021 = vmatmul.mubr.f32.gmra.mrb[0].mxu0 %v1762
    %v2022 = vpop.f32.mrb[0].mxu0
    %v2023 = vadd.f32 0.0, %v2022
    %v2024 = vpop.f32.mrb[0].mxu0
    %v2025 = vadd.f32 0.0, %v2024
    %2026 = vmatprep.mubr.f32.mxu0 0.0
    %2027 = vmatmul.mubr.f32.gmra.mrb[0].mxu0 %v1763
    %v2028 = vpop.f32.mrb[0].mxu0
    %v2029 = vadd.f32 0.0, %v2028
    %v2030 = vpop.f32.mrb[0].mxu0
    %v2031 = vadd.f32 0.0, %v2030
    %2032 = vmatprep.mubr.f32.mxu0 0.0
    %2033 = vmatmul.mubr.f32.gmra.mrb[0].mxu0 %v1764
    %v2034 = vpop.f32.mrb[0].mxu0
    %v2035 = vadd.f32 0.0, %v2034
    %v2036 = vpop.f32.mrb[0].mxu0
    %v2037 = vadd.f32 0.0, %v2036
    %2038 = vmatprep.mubr.f32.mxu0 0.0
    %2039 = vmatmul.mubr.f32.gmra.mrb[0].mxu0 %v1765
    %v2040 = vpop.f32.mrb[0].mxu0
    %v2041 = vadd.f32 0.0, %v2040
    %v2042 = vpop.f32.mrb[0].mxu0
    %v2043 = vadd.f32 0.0, %v2042
    %2044 = vmatprep.mubr.f32.mxu0 0.0
    %2045 = vmatmul.mubr.f32.gmra.mrb[0].mxu0 %v1766
    %v2046 = vpop.f32.mrb[0].mxu0
    %v2047 = vadd.f32 0.0, %v2046
    %v2048 = vpop.f32.mrb[0].mxu0
    %v2049 = vadd.f32 0.0, %v2048
    %2050 = vmatprep.mubr.f32.mxu0 0.0
    %2051 = vmatmul.mubr.f32.gmra.mrb[0].mxu0 %v1767
    %v2052 = vpop.f32.mrb[0].mxu0
    %v2053 = vadd.f32 0.0, %v2052
    %v2054 = vpop.f32.mrb[0].mxu0
    %v2055 = vadd.f32 0.0, %v2054
    %2056 = vdwg.mxu0
    %2057 = vmatprep.subr.mxu0 0.0
    %2058 = vmatpush1.msra.mxu0 %v1867
    %2059 = vmatprep.subr.mxu0 0.0
    %2060 = vmatpush1.msra.mxu0 %v1873
    %2061 = vmatprep.subr.mxu0 0.0
    %2062 = vmatpush1.msra.mxu0 %v1879
    %2063 = vmatprep.subr.mxu0 0.0
    %2064 = vmatpush1.msra.mxu0 %v1885
    %2065 = vmatprep.subr.mxu0 0.0
    %2066 = vmatpush1.msra.mxu0 %v1891
    %2067 = vmatprep.subr.mxu0 0.0
    %2068 = vmatpush1.msra.mxu0 %v1897
    %2069 = vmatprep.subr.mxu0 0.0
    %2070 = vmatpush1.msra.mxu0 %v1903
    %2071 = vmatprep.subr.mxu0 0.0
    %2072 = vmatpush1.msra.mxu0 %v1909
    %2073 = vmatprep.subr.mxu0 0.0
    %2074 = vmatpush1.msra.mxu0 %v1915
    %2075 = vmatprep.subr.mxu0 0.0
    %2076 = vmatpush1.msra.mxu0 %v1921
    %2077 = vmatprep.subr.mxu0 0.0
    %2078 = vmatpush1.msra.mxu0 %v1927
    %2079 = vmatprep.subr.mxu0 0.0
    %2080 = vmatpush1.msra.mxu0 %v1933
    %2081 = vmatprep.subr.mxu0 0.0
    %2082 = vmatpush1.msra.mxu0 %v1939
    %2083 = vmatprep.subr.mxu0 0.0
    %2084 = vmatpush1.msra.mxu0 %v1945
    %2085 = vmatprep.subr.mxu0 0.0
    %2086 = vmatpush1.msra.mxu0 %v1951
    %2087 = vmatprep.subr.mxu0 0.0
    %2088 = vmatpush1.msra.mxu0 %v1957
    %2089 = vmatprep.subr.mxu0 0.0
    %2090 = vmatpush1.msra.mxu0 %v1963
    %2091 = vmatprep.subr.mxu0 0.0
    %2092 = vmatpush1.msra.mxu0 %v1969
    %2093 = vmatprep.subr.mxu0 0.0
    %2094 = vmatpush1.msra.mxu0 %v1975
    %2095 = vmatprep.subr.mxu0 0.0
    %2096 = vmatpush1.msra.mxu0 %v1981
    %2097 = vmatprep.subr.mxu0 0.0
    %2098 = vmatpush1.msra.mxu0 %v1987
    %2099 = vmatprep.subr.mxu0 0.0
    %2100 = vmatpush1.msra.mxu0 %v1993
    %2101 = vmatprep.subr.mxu0 0.0
    %2102 = vmatpush1.msra.mxu0 %v1999
    %2103 = vmatprep.subr.mxu0 0.0
    %2104 = vmatpush1.msra.mxu0 %v2005
    %2105 = vmatprep.subr.mxu0 0.0
    %2106 = vmatpush1.msra.mxu0 %v2011
    %2107 = vmatprep.subr.mxu0 0.0
    %2108 = vmatpush1.msra.mxu0 %v2017
    %2109 = vmatprep.subr.mxu0 0.0
    %2110 = vmatpush1.msra.mxu0 %v2023
    %2111 = vmatprep.subr.mxu0 0.0
    %2112 = vmatpush1.msra.mxu0 %v2029
    %2113 = vmatprep.subr.mxu0 0.0
    %2114 = vmatpush1.msra.mxu0 %v2035
    %2115 = vmatprep.subr.mxu0 0.0
    %2116 = vmatpush1.msra.mxu0 %v2041
    %2117 = vmatprep.subr.mxu0 0.0
    %2118 = vmatpush1.msra.mxu0 %v2047
    %2119 = vmatprep.subr.mxu0 0.0
    %2120 = vmatpush1.msra.mxu0 %v2053
    %2121 = vmatprep.mubr.f32.mxu0 %v119
    %2122 = vmatmul.mubr.f32.gmra.mrb[0].mxu0 %v118
    %v2123 = vpop.f32.mrb[0].mxu0
    %v2124 = vadd.f32 %v1869, %v2123
    %v2125 = vpop.f32.mrb[0].mxu0
    %2126 = vmatprep.mubr.f32.mxu0 %v121
    %2127 = vmatmul.mubr.f32.gmra.mrb[0].mxu0 %v120
    %v2128 = vpop.f32.mrb[0].mxu0
    %v2129 = vadd.f32 %v1875, %v2128
    %v2130 = vpop.f32.mrb[0].mxu0
    %2131 = vmatprep.mubr.f32.mxu0 %v123
    %2132 = vmatmul.mubr.f32.gmra.mrb[0].mxu0 %v122
    %v2133 = vpop.f32.mrb[0].mxu0
    %v2134 = vadd.f32 %v1881, %v2133
    %v2135 = vpop.f32.mrb[0].mxu0
    %2136 = vmatprep.mubr.f32.mxu0 %v125
    %2137 = vmatmul.mubr.f32.gmra.mrb[0].mxu0 %v124
    %v2138 = vpop.f32.mrb[0].mxu0
    %v2139 = vadd.f32 %v1887, %v2138
    %v2140 = vpop.f32.mrb[0].mxu0
    %2141 = vmatprep.mubr.f32.mxu0 %v127
    %2142 = vmatmul.mubr.f32.gmra.mrb[0].mxu0 %v126
    %v2143 = vpop.f32.mrb[0].mxu0
    %v2144 = vadd.f32 %v1893, %v2143
    %v2145 = vpop.f32.mrb[0].mxu0
    %2146 = vmatprep.mubr.f32.mxu0 %v129
    %2147 = vmatmul.mubr.f32.gmra.mrb[0].mxu0 %v128
    %v2148 = vpop.f32.mrb[0].mxu0
    %v2149 = vadd.f32 %v1899, %v2148
    %v2150 = vpop.f32.mrb[0].mxu0
    %2151 = vmatprep.mubr.f32.mxu0 %v131
    %2152 = vmatmul.mubr.f32.gmra.mrb[0].mxu0 %v130
    %v2153 = vpop.f32.mrb[0].mxu0
    %v2154 = vadd.f32 %v1905, %v2153
    %v2155 = vpop.f32.mrb[0].mxu0
    %2156 = vmatprep.mubr.f32.mxu0 %v133
    %2157 = vmatmul.mubr.f32.gmra.mrb[0].mxu0 %v132
    %v2158 = vpop.f32.mrb[0].mxu0
    %v2159 = vadd.f32 %v1911, %v2158
    %v2160 = vpop.f32.mrb[0].mxu0
    %2161 = vmatprep.mubr.f32.mxu0 %v135
    %2162 = vmatmul.mubr.f32.gmra.mrb[0].mxu0 %v134
    %v2163 = vpop.f32.mrb[0].mxu0
    %v2164 = vadd.f32 %v1917, %v2163
    %v2165 = vpop.f32.mrb[0].mxu0
    %2166 = vmatprep.mubr.f32.mxu0 %v137
    %2167 = vmatmul.mubr.f32.gmra.mrb[0].mxu0 %v136
    %v2168 = vpop.f32.mrb[0].mxu0
    %v2169 = vadd.f32 %v1923, %v2168
    %v2170 = vpop.f32.mrb[0].mxu0
    %2171 = vmatprep.mubr.f32.mxu0 %v139
    %2172 = vmatmul.mubr.f32.gmra.mrb[0].mxu0 %v138
    %v2173 = vpop.f32.mrb[0].mxu0
    %v2174 = vadd.f32 %v1929, %v2173
    %v2175 = vpop.f32.mrb[0].mxu0
    %2176 = vmatprep.mubr.f32.mxu0 %v141
    %2177 = vmatmul.mubr.f32.gmra.mrb[0].mxu0 %v140
    %v2178 = vpop.f32.mrb[0].mxu0
    %v2179 = vadd.f32 %v1935, %v2178
    %v2180 = vpop.f32.mrb[0].mxu0
    %2181 = vmatprep.mubr.f32.mxu0 %v143
    %2182 = vmatmul.mubr.f32.gmra.mrb[0].mxu0 %v142
    %v2183 = vpop.f32.mrb[0].mxu0
    %v2184 = vadd.f32 %v1941, %v2183
    %v2185 = vpop.f32.mrb[0].mxu0
    %2186 = vmatprep.mubr.f32.mxu0 %v145
    %2187 = vmatmul.mubr.f32.gmra.mrb[0].mxu0 %v144
    %v2188 = vpop.f32.mrb[0].mxu0
    %v2189 = vadd.f32 %v1947, %v2188
    %v2190 = vpop.f32.mrb[0].mxu0
    %2191 = vmatprep.mubr.f32.mxu0 %v147
    %2192 = vmatmul.mubr.f32.gmra.mrb[0].mxu0 %v146
    %v2193 = vpop.f32.mrb[0].mxu0
    %v2194 = vadd.f32 %v1953, %v2193
    %v2195 = vpop.f32.mrb[0].mxu0
    %2196 = vmatprep.mubr.f32.mxu0 %v149
    %2197 = vmatmul.mubr.f32.gmra.mrb[0].mxu0 %v148
    %v2198 = vpop.f32.mrb[0].mxu0
    %v2199 = vadd.f32 %v1959, %v2198
    %v2200 = vpop.f32.mrb[0].mxu0
    %2201 = vmatprep.mubr.f32.mxu0 %v151
    %2202 = vmatmul.mubr.f32.gmra.mrb[0].mxu0 %v150
    %v2203 = vpop.f32.mrb[0].mxu0
    %v2204 = vadd.f32 %v1965, %v2203
    %v2205 = vpop.f32.mrb[0].mxu0
    %2206 = vmatprep.mubr.f32.mxu0 %v153
    %2207 = vmatmul.mubr.f32.gmra.mrb[0].mxu0 %v152
    %v2208 = vpop.f32.mrb[0].mxu0
    %v2209 = vadd.f32 %v1971, %v2208
    %v2210 = vpop.f32.mrb[0].mxu0
    %2211 = vmatprep.mubr.f32.mxu0 %v155
    %2212 = vmatmul.mubr.f32.gmra.mrb[0].mxu0 %v154
    %v2213 = vpop.f32.mrb[0].mxu0
    %v2214 = vadd.f32 %v1977, %v2213
    %v2215 = vpop.f32.mrb[0].mxu0
    %2216 = vmatprep.mubr.f32.mxu0 %v157
    %2217 = vmatmul.mubr.f32.gmra.mrb[0].mxu0 %v156
    %v2218 = vpop.f32.mrb[0].mxu0
    %v2219 = vadd.f32 %v1983, %v2218
    %v2220 = vpop.f32.mrb[0].mxu0
    %2221 = vmatprep.mubr.f32.mxu0 %v159
    %2222 = vmatmul.mubr.f32.gmra.mrb[0].mxu0 %v158
    %v2223 = vpop.f32.mrb[0].mxu0
    %v2224 = vadd.f32 %v1989, %v2223
    %v2225 = vpop.f32.mrb[0].mxu0
    %2226 = vmatprep.mubr.f32.mxu0 %v161
    %2227 = vmatmul.mubr.f32.gmra.mrb[0].mxu0 %v160
    %v2228 = vpop.f32.mrb[0].mxu0
    %v2229 = vadd.f32 %v1995, %v2228
    %v2230 = vpop.f32.mrb[0].mxu0
    %2231 = vmatprep.mubr.f32.mxu0 %v163
    %2232 = vmatmul.mubr.f32.gmra.mrb[0].mxu0 %v162
    %v2233 = vpop.f32.mrb[0].mxu0
    %v2234 = vadd.f32 %v2001, %v2233
    %v2235 = vpop.f32.mrb[0].mxu0
    %2236 = vmatprep.mubr.f32.mxu0 %v165
    %2237 = vmatmul.mubr.f32.gmra.mrb[0].mxu0 %v164
    %v2238 = vpop.f32.mrb[0].mxu0
    %v2239 = vadd.f32 %v2007, %v2238
    %v2240 = vpop.f32.mrb[0].mxu0
    %2241 = vmatprep.mubr.f32.mxu0 %v167
    %2242 = vmatmul.mubr.f32.gmra.mrb[0].mxu0 %v166
    %v2243 = vpop.f32.mrb[0].mxu0
    %v2244 = vadd.f32 %v2013, %v2243
    %v2245 = vpop.f32.mrb[0].mxu0
    %2246 = vmatprep.mubr.f32.mxu0 %v169
    %2247 = vmatmul.mubr.f32.gmra.mrb[0].mxu0 %v168
    %v2248 = vpop.f32.mrb[0].mxu0
    %v2249 = vadd.f32 %v2019, %v2248
    %v2250 = vpop.f32.mrb[0].mxu0
    %2251 = vmatprep.mubr.f32.mxu0 %v171
    %2252 = vmatmul.mubr.f32.gmra.mrb[0].mxu0 %v170
    %v2253 = vpop.f32.mrb[0].mxu0
    %v2254 = vadd.f32 %v2025, %v2253
    %v2255 = vpop.f32.mrb[0].mxu0
    %2256 = vmatprep.mubr.f32.mxu0 %v173
    %2257 = vmatmul.mubr.f32.gmra.mrb[0].mxu0 %v172
    %v2258 = vpop.f32.mrb[0].mxu0
    %v2259 = vadd.f32 %v2031, %v2258
    %v2260 = vpop.f32.mrb[0].mxu0
    %2261 = vmatprep.mubr.f32.mxu0 %v175
    %2262 = vmatmul.mubr.f32.gmra.mrb[0].mxu0 %v174
    %v2263 = vpop.f32.mrb[0].mxu0
    %v2264 = vadd.f32 %v2037, %v2263
    %v2265 = vpop.f32.mrb[0].mxu0
    %2266 = vmatprep.mubr.f32.mxu0 %v177
    %2267 = vmatmul.mubr.f32.gmra.mrb[0].mxu0 %v176
    %v2268 = vpop.f32.mrb[0].mxu0
    %v2269 = vadd.f32 %v2043, %v2268
    %v2270 = vpop.f32.mrb[0].mxu0
    %2271 = vmatprep.mubr.f32.mxu0 %v179
    %2272 = vmatmul.mubr.f32.gmra.mrb[0].mxu0 %v178
    %v2273 = vpop.f32.mrb[0].mxu0
    %v2274 = vadd.f32 %v2049, %v2273
    %v2275 = vpop.f32.mrb[0].mxu0
    %2276 = vmatprep.mubr.f32.mxu0 %v181
    %2277 = vmatmul.mubr.f32.gmra.mrb[0].mxu0 %v180
    %v2278 = vpop.f32.mrb[0].mxu0
    %v2279 = vadd.f32 %v2055, %v2278
    %v2280 = vpop.f32.mrb[0].mxu0
    %2281 = vdwg.mxu0
    %v2282 = vld [vmem:[%s7] sm:$0x1]
    %v2284 = vlaneseq
    %v2285 = vshrl.u32 %v2284, 7
    %v2286 = vsub.s32 0, %v2285
    %v2287 = vrot.slane %v2282, %v2286
    %v2289 = vadd.f32 %v2124, %v2287
    %v2290 = vadd.f32 %v2129, %v2287
    %v2291 = vadd.f32 %v2134, %v2287
    %v2292 = vadd.f32 %v2139, %v2287
    %v2293 = vadd.f32 %v2144, %v2287
    %v2294 = vadd.f32 %v2149, %v2287
    %v2295 = vadd.f32 %v2154, %v2287
    %v2296 = vadd.f32 %v2159, %v2287
    %v2297 = vadd.f32 %v2164, %v2287
    %v2298 = vadd.f32 %v2169, %v2287
    %v2299 = vadd.f32 %v2174, %v2287
    %v2300 = vadd.f32 %v2179, %v2287
    %v2301 = vadd.f32 %v2184, %v2287
    %v2302 = vadd.f32 %v2189, %v2287
    %v2303 = vadd.f32 %v2194, %v2287
    %v2304 = vadd.f32 %v2199, %v2287
    %v2305 = vadd.f32 %v2204, %v2287
    %v2306 = vadd.f32 %v2209, %v2287
    %v2307 = vadd.f32 %v2214, %v2287
    %v2308 = vadd.f32 %v2219, %v2287
    %v2309 = vadd.f32 %v2224, %v2287
    %v2310 = vadd.f32 %v2229, %v2287
    %v2311 = vadd.f32 %v2234, %v2287
    %v2312 = vadd.f32 %v2239, %v2287
    %v2313 = vadd.f32 %v2244, %v2287
    %v2314 = vadd.f32 %v2249, %v2287
    %v2315 = vadd.f32 %v2254, %v2287
    %v2316 = vadd.f32 %v2259, %v2287
    %v2317 = vadd.f32 %v2264, %v2287
    %v2318 = vadd.f32 %v2269, %v2287
    %v2319 = vadd.f32 %v2274, %v2287
    %v2320 = vadd.f32 %v2279, %v2287
    %v2321 = vmul.f32 %v2289, %v2289
    %v2322 = vmul.f32 %v2290, %v2290
    %v2323 = vmul.f32 %v2291, %v2291
    %v2324 = vmul.f32 %v2292, %v2292
    %v2325 = vmul.f32 %v2293, %v2293
    %v2326 = vmul.f32 %v2294, %v2294
    %v2327 = vmul.f32 %v2295, %v2295
    %v2328 = vmul.f32 %v2296, %v2296
    %v2329 = vmul.f32 %v2297, %v2297
    %v2330 = vmul.f32 %v2298, %v2298
    %v2331 = vmul.f32 %v2299, %v2299
    %v2332 = vmul.f32 %v2300, %v2300
    %v2333 = vmul.f32 %v2301, %v2301
    %v2334 = vmul.f32 %v2302, %v2302
    %v2335 = vmul.f32 %v2303, %v2303
    %v2336 = vmul.f32 %v2304, %v2304
    %v2337 = vmul.f32 %v2305, %v2305
    %v2338 = vmul.f32 %v2306, %v2306
    %v2339 = vmul.f32 %v2307, %v2307
    %v2340 = vmul.f32 %v2308, %v2308
    %v2341 = vmul.f32 %v2309, %v2309
    %v2342 = vmul.f32 %v2310, %v2310
    %v2343 = vmul.f32 %v2311, %v2311
    %v2344 = vmul.f32 %v2312, %v2312
    %v2345 = vmul.f32 %v2313, %v2313
    %v2346 = vmul.f32 %v2314, %v2314
    %v2347 = vmul.f32 %v2315, %v2315
    %v2348 = vmul.f32 %v2316, %v2316
    %v2349 = vmul.f32 %v2317, %v2317
    %v2350 = vmul.f32 %v2318, %v2318
    %v2351 = vmul.f32 %v2319, %v2319
    %v2352 = vmul.f32 %v2320, %v2320
    %2353 = vadd.xlane.f32.xlu0 %v2321
    %v2354 = vpop.xlane.xlu0 %2353
    %2355 = vadd.xlane.f32.xlu0 %v2322
    %v2356 = vpop.xlane.xlu0 %2355
    %2357 = vadd.xlane.f32.xlu0 %v2323
    %v2358 = vpop.xlane.xlu0 %2357
    %2359 = vadd.xlane.f32.xlu0 %v2324
    %v2360 = vpop.xlane.xlu0 %2359
    %2361 = vadd.xlane.f32.xlu0 %v2325
    %v2362 = vpop.xlane.xlu0 %2361
    %2363 = vadd.xlane.f32.xlu0 %v2326
    %v2364 = vpop.xlane.xlu0 %2363
    %2365 = vadd.xlane.f32.xlu0 %v2327
    %v2366 = vpop.xlane.xlu0 %2365
    %2367 = vadd.xlane.f32.xlu0 %v2328
    %v2368 = vpop.xlane.xlu0 %2367
    %2369 = vadd.xlane.f32.xlu0 %v2329
    %v2370 = vpop.xlane.xlu0 %2369
    %2371 = vadd.xlane.f32.xlu0 %v2330
    %v2372 = vpop.xlane.xlu0 %2371
    %2373 = vadd.xlane.f32.xlu0 %v2331
    %v2374 = vpop.xlane.xlu0 %2373
    %2375 = vadd.xlane.f32.xlu0 %v2332
    %v2376 = vpop.xlane.xlu0 %2375
    %2377 = vadd.xlane.f32.xlu0 %v2333
    %v2378 = vpop.xlane.xlu0 %2377
    %2379 = vadd.xlane.f32.xlu0 %v2334
    %v2380 = vpop.xlane.xlu0 %2379
    %2381 = vadd.xlane.f32.xlu0 %v2335
    %v2382 = vpop.xlane.xlu0 %2381
    %2383 = vadd.xlane.f32.xlu0 %v2336
    %v2384 = vpop.xlane.xlu0 %2383
    %2385 = vadd.xlane.f32.xlu0 %v2337
    %v2386 = vpop.xlane.xlu0 %2385
    %2387 = vadd.xlane.f32.xlu0 %v2338
    %v2388 = vpop.xlane.xlu0 %2387
    %2389 = vadd.xlane.f32.xlu0 %v2339
    %v2390 = vpop.xlane.xlu0 %2389
    %2391 = vadd.xlane.f32.xlu0 %v2340
    %v2392 = vpop.xlane.xlu0 %2391
    %2393 = vadd.xlane.f32.xlu0 %v2341
    %v2394 = vpop.xlane.xlu0 %2393
    %2395 = vadd.xlane.f32.xlu0 %v2342
    %v2396 = vpop.xlane.xlu0 %2395
    %2397 = vadd.xlane.f32.xlu0 %v2343
    %v2398 = vpop.xlane.xlu0 %2397
    %2399 = vadd.xlane.f32.xlu0 %v2344
    %v2400 = vpop.xlane.xlu0 %2399
    %2401 = vadd.xlane.f32.xlu0 %v2345
    %v2402 = vpop.xlane.xlu0 %2401
    %2403 = vadd.xlane.f32.xlu0 %v2346
    %v2404 = vpop.xlane.xlu0 %2403
    %2405 = vadd.xlane.f32.xlu0 %v2347
    %v2406 = vpop.xlane.xlu0 %2405
    %2407 = vadd.xlane.f32.xlu0 %v2348
    %v2408 = vpop.xlane.xlu0 %2407
    %2409 = vadd.xlane.f32.xlu0 %v2349
    %v2410 = vpop.xlane.xlu0 %2409
    %2411 = vadd.xlane.f32.xlu0 %v2350
    %v2412 = vpop.xlane.xlu0 %2411
    %2413 = vadd.xlane.f32.xlu0 %v2351
    %v2414 = vpop.xlane.xlu0 %2413
    %2415 = vadd.xlane.f32.xlu0 %v2352
    %v2416 = vpop.xlane.xlu0 %2415
    %v2417 = vmax.f32 %v2354, 1e-24
    %v2418 = vmax.f32 %v2356, 1e-24
    %v2419 = vmax.f32 %v2358, 1e-24
    %v2420 = vmax.f32 %v2360, 1e-24
    %v2421 = vmax.f32 %v2362, 1e-24
    %v2422 = vmax.f32 %v2364, 1e-24
    %v2423 = vmax.f32 %v2366, 1e-24
    %v2424 = vmax.f32 %v2368, 1e-24
    %v2425 = vmax.f32 %v2370, 1e-24
    %v2426 = vmax.f32 %v2372, 1e-24
    %v2427 = vmax.f32 %v2374, 1e-24
    %v2428 = vmax.f32 %v2376, 1e-24
    %v2429 = vmax.f32 %v2378, 1e-24
    %v2430 = vmax.f32 %v2380, 1e-24
    %v2431 = vmax.f32 %v2382, 1e-24
    %v2432 = vmax.f32 %v2384, 1e-24
    %v2433 = vmax.f32 %v2386, 1e-24
    %v2434 = vmax.f32 %v2388, 1e-24
    %v2435 = vmax.f32 %v2390, 1e-24
    %v2436 = vmax.f32 %v2392, 1e-24
    %v2437 = vmax.f32 %v2394, 1e-24
    %v2438 = vmax.f32 %v2396, 1e-24
    %v2439 = vmax.f32 %v2398, 1e-24
    %v2440 = vmax.f32 %v2400, 1e-24
    %v2441 = vmax.f32 %v2402, 1e-24
    %v2442 = vmax.f32 %v2404, 1e-24
    %v2443 = vmax.f32 %v2406, 1e-24
    %v2444 = vmax.f32 %v2408, 1e-24
    %v2445 = vmax.f32 %v2410, 1e-24
    %v2446 = vmax.f32 %v2412, 1e-24
    %v2447 = vmax.f32 %v2414, 1e-24
    %v2448 = vmax.f32 %v2416, 1e-24
    %v2449 = vrsqrt.pop %v2417
    %v2450 = vrsqrt.pop %v2418
    %v2451 = vrsqrt.pop %v2419
    %v2452 = vrsqrt.pop %v2420
    %v2453 = vrsqrt.pop %v2421
    %v2454 = vrsqrt.pop %v2422
    %v2455 = vrsqrt.pop %v2423
    %v2456 = vrsqrt.pop %v2424
    %v2457 = vrsqrt.pop %v2425
    %v2458 = vrsqrt.pop %v2426
    %v2459 = vrsqrt.pop %v2427
    %v2460 = vrsqrt.pop %v2428
    %v2461 = vrsqrt.pop %v2429
    %v2462 = vrsqrt.pop %v2430
    %v2463 = vrsqrt.pop %v2431
    %v2464 = vrsqrt.pop %v2432
    %v2465 = vrsqrt.pop %v2433
    %v2466 = vrsqrt.pop %v2434
    %v2467 = vrsqrt.pop %v2435
    %v2468 = vrsqrt.pop %v2436
    %v2469 = vrsqrt.pop %v2437
    %v2470 = vrsqrt.pop %v2438
    %v2471 = vrsqrt.pop %v2439
    %v2472 = vrsqrt.pop %v2440
    %v2473 = vrsqrt.pop %v2441
    %v2474 = vrsqrt.pop %v2442
    %v2475 = vrsqrt.pop %v2443
    %v2476 = vrsqrt.pop %v2444
    %v2477 = vrsqrt.pop %v2445
    %v2478 = vrsqrt.pop %v2446
    %v2479 = vrsqrt.pop %v2447
    %v2480 = vrsqrt.pop %v2448
    %v2481 = vmul.f32 %v2289, %v2449
    %v2482 = vmul.f32 %v2290, %v2450
    %v2483 = vmul.f32 %v2291, %v2451
    %v2484 = vmul.f32 %v2292, %v2452
    %v2485 = vmul.f32 %v2293, %v2453
    %v2486 = vmul.f32 %v2294, %v2454
    %v2487 = vmul.f32 %v2295, %v2455
    %v2488 = vmul.f32 %v2296, %v2456
    %v2489 = vmul.f32 %v2297, %v2457
    %v2490 = vmul.f32 %v2298, %v2458
    %v2491 = vmul.f32 %v2299, %v2459
    %v2492 = vmul.f32 %v2300, %v2460
    %v2493 = vmul.f32 %v2301, %v2461
    %v2494 = vmul.f32 %v2302, %v2462
    %v2495 = vmul.f32 %v2303, %v2463
    %v2496 = vmul.f32 %v2304, %v2464
    %v2497 = vmul.f32 %v2305, %v2465
    %v2498 = vmul.f32 %v2306, %v2466
    %v2499 = vmul.f32 %v2307, %v2467
    %v2500 = vmul.f32 %v2308, %v2468
    %v2501 = vmul.f32 %v2309, %v2469
    %v2502 = vmul.f32 %v2310, %v2470
    %v2503 = vmul.f32 %v2311, %v2471
    %v2504 = vmul.f32 %v2312, %v2472
    %v2505 = vmul.f32 %v2313, %v2473
    %v2506 = vmul.f32 %v2314, %v2474
    %v2507 = vmul.f32 %v2315, %v2475
    %v2508 = vmul.f32 %v2316, %v2476
    %v2509 = vmul.f32 %v2317, %v2477
    %v2510 = vmul.f32 %v2318, %v2478
    %v2511 = vmul.f32 %v2319, %v2479
    %v2512 = vmul.f32 %v2320, %v2480
    %v2513 = vmax.f32 %v2481, 0.0
    %v2514 = vmax.f32 %v2482, 0.0
    %v2515 = vmax.f32 %v2483, 0.0
    %v2516 = vmax.f32 %v2484, 0.0
    %v2517 = vmax.f32 %v2485, 0.0
    %v2518 = vmax.f32 %v2486, 0.0
    %v2519 = vmax.f32 %v2487, 0.0
    %v2520 = vmax.f32 %v2488, 0.0
    %v2521 = vmax.f32 %v2489, 0.0
    %v2522 = vmax.f32 %v2490, 0.0
    %v2523 = vmax.f32 %v2491, 0.0
    %v2524 = vmax.f32 %v2492, 0.0
    %v2525 = vmax.f32 %v2493, 0.0
    %v2526 = vmax.f32 %v2494, 0.0
    %v2527 = vmax.f32 %v2495, 0.0
    %v2528 = vmax.f32 %v2496, 0.0
    %v2529 = vmax.f32 %v2497, 0.0
    %v2530 = vmax.f32 %v2498, 0.0
    %v2531 = vmax.f32 %v2499, 0.0
    %v2532 = vmax.f32 %v2500, 0.0
    %v2533 = vmax.f32 %v2501, 0.0
    %v2534 = vmax.f32 %v2502, 0.0
    %v2535 = vmax.f32 %v2503, 0.0
    %v2536 = vmax.f32 %v2504, 0.0
    %v2537 = vmax.f32 %v2505, 0.0
    %v2538 = vmax.f32 %v2506, 0.0
    %v2539 = vmax.f32 %v2507, 0.0
    %v2540 = vmax.f32 %v2508, 0.0
    %v2541 = vmax.f32 %v2509, 0.0
    %v2542 = vmax.f32 %v2510, 0.0
    %v2543 = vmax.f32 %v2511, 0.0
    %v2544 = vmax.f32 %v2512, 0.0
    %v2545 = vld [vmem:[#allocation11] sm:$0xff]
    %v2546 = vld [vmem:[#allocation11 + $0x8] sm:$0xff]
    %v2547 = vld [vmem:[#allocation11 + $0x10] sm:$0xff]
    %v2548 = vld [vmem:[#allocation11 + $0x18] sm:$0xff]
    %v2549 = vld [vmem:[#allocation11 + $0x20] sm:$0xff]
    %v2550 = vld [vmem:[#allocation11 + $0x28] sm:$0xff]
    %v2551 = vld [vmem:[#allocation11 + $0x30] sm:$0xff]
    %v2552 = vld [vmem:[#allocation11 + $0x38] sm:$0xff]
    %v2553 = vld [vmem:[#allocation11 + $0x40] sm:$0xff]
    %v2554 = vld [vmem:[#allocation11 + $0x48] sm:$0xff]
    %v2555 = vld [vmem:[#allocation11 + $0x50] sm:$0xff]
    %v2556 = vld [vmem:[#allocation11 + $0x58] sm:$0xff]
    %v2557 = vld [vmem:[#allocation11 + $0x60] sm:$0xff]
    %v2558 = vld [vmem:[#allocation11 + $0x68] sm:$0xff]
    %v2559 = vld [vmem:[#allocation11 + $0x70] sm:$0xff]
    %v2560 = vld [vmem:[#allocation11 + $0x78] sm:$0xff]
    %v2561 = vld [vmem:[#allocation11 + $0x80] sm:$0xff]
    %v2562 = vld [vmem:[#allocation11 + $0x88] sm:$0xff]
    %v2563 = vld [vmem:[#allocation11 + $0x90] sm:$0xff]
    %v2564 = vld [vmem:[#allocation11 + $0x98] sm:$0xff]
    %v2565 = vld [vmem:[#allocation11 + $0xa0] sm:$0xff]
    %v2566 = vld [vmem:[#allocation11 + $0xa8] sm:$0xff]
    %v2567 = vld [vmem:[#allocation11 + $0xb0] sm:$0xff]
    %v2568 = vld [vmem:[#allocation11 + $0xb8] sm:$0xff]
    %v2569 = vld [vmem:[#allocation11 + $0xc0] sm:$0xff]
    %v2570 = vld [vmem:[#allocation11 + $0xc8] sm:$0xff]
    %v2571 = vld [vmem:[#allocation11 + $0xd0] sm:$0xff]
    %v2572 = vld [vmem:[#allocation11 + $0xd8] sm:$0xff]
    %v2573 = vld [vmem:[#allocation11 + $0xe0] sm:$0xff]
    %v2574 = vld [vmem:[#allocation11 + $0xe8] sm:$0xff]
    %v2575 = vld [vmem:[#allocation11 + $0xf0] sm:$0xff]
    %v2576 = vld [vmem:[#allocation11 + $0xf8] sm:$0xff]
    %2577 = vmatprep.subr.mxu0 %v2546
    %2578 = vmatpush1.msra.mxu0 %v2545
    %2579 = vmatprep.subr.mxu0 %v2548
    %2580 = vmatpush1.msra.mxu0 %v2547
    %2581 = vmatprep.subr.mxu0 %v2550
    %2582 = vmatpush1.msra.mxu0 %v2549
    %2583 = vmatprep.subr.mxu0 %v2552
    %2584 = vmatpush1.msra.mxu0 %v2551
    %2585 = vmatprep.subr.mxu0 %v2554
    %2586 = vmatpush1.msra.mxu0 %v2553
    %2587 = vmatprep.subr.mxu0 %v2556
    %2588 = vmatpush1.msra.mxu0 %v2555
    %2589 = vmatprep.subr.mxu0 %v2558
    %2590 = vmatpush1.msra.mxu0 %v2557
    %2591 = vmatprep.subr.mxu0 %v2560
    %2592 = vmatpush1.msra.mxu0 %v2559
    %2593 = vmatprep.subr.mxu0 %v2562
    %2594 = vmatpush1.msra.mxu0 %v2561
    %2595 = vmatprep.subr.mxu0 %v2564
    %2596 = vmatpush1.msra.mxu0 %v2563
    %2597 = vmatprep.subr.mxu0 %v2566
    %2598 = vmatpush1.msra.mxu0 %v2565
    %2599 = vmatprep.subr.mxu0 %v2568
    %2600 = vmatpush1.msra.mxu0 %v2567
    %2601 = vmatprep.subr.mxu0 %v2570
    %2602 = vmatpush1.msra.mxu0 %v2569
    %2603 = vmatprep.subr.mxu0 %v2572
    %2604 = vmatpush1.msra.mxu0 %v2571
    %2605 = vmatprep.subr.mxu0 %v2574
    %2606 = vmatpush1.msra.mxu0 %v2573
    %2607 = vmatprep.subr.mxu0 %v2576
    %2608 = vmatpush1.msra.mxu0 %v2575
    %2609 = vmatprep.subr.mxu0 0.0
    %2610 = vmatpush1.msra.mxu0 0.0
    %2611 = vmatprep.subr.mxu0 0.0
    %2612 = vmatpush1.msra.mxu0 0.0
    %2613 = vmatprep.subr.mxu0 0.0
    %2614 = vmatpush1.msra.mxu0 0.0
    %2615 = vmatprep.subr.mxu0 0.0
    %2616 = vmatpush1.msra.mxu0 0.0
    %2617 = vmatprep.subr.mxu0 0.0
    %2618 = vmatpush1.msra.mxu0 0.0
    %2619 = vmatprep.subr.mxu0 0.0
    %2620 = vmatpush1.msra.mxu0 0.0
    %2621 = vmatprep.subr.mxu0 0.0
    %2622 = vmatpush1.msra.mxu0 0.0
    %2623 = vmatprep.subr.mxu0 0.0
    %2624 = vmatpush1.msra.mxu0 0.0
    %2625 = vmatprep.subr.mxu0 0.0
    %2626 = vmatpush1.msra.mxu0 0.0
    %2627 = vmatprep.subr.mxu0 0.0
    %2628 = vmatpush1.msra.mxu0 0.0
    %2629 = vmatprep.subr.mxu0 0.0
    %2630 = vmatpush1.msra.mxu0 0.0
    %2631 = vmatprep.subr.mxu0 0.0
    %2632 = vmatpush1.msra.mxu0 0.0
    %2633 = vmatprep.subr.mxu0 0.0
    %2634 = vmatpush1.msra.mxu0 0.0
    %2635 = vmatprep.subr.mxu0 0.0
    %2636 = vmatpush1.msra.mxu0 0.0
    %2637 = vmatprep.subr.mxu0 0.0
    %2638 = vmatpush1.msra.mxu0 0.0
    %2639 = vmatprep.subr.mxu0 0.0
    %2640 = vmatpush1.msra.mxu0 0.0
    %2641 = vmatprep.mubr.f32.mxu0 0.0
    %2642 = vmatmul.mubr.f32.gmra.mrb[0].mxu0 %v2513
    %v2643 = vpop.f32.mrb[0].mxu0
    %v2644 = vadd.f32 0.0, %v2643
    %v2645 = vpop.f32.mrb[0].mxu0
    %v2646 = vadd.f32 0.0, %v2645
    %2647 = vmatprep.mubr.f32.mxu0 0.0
    %2648 = vmatmul.mubr.f32.gmra.mrb[0].mxu0 %v2514
    %v2649 = vpop.f32.mrb[0].mxu0
    %v2650 = vadd.f32 0.0, %v2649
    %v2651 = vpop.f32.mrb[0].mxu0
    %v2652 = vadd.f32 0.0, %v2651
    %2653 = vmatprep.mubr.f32.mxu0 0.0
    %2654 = vmatmul.mubr.f32.gmra.mrb[0].mxu0 %v2515
    %v2655 = vpop.f32.mrb[0].mxu0
    %v2656 = vadd.f32 0.0, %v2655
    %v2657 = vpop.f32.mrb[0].mxu0
    %v2658 = vadd.f32 0.0, %v2657
    %2659 = vmatprep.mubr.f32.mxu0 0.0
    %2660 = vmatmul.mubr.f32.gmra.mrb[0].mxu0 %v2516
    %v2661 = vpop.f32.mrb[0].mxu0
    %v2662 = vadd.f32 0.0, %v2661
    %v2663 = vpop.f32.mrb[0].mxu0
    %v2664 = vadd.f32 0.0, %v2663
    %2665 = vmatprep.mubr.f32.mxu0 0.0
    %2666 = vmatmul.mubr.f32.gmra.mrb[0].mxu0 %v2517
    %v2667 = vpop.f32.mrb[0].mxu0
    %v2668 = vadd.f32 0.0, %v2667
    %v2669 = vpop.f32.mrb[0].mxu0
    %v2670 = vadd.f32 0.0, %v2669
    %2671 = vmatprep.mubr.f32.mxu0 0.0
    %2672 = vmatmul.mubr.f32.gmra.mrb[0].mxu0 %v2518
    %v2673 = vpop.f32.mrb[0].mxu0
    %v2674 = vadd.f32 0.0, %v2673
    %v2675 = vpop.f32.mrb[0].mxu0
    %v2676 = vadd.f32 0.0, %v2675
    %2677 = vmatprep.mubr.f32.mxu0 0.0
    %2678 = vmatmul.mubr.f32.gmra.mrb[0].mxu0 %v2519
    %v2679 = vpop.f32.mrb[0].mxu0
    %v2680 = vadd.f32 0.0, %v2679
    %v2681 = vpop.f32.mrb[0].mxu0
    %v2682 = vadd.f32 0.0, %v2681
    %2683 = vmatprep.mubr.f32.mxu0 0.0
    %2684 = vmatmul.mubr.f32.gmra.mrb[0].mxu0 %v2520
    %v2685 = vpop.f32.mrb[0].mxu0
    %v2686 = vadd.f32 0.0, %v2685
    %v2687 = vpop.f32.mrb[0].mxu0
    %v2688 = vadd.f32 0.0, %v2687
    %2689 = vmatprep.mubr.f32.mxu0 0.0
    %2690 = vmatmul.mubr.f32.gmra.mrb[0].mxu0 %v2521
    %v2691 = vpop.f32.mrb[0].mxu0
    %v2692 = vadd.f32 0.0, %v2691
    %v2693 = vpop.f32.mrb[0].mxu0
    %v2694 = vadd.f32 0.0, %v2693
    %2695 = vmatprep.mubr.f32.mxu0 0.0
    %2696 = vmatmul.mubr.f32.gmra.mrb[0].mxu0 %v2522
    %v2697 = vpop.f32.mrb[0].mxu0
    %v2698 = vadd.f32 0.0, %v2697
    %v2699 = vpop.f32.mrb[0].mxu0
    %v2700 = vadd.f32 0.0, %v2699
    %2701 = vmatprep.mubr.f32.mxu0 0.0
    %2702 = vmatmul.mubr.f32.gmra.mrb[0].mxu0 %v2523
    %v2703 = vpop.f32.mrb[0].mxu0
    %v2704 = vadd.f32 0.0, %v2703
    %v2705 = vpop.f32.mrb[0].mxu0
    %v2706 = vadd.f32 0.0, %v2705
    %2707 = vmatprep.mubr.f32.mxu0 0.0
    %2708 = vmatmul.mubr.f32.gmra.mrb[0].mxu0 %v2524
    %v2709 = vpop.f32.mrb[0].mxu0
    %v2710 = vadd.f32 0.0, %v2709
    %v2711 = vpop.f32.mrb[0].mxu0
    %v2712 = vadd.f32 0.0, %v2711
    %2713 = vmatprep.mubr.f32.mxu0 0.0
    %2714 = vmatmul.mubr.f32.gmra.mrb[0].mxu0 %v2525
    %v2715 = vpop.f32.mrb[0].mxu0
    %v2716 = vadd.f32 0.0, %v2715
    %v2717 = vpop.f32.mrb[0].mxu0
    %v2718 = vadd.f32 0.0, %v2717
    %2719 = vmatprep.mubr.f32.mxu0 0.0
    %2720 = vmatmul.mubr.f32.gmra.mrb[0].mxu0 %v2526
    %v2721 = vpop.f32.mrb[0].mxu0
    %v2722 = vadd.f32 0.0, %v2721
    %v2723 = vpop.f32.mrb[0].mxu0
    %v2724 = vadd.f32 0.0, %v2723
    %2725 = vmatprep.mubr.f32.mxu0 0.0
    %2726 = vmatmul.mubr.f32.gmra.mrb[0].mxu0 %v2527
    %v2727 = vpop.f32.mrb[0].mxu0
    %v2728 = vadd.f32 0.0, %v2727
    %v2729 = vpop.f32.mrb[0].mxu0
    %v2730 = vadd.f32 0.0, %v2729
    %2731 = vmatprep.mubr.f32.mxu0 0.0
    %2732 = vmatmul.mubr.f32.gmra.mrb[0].mxu0 %v2528
    %v2733 = vpop.f32.mrb[0].mxu0
    %v2734 = vadd.f32 0.0, %v2733
    %v2735 = vpop.f32.mrb[0].mxu0
    %v2736 = vadd.f32 0.0, %v2735
    %2737 = vmatprep.mubr.f32.mxu0 0.0
    %2738 = vmatmul.mubr.f32.gmra.mrb[0].mxu0 %v2529
    %v2739 = vpop.f32.mrb[0].mxu0
    %v2740 = vadd.f32 0.0, %v2739
    %v2741 = vpop.f32.mrb[0].mxu0
    %v2742 = vadd.f32 0.0, %v2741
    %2743 = vmatprep.mubr.f32.mxu0 0.0
    %2744 = vmatmul.mubr.f32.gmra.mrb[0].mxu0 %v2530
    %v2745 = vpop.f32.mrb[0].mxu0
    %v2746 = vadd.f32 0.0, %v2745
    %v2747 = vpop.f32.mrb[0].mxu0
    %v2748 = vadd.f32 0.0, %v2747
    %2749 = vmatprep.mubr.f32.mxu0 0.0
    %2750 = vmatmul.mubr.f32.gmra.mrb[0].mxu0 %v2531
    %v2751 = vpop.f32.mrb[0].mxu0
    %v2752 = vadd.f32 0.0, %v2751
    %v2753 = vpop.f32.mrb[0].mxu0
    %v2754 = vadd.f32 0.0, %v2753
    %2755 = vmatprep.mubr.f32.mxu0 0.0
    %2756 = vmatmul.mubr.f32.gmra.mrb[0].mxu0 %v2532
    %v2757 = vpop.f32.mrb[0].mxu0
    %v2758 = vadd.f32 0.0, %v2757
    %v2759 = vpop.f32.mrb[0].mxu0
    %v2760 = vadd.f32 0.0, %v2759
    %2761 = vmatprep.mubr.f32.mxu0 0.0
    %2762 = vmatmul.mubr.f32.gmra.mrb[0].mxu0 %v2533
    %v2763 = vpop.f32.mrb[0].mxu0
    %v2764 = vadd.f32 0.0, %v2763
    %v2765 = vpop.f32.mrb[0].mxu0
    %v2766 = vadd.f32 0.0, %v2765
    %2767 = vmatprep.mubr.f32.mxu0 0.0
    %2768 = vmatmul.mubr.f32.gmra.mrb[0].mxu0 %v2534
    %v2769 = vpop.f32.mrb[0].mxu0
    %v2770 = vadd.f32 0.0, %v2769
    %v2771 = vpop.f32.mrb[0].mxu0
    %v2772 = vadd.f32 0.0, %v2771
    %2773 = vmatprep.mubr.f32.mxu0 0.0
    %2774 = vmatmul.mubr.f32.gmra.mrb[0].mxu0 %v2535
    %v2775 = vpop.f32.mrb[0].mxu0
    %v2776 = vadd.f32 0.0, %v2775
    %v2777 = vpop.f32.mrb[0].mxu0
    %v2778 = vadd.f32 0.0, %v2777
    %2779 = vmatprep.mubr.f32.mxu0 0.0
    %2780 = vmatmul.mubr.f32.gmra.mrb[0].mxu0 %v2536
    %v2781 = vpop.f32.mrb[0].mxu0
    %v2782 = vadd.f32 0.0, %v2781
    %v2783 = vpop.f32.mrb[0].mxu0
    %v2784 = vadd.f32 0.0, %v2783
    %2785 = vmatprep.mubr.f32.mxu0 0.0
    %2786 = vmatmul.mubr.f32.gmra.mrb[0].mxu0 %v2537
    %v2787 = vpop.f32.mrb[0].mxu0
    %v2788 = vadd.f32 0.0, %v2787
    %v2789 = vpop.f32.mrb[0].mxu0
    %v2790 = vadd.f32 0.0, %v2789
    %2791 = vmatprep.mubr.f32.mxu0 0.0
    %2792 = vmatmul.mubr.f32.gmra.mrb[0].mxu0 %v2538
    %v2793 = vpop.f32.mrb[0].mxu0
    %v2794 = vadd.f32 0.0, %v2793
    %v2795 = vpop.f32.mrb[0].mxu0
    %v2796 = vadd.f32 0.0, %v2795
    %2797 = vmatprep.mubr.f32.mxu0 0.0
    %2798 = vmatmul.mubr.f32.gmra.mrb[0].mxu0 %v2539
    %v2799 = vpop.f32.mrb[0].mxu0
    %v2800 = vadd.f32 0.0, %v2799
    %v2801 = vpop.f32.mrb[0].mxu0
    %v2802 = vadd.f32 0.0, %v2801
    %2803 = vmatprep.mubr.f32.mxu0 0.0
    %2804 = vmatmul.mubr.f32.gmra.mrb[0].mxu0 %v2540
    %v2805 = vpop.f32.mrb[0].mxu0
    %v2806 = vadd.f32 0.0, %v2805
    %v2807 = vpop.f32.mrb[0].mxu0
    %v2808 = vadd.f32 0.0, %v2807
    %2809 = vmatprep.mubr.f32.mxu0 0.0
    %2810 = vmatmul.mubr.f32.gmra.mrb[0].mxu0 %v2541
    %v2811 = vpop.f32.mrb[0].mxu0
    %v2812 = vadd.f32 0.0, %v2811
    %v2813 = vpop.f32.mrb[0].mxu0
    %v2814 = vadd.f32 0.0, %v2813
    %2815 = vmatprep.mubr.f32.mxu0 0.0
    %2816 = vmatmul.mubr.f32.gmra.mrb[0].mxu0 %v2542
    %v2817 = vpop.f32.mrb[0].mxu0
    %v2818 = vadd.f32 0.0, %v2817
    %v2819 = vpop.f32.mrb[0].mxu0
    %v2820 = vadd.f32 0.0, %v2819
    %2821 = vmatprep.mubr.f32.mxu0 0.0
    %2822 = vmatmul.mubr.f32.gmra.mrb[0].mxu0 %v2543
    %v2823 = vpop.f32.mrb[0].mxu0
    %v2824 = vadd.f32 0.0, %v2823
    %v2825 = vpop.f32.mrb[0].mxu0
    %v2826 = vadd.f32 0.0, %v2825
    %2827 = vmatprep.mubr.f32.mxu0 0.0
    %2828 = vmatmul.mubr.f32.gmra.mrb[0].mxu0 %v2544
    %v2829 = vpop.f32.mrb[0].mxu0
    %v2830 = vadd.f32 0.0, %v2829
    %v2831 = vpop.f32.mrb[0].mxu0
    %v2832 = vadd.f32 0.0, %v2831
    %2833 = vdwg.mxu0
    %2834 = vmatprep.subr.mxu0 0.0
    %2835 = vmatpush1.msra.mxu0 %v2644
    %2836 = vmatprep.subr.mxu0 0.0
    %2837 = vmatpush1.msra.mxu0 %v2650
    %2838 = vmatprep.subr.mxu0 0.0
    %2839 = vmatpush1.msra.mxu0 %v2656
    %2840 = vmatprep.subr.mxu0 0.0
    %2841 = vmatpush1.msra.mxu0 %v2662
    %2842 = vmatprep.subr.mxu0 0.0
    %2843 = vmatpush1.msra.mxu0 %v2668
    %2844 = vmatprep.subr.mxu0 0.0
    %2845 = vmatpush1.msra.mxu0 %v2674
    %2846 = vmatprep.subr.mxu0 0.0
    %2847 = vmatpush1.msra.mxu0 %v2680
    %2848 = vmatprep.subr.mxu0 0.0
    %2849 = vmatpush1.msra.mxu0 %v2686
    %2850 = vmatprep.subr.mxu0 0.0
    %2851 = vmatpush1.msra.mxu0 %v2692
    %2852 = vmatprep.subr.mxu0 0.0
    %2853 = vmatpush1.msra.mxu0 %v2698
    %2854 = vmatprep.subr.mxu0 0.0
    %2855 = vmatpush1.msra.mxu0 %v2704
    %2856 = vmatprep.subr.mxu0 0.0
    %2857 = vmatpush1.msra.mxu0 %v2710
    %2858 = vmatprep.subr.mxu0 0.0
    %2859 = vmatpush1.msra.mxu0 %v2716
    %2860 = vmatprep.subr.mxu0 0.0
    %2861 = vmatpush1.msra.mxu0 %v2722
    %2862 = vmatprep.subr.mxu0 0.0
    %2863 = vmatpush1.msra.mxu0 %v2728
    %2864 = vmatprep.subr.mxu0 0.0
    %2865 = vmatpush1.msra.mxu0 %v2734
    %2866 = vmatprep.subr.mxu0 0.0
    %2867 = vmatpush1.msra.mxu0 %v2740
    %2868 = vmatprep.subr.mxu0 0.0
    %2869 = vmatpush1.msra.mxu0 %v2746
    %2870 = vmatprep.subr.mxu0 0.0
    %2871 = vmatpush1.msra.mxu0 %v2752
    %2872 = vmatprep.subr.mxu0 0.0
    %2873 = vmatpush1.msra.mxu0 %v2758
    %2874 = vmatprep.subr.mxu0 0.0
    %2875 = vmatpush1.msra.mxu0 %v2764
    %2876 = vmatprep.subr.mxu0 0.0
    %2877 = vmatpush1.msra.mxu0 %v2770
    %2878 = vmatprep.subr.mxu0 0.0
    %2879 = vmatpush1.msra.mxu0 %v2776
    %2880 = vmatprep.subr.mxu0 0.0
    %2881 = vmatpush1.msra.mxu0 %v2782
    %2882 = vmatprep.subr.mxu0 0.0
    %2883 = vmatpush1.msra.mxu0 %v2788
    %2884 = vmatprep.subr.mxu0 0.0
    %2885 = vmatpush1.msra.mxu0 %v2794
    %2886 = vmatprep.subr.mxu0 0.0
    %2887 = vmatpush1.msra.mxu0 %v2800
    %2888 = vmatprep.subr.mxu0 0.0
    %2889 = vmatpush1.msra.mxu0 %v2806
    %2890 = vmatprep.subr.mxu0 0.0
    %2891 = vmatpush1.msra.mxu0 %v2812
    %2892 = vmatprep.subr.mxu0 0.0
    %2893 = vmatpush1.msra.mxu0 %v2818
    %2894 = vmatprep.subr.mxu0 0.0
    %2895 = vmatpush1.msra.mxu0 %v2824
    %2896 = vmatprep.subr.mxu0 0.0
    %2897 = vmatpush1.msra.mxu0 %v2830
    %2898 = vmatprep.mubr.f32.mxu0 %v119
    %2899 = vmatmul.mubr.f32.gmra.mrb[0].mxu0 %v118
    %v2900 = vpop.f32.mrb[0].mxu0
    %v2901 = vadd.f32 %v2646, %v2900
    %v2902 = vpop.f32.mrb[0].mxu0
    %2903 = vmatprep.mubr.f32.mxu0 %v121
    %2904 = vmatmul.mubr.f32.gmra.mrb[0].mxu0 %v120
    %v2905 = vpop.f32.mrb[0].mxu0
    %v2906 = vadd.f32 %v2652, %v2905
    %v2907 = vpop.f32.mrb[0].mxu0
    %2908 = vmatprep.mubr.f32.mxu0 %v123
    %2909 = vmatmul.mubr.f32.gmra.mrb[0].mxu0 %v122
    %v2910 = vpop.f32.mrb[0].mxu0
    %v2911 = vadd.f32 %v2658, %v2910
    %v2912 = vpop.f32.mrb[0].mxu0
    %2913 = vmatprep.mubr.f32.mxu0 %v125
    %2914 = vmatmul.mubr.f32.gmra.mrb[0].mxu0 %v124
    %v2915 = vpop.f32.mrb[0].mxu0
    %v2916 = vadd.f32 %v2664, %v2915
    %v2917 = vpop.f32.mrb[0].mxu0
    %2918 = vmatprep.mubr.f32.mxu0 %v127
    %2919 = vmatmul.mubr.f32.gmra.mrb[0].mxu0 %v126
    %v2920 = vpop.f32.mrb[0].mxu0
    %v2921 = vadd.f32 %v2670, %v2920
    %v2922 = vpop.f32.mrb[0].mxu0
    %2923 = vmatprep.mubr.f32.mxu0 %v129
    %2924 = vmatmul.mubr.f32.gmra.mrb[0].mxu0 %v128
    %v2925 = vpop.f32.mrb[0].mxu0
    %v2926 = vadd.f32 %v2676, %v2925
    %v2927 = vpop.f32.mrb[0].mxu0
    %2928 = vmatprep.mubr.f32.mxu0 %v131
    %2929 = vmatmul.mubr.f32.gmra.mrb[0].mxu0 %v130
    %v2930 = vpop.f32.mrb[0].mxu0
    %v2931 = vadd.f32 %v2682, %v2930
    %v2932 = vpop.f32.mrb[0].mxu0
    %2933 = vmatprep.mubr.f32.mxu0 %v133
    %2934 = vmatmul.mubr.f32.gmra.mrb[0].mxu0 %v132
    %v2935 = vpop.f32.mrb[0].mxu0
    %v2936 = vadd.f32 %v2688, %v2935
    %v2937 = vpop.f32.mrb[0].mxu0
    %2938 = vmatprep.mubr.f32.mxu0 %v135
    %2939 = vmatmul.mubr.f32.gmra.mrb[0].mxu0 %v134
    %v2940 = vpop.f32.mrb[0].mxu0
    %v2941 = vadd.f32 %v2694, %v2940
    %v2942 = vpop.f32.mrb[0].mxu0
    %2943 = vmatprep.mubr.f32.mxu0 %v137
    %2944 = vmatmul.mubr.f32.gmra.mrb[0].mxu0 %v136
    %v2945 = vpop.f32.mrb[0].mxu0
    %v2946 = vadd.f32 %v2700, %v2945
    %v2947 = vpop.f32.mrb[0].mxu0
    %2948 = vmatprep.mubr.f32.mxu0 %v139
    %2949 = vmatmul.mubr.f32.gmra.mrb[0].mxu0 %v138
    %v2950 = vpop.f32.mrb[0].mxu0
    %v2951 = vadd.f32 %v2706, %v2950
    %v2952 = vpop.f32.mrb[0].mxu0
    %2953 = vmatprep.mubr.f32.mxu0 %v141
    %2954 = vmatmul.mubr.f32.gmra.mrb[0].mxu0 %v140
    %v2955 = vpop.f32.mrb[0].mxu0
    %v2956 = vadd.f32 %v2712, %v2955
    %v2957 = vpop.f32.mrb[0].mxu0
    %2958 = vmatprep.mubr.f32.mxu0 %v143
    %2959 = vmatmul.mubr.f32.gmra.mrb[0].mxu0 %v142
    %v2960 = vpop.f32.mrb[0].mxu0
    %v2961 = vadd.f32 %v2718, %v2960
    %v2962 = vpop.f32.mrb[0].mxu0
    %2963 = vmatprep.mubr.f32.mxu0 %v145
    %2964 = vmatmul.mubr.f32.gmra.mrb[0].mxu0 %v144
    %v2965 = vpop.f32.mrb[0].mxu0
    %v2966 = vadd.f32 %v2724, %v2965
    %v2967 = vpop.f32.mrb[0].mxu0
    %2968 = vmatprep.mubr.f32.mxu0 %v147
    %2969 = vmatmul.mubr.f32.gmra.mrb[0].mxu0 %v146
    %v2970 = vpop.f32.mrb[0].mxu0
    %v2971 = vadd.f32 %v2730, %v2970
    %v2972 = vpop.f32.mrb[0].mxu0
    %2973 = vmatprep.mubr.f32.mxu0 %v149
    %2974 = vmatmul.mubr.f32.gmra.mrb[0].mxu0 %v148
    %v2975 = vpop.f32.mrb[0].mxu0
    %v2976 = vadd.f32 %v2736, %v2975
    %v2977 = vpop.f32.mrb[0].mxu0
    %2978 = vmatprep.mubr.f32.mxu0 %v151
    %2979 = vmatmul.mubr.f32.gmra.mrb[0].mxu0 %v150
    %v2980 = vpop.f32.mrb[0].mxu0
    %v2981 = vadd.f32 %v2742, %v2980
    %v2982 = vpop.f32.mrb[0].mxu0
    %2983 = vmatprep.mubr.f32.mxu0 %v153
    %2984 = vmatmul.mubr.f32.gmra.mrb[0].mxu0 %v152
    %v2985 = vpop.f32.mrb[0].mxu0
    %v2986 = vadd.f32 %v2748, %v2985
    %v2987 = vpop.f32.mrb[0].mxu0
    %2988 = vmatprep.mubr.f32.mxu0 %v155
    %2989 = vmatmul.mubr.f32.gmra.mrb[0].mxu0 %v154
    %v2990 = vpop.f32.mrb[0].mxu0
    %v2991 = vadd.f32 %v2754, %v2990
    %v2992 = vpop.f32.mrb[0].mxu0
    %2993 = vmatprep.mubr.f32.mxu0 %v157
    %2994 = vmatmul.mubr.f32.gmra.mrb[0].mxu0 %v156
    %v2995 = vpop.f32.mrb[0].mxu0
    %v2996 = vadd.f32 %v2760, %v2995
    %v2997 = vpop.f32.mrb[0].mxu0
    %2998 = vmatprep.mubr.f32.mxu0 %v159
    %2999 = vmatmul.mubr.f32.gmra.mrb[0].mxu0 %v158
    %v3000 = vpop.f32.mrb[0].mxu0
    %v3001 = vadd.f32 %v2766, %v3000
    %v3002 = vpop.f32.mrb[0].mxu0
    %3003 = vmatprep.mubr.f32.mxu0 %v161
    %3004 = vmatmul.mubr.f32.gmra.mrb[0].mxu0 %v160
    %v3005 = vpop.f32.mrb[0].mxu0
    %v3006 = vadd.f32 %v2772, %v3005
    %v3007 = vpop.f32.mrb[0].mxu0
    %3008 = vmatprep.mubr.f32.mxu0 %v163
    %3009 = vmatmul.mubr.f32.gmra.mrb[0].mxu0 %v162
    %v3010 = vpop.f32.mrb[0].mxu0
    %v3011 = vadd.f32 %v2778, %v3010
    %v3012 = vpop.f32.mrb[0].mxu0
    %3013 = vmatprep.mubr.f32.mxu0 %v165
    %3014 = vmatmul.mubr.f32.gmra.mrb[0].mxu0 %v164
    %v3015 = vpop.f32.mrb[0].mxu0
    %v3016 = vadd.f32 %v2784, %v3015
    %v3017 = vpop.f32.mrb[0].mxu0
    %3018 = vmatprep.mubr.f32.mxu0 %v167
    %3019 = vmatmul.mubr.f32.gmra.mrb[0].mxu0 %v166
    %v3020 = vpop.f32.mrb[0].mxu0
    %v3021 = vadd.f32 %v2790, %v3020
    %v3022 = vpop.f32.mrb[0].mxu0
    %3023 = vmatprep.mubr.f32.mxu0 %v169
    %3024 = vmatmul.mubr.f32.gmra.mrb[0].mxu0 %v168
    %v3025 = vpop.f32.mrb[0].mxu0
    %v3026 = vadd.f32 %v2796, %v3025
    %v3027 = vpop.f32.mrb[0].mxu0
    %3028 = vmatprep.mubr.f32.mxu0 %v171
    %3029 = vmatmul.mubr.f32.gmra.mrb[0].mxu0 %v170
    %v3030 = vpop.f32.mrb[0].mxu0
    %v3031 = vadd.f32 %v2802, %v3030
    %v3032 = vpop.f32.mrb[0].mxu0
    %3033 = vmatprep.mubr.f32.mxu0 %v173
    %3034 = vmatmul.mubr.f32.gmra.mrb[0].mxu0 %v172
    %v3035 = vpop.f32.mrb[0].mxu0
    %v3036 = vadd.f32 %v2808, %v3035
    %v3037 = vpop.f32.mrb[0].mxu0
    %3038 = vmatprep.mubr.f32.mxu0 %v175
    %3039 = vmatmul.mubr.f32.gmra.mrb[0].mxu0 %v174
    %v3040 = vpop.f32.mrb[0].mxu0
    %v3041 = vadd.f32 %v2814, %v3040
    %v3042 = vpop.f32.mrb[0].mxu0
    %3043 = vmatprep.mubr.f32.mxu0 %v177
    %3044 = vmatmul.mubr.f32.gmra.mrb[0].mxu0 %v176
    %v3045 = vpop.f32.mrb[0].mxu0
    %v3046 = vadd.f32 %v2820, %v3045
    %v3047 = vpop.f32.mrb[0].mxu0
    %3048 = vmatprep.mubr.f32.mxu0 %v179
    %3049 = vmatmul.mubr.f32.gmra.mrb[0].mxu0 %v178
    %v3050 = vpop.f32.mrb[0].mxu0
    %v3051 = vadd.f32 %v2826, %v3050
    %v3052 = vpop.f32.mrb[0].mxu0
    %3053 = vmatprep.mubr.f32.mxu0 %v181
    %3054 = vmatmul.mubr.f32.gmra.mrb[0].mxu0 %v180
    %v3055 = vpop.f32.mrb[0].mxu0
    %v3056 = vadd.f32 %v2832, %v3055
    %v3057 = vpop.f32.mrb[0].mxu0
    %3058 = vdwg.mxu0
    %v3059 = vld [vmem:[%s9] sm:$0x1]
    %v3061 = vlaneseq
    %v3062 = vshrl.u32 %v3061, 7
    %v3063 = vsub.s32 0, %v3062
    %v3064 = vrot.slane %v3059, %v3063
    %v3066 = vadd.f32 %v2901, %v3064
    %v3067 = vadd.f32 %v2906, %v3064
    %v3068 = vadd.f32 %v2911, %v3064
    %v3069 = vadd.f32 %v2916, %v3064
    %v3070 = vadd.f32 %v2921, %v3064
    %v3071 = vadd.f32 %v2926, %v3064
    %v3072 = vadd.f32 %v2931, %v3064
    %v3073 = vadd.f32 %v2936, %v3064
    %v3074 = vadd.f32 %v2941, %v3064
    %v3075 = vadd.f32 %v2946, %v3064
    %v3076 = vadd.f32 %v2951, %v3064
    %v3077 = vadd.f32 %v2956, %v3064
    %v3078 = vadd.f32 %v2961, %v3064
    %v3079 = vadd.f32 %v2966, %v3064
    %v3080 = vadd.f32 %v2971, %v3064
    %v3081 = vadd.f32 %v2976, %v3064
    %v3082 = vadd.f32 %v2981, %v3064
    %v3083 = vadd.f32 %v2986, %v3064
    %v3084 = vadd.f32 %v2991, %v3064
    %v3085 = vadd.f32 %v2996, %v3064
    %v3086 = vadd.f32 %v3001, %v3064
    %v3087 = vadd.f32 %v3006, %v3064
    %v3088 = vadd.f32 %v3011, %v3064
    %v3089 = vadd.f32 %v3016, %v3064
    %v3090 = vadd.f32 %v3021, %v3064
    %v3091 = vadd.f32 %v3026, %v3064
    %v3092 = vadd.f32 %v3031, %v3064
    %v3093 = vadd.f32 %v3036, %v3064
    %v3094 = vadd.f32 %v3041, %v3064
    %v3095 = vadd.f32 %v3046, %v3064
    %v3096 = vadd.f32 %v3051, %v3064
    %v3097 = vadd.f32 %v3056, %v3064
    %v3098 = vmul.f32 %v3066, %v3066
    %v3099 = vmul.f32 %v3067, %v3067
    %v3100 = vmul.f32 %v3068, %v3068
    %v3101 = vmul.f32 %v3069, %v3069
    %v3102 = vmul.f32 %v3070, %v3070
    %v3103 = vmul.f32 %v3071, %v3071
    %v3104 = vmul.f32 %v3072, %v3072
    %v3105 = vmul.f32 %v3073, %v3073
    %v3106 = vmul.f32 %v3074, %v3074
    %v3107 = vmul.f32 %v3075, %v3075
    %v3108 = vmul.f32 %v3076, %v3076
    %v3109 = vmul.f32 %v3077, %v3077
    %v3110 = vmul.f32 %v3078, %v3078
    %v3111 = vmul.f32 %v3079, %v3079
    %v3112 = vmul.f32 %v3080, %v3080
    %v3113 = vmul.f32 %v3081, %v3081
    %v3114 = vmul.f32 %v3082, %v3082
    %v3115 = vmul.f32 %v3083, %v3083
    %v3116 = vmul.f32 %v3084, %v3084
    %v3117 = vmul.f32 %v3085, %v3085
    %v3118 = vmul.f32 %v3086, %v3086
    %v3119 = vmul.f32 %v3087, %v3087
    %v3120 = vmul.f32 %v3088, %v3088
    %v3121 = vmul.f32 %v3089, %v3089
    %v3122 = vmul.f32 %v3090, %v3090
    %v3123 = vmul.f32 %v3091, %v3091
    %v3124 = vmul.f32 %v3092, %v3092
    %v3125 = vmul.f32 %v3093, %v3093
    %v3126 = vmul.f32 %v3094, %v3094
    %v3127 = vmul.f32 %v3095, %v3095
    %v3128 = vmul.f32 %v3096, %v3096
    %v3129 = vmul.f32 %v3097, %v3097
    %3130 = vadd.xlane.f32.xlu0 %v3098
    %v3131 = vpop.xlane.xlu0 %3130
    %3132 = vadd.xlane.f32.xlu0 %v3099
    %v3133 = vpop.xlane.xlu0 %3132
    %3134 = vadd.xlane.f32.xlu0 %v3100
    %v3135 = vpop.xlane.xlu0 %3134
    %3136 = vadd.xlane.f32.xlu0 %v3101
    %v3137 = vpop.xlane.xlu0 %3136
    %3138 = vadd.xlane.f32.xlu0 %v3102
    %v3139 = vpop.xlane.xlu0 %3138
    %3140 = vadd.xlane.f32.xlu0 %v3103
    %v3141 = vpop.xlane.xlu0 %3140
    %3142 = vadd.xlane.f32.xlu0 %v3104
    %v3143 = vpop.xlane.xlu0 %3142
    %3144 = vadd.xlane.f32.xlu0 %v3105
    %v3145 = vpop.xlane.xlu0 %3144
    %3146 = vadd.xlane.f32.xlu0 %v3106
    %v3147 = vpop.xlane.xlu0 %3146
    %3148 = vadd.xlane.f32.xlu0 %v3107
    %v3149 = vpop.xlane.xlu0 %3148
    %3150 = vadd.xlane.f32.xlu0 %v3108
    %v3151 = vpop.xlane.xlu0 %3150
    %3152 = vadd.xlane.f32.xlu0 %v3109
    %v3153 = vpop.xlane.xlu0 %3152
    %3154 = vadd.xlane.f32.xlu0 %v3110
    %v3155 = vpop.xlane.xlu0 %3154
    %3156 = vadd.xlane.f32.xlu0 %v3111
    %v3157 = vpop.xlane.xlu0 %3156
    %3158 = vadd.xlane.f32.xlu0 %v3112
    %v3159 = vpop.xlane.xlu0 %3158
    %3160 = vadd.xlane.f32.xlu0 %v3113
    %v3161 = vpop.xlane.xlu0 %3160
    %3162 = vadd.xlane.f32.xlu0 %v3114
    %v3163 = vpop.xlane.xlu0 %3162
    %3164 = vadd.xlane.f32.xlu0 %v3115
    %v3165 = vpop.xlane.xlu0 %3164
    %3166 = vadd.xlane.f32.xlu0 %v3116
    %v3167 = vpop.xlane.xlu0 %3166
    %3168 = vadd.xlane.f32.xlu0 %v3117
    %v3169 = vpop.xlane.xlu0 %3168
    %3170 = vadd.xlane.f32.xlu0 %v3118
    %v3171 = vpop.xlane.xlu0 %3170
    %3172 = vadd.xlane.f32.xlu0 %v3119
    %v3173 = vpop.xlane.xlu0 %3172
    %3174 = vadd.xlane.f32.xlu0 %v3120
    %v3175 = vpop.xlane.xlu0 %3174
    %3176 = vadd.xlane.f32.xlu0 %v3121
    %v3177 = vpop.xlane.xlu0 %3176
    %3178 = vadd.xlane.f32.xlu0 %v3122
    %v3179 = vpop.xlane.xlu0 %3178
    %3180 = vadd.xlane.f32.xlu0 %v3123
    %v3181 = vpop.xlane.xlu0 %3180
    %3182 = vadd.xlane.f32.xlu0 %v3124
    %v3183 = vpop.xlane.xlu0 %3182
    %3184 = vadd.xlane.f32.xlu0 %v3125
    %v3185 = vpop.xlane.xlu0 %3184
    %3186 = vadd.xlane.f32.xlu0 %v3126
    %v3187 = vpop.xlane.xlu0 %3186
    %3188 = vadd.xlane.f32.xlu0 %v3127
    %v3189 = vpop.xlane.xlu0 %3188
    %3190 = vadd.xlane.f32.xlu0 %v3128
    %v3191 = vpop.xlane.xlu0 %3190
    %3192 = vadd.xlane.f32.xlu0 %v3129
    %v3193 = vpop.xlane.xlu0 %3192
    %v3194 = vmax.f32 %v3131, 1e-24
    %v3195 = vmax.f32 %v3133, 1e-24
    %v3196 = vmax.f32 %v3135, 1e-24
    %v3197 = vmax.f32 %v3137, 1e-24
    %v3198 = vmax.f32 %v3139, 1e-24
    %v3199 = vmax.f32 %v3141, 1e-24
    %v3200 = vmax.f32 %v3143, 1e-24
    %v3201 = vmax.f32 %v3145, 1e-24
    %v3202 = vmax.f32 %v3147, 1e-24
    %v3203 = vmax.f32 %v3149, 1e-24
    %v3204 = vmax.f32 %v3151, 1e-24
    %v3205 = vmax.f32 %v3153, 1e-24
    %v3206 = vmax.f32 %v3155, 1e-24
    %v3207 = vmax.f32 %v3157, 1e-24
    %v3208 = vmax.f32 %v3159, 1e-24
    %v3209 = vmax.f32 %v3161, 1e-24
    %v3210 = vmax.f32 %v3163, 1e-24
    %v3211 = vmax.f32 %v3165, 1e-24
    %v3212 = vmax.f32 %v3167, 1e-24
    %v3213 = vmax.f32 %v3169, 1e-24
    %v3214 = vmax.f32 %v3171, 1e-24
    %v3215 = vmax.f32 %v3173, 1e-24
    %v3216 = vmax.f32 %v3175, 1e-24
    %v3217 = vmax.f32 %v3177, 1e-24
    %v3218 = vmax.f32 %v3179, 1e-24
    %v3219 = vmax.f32 %v3181, 1e-24
    %v3220 = vmax.f32 %v3183, 1e-24
    %v3221 = vmax.f32 %v3185, 1e-24
    %v3222 = vmax.f32 %v3187, 1e-24
    %v3223 = vmax.f32 %v3189, 1e-24
    %v3224 = vmax.f32 %v3191, 1e-24
    %v3225 = vmax.f32 %v3193, 1e-24
    %v3226 = vrsqrt.pop %v3194
    %v3227 = vrsqrt.pop %v3195
    %v3228 = vrsqrt.pop %v3196
    %v3229 = vrsqrt.pop %v3197
    %v3230 = vrsqrt.pop %v3198
    %v3231 = vrsqrt.pop %v3199
    %v3232 = vrsqrt.pop %v3200
    %v3233 = vrsqrt.pop %v3201
    %v3234 = vrsqrt.pop %v3202
    %v3235 = vrsqrt.pop %v3203
    %v3236 = vrsqrt.pop %v3204
    %v3237 = vrsqrt.pop %v3205
    %v3238 = vrsqrt.pop %v3206
    %v3239 = vrsqrt.pop %v3207
    %v3240 = vrsqrt.pop %v3208
    %v3241 = vrsqrt.pop %v3209
    %v3242 = vrsqrt.pop %v3210
    %v3243 = vrsqrt.pop %v3211
    %v3244 = vrsqrt.pop %v3212
    %v3245 = vrsqrt.pop %v3213
    %v3246 = vrsqrt.pop %v3214
    %v3247 = vrsqrt.pop %v3215
    %v3248 = vrsqrt.pop %v3216
    %v3249 = vrsqrt.pop %v3217
    %v3250 = vrsqrt.pop %v3218
    %v3251 = vrsqrt.pop %v3219
    %v3252 = vrsqrt.pop %v3220
    %v3253 = vrsqrt.pop %v3221
    %v3254 = vrsqrt.pop %v3222
    %v3255 = vrsqrt.pop %v3223
    %v3256 = vrsqrt.pop %v3224
    %v3257 = vrsqrt.pop %v3225
    %v3258 = vmul.f32 %v3066, %v3226
    %v3259 = vmul.f32 %v3067, %v3227
    %v3260 = vmul.f32 %v3068, %v3228
    %v3261 = vmul.f32 %v3069, %v3229
    %v3262 = vmul.f32 %v3070, %v3230
    %v3263 = vmul.f32 %v3071, %v3231
    %v3264 = vmul.f32 %v3072, %v3232
    %v3265 = vmul.f32 %v3073, %v3233
    %v3266 = vmul.f32 %v3074, %v3234
    %v3267 = vmul.f32 %v3075, %v3235
    %v3268 = vmul.f32 %v3076, %v3236
    %v3269 = vmul.f32 %v3077, %v3237
    %v3270 = vmul.f32 %v3078, %v3238
    %v3271 = vmul.f32 %v3079, %v3239
    %v3272 = vmul.f32 %v3080, %v3240
    %v3273 = vmul.f32 %v3081, %v3241
    %v3274 = vmul.f32 %v3082, %v3242
    %v3275 = vmul.f32 %v3083, %v3243
    %v3276 = vmul.f32 %v3084, %v3244
    %v3277 = vmul.f32 %v3085, %v3245
    %v3278 = vmul.f32 %v3086, %v3246
    %v3279 = vmul.f32 %v3087, %v3247
    %v3280 = vmul.f32 %v3088, %v3248
    %v3281 = vmul.f32 %v3089, %v3249
    %v3282 = vmul.f32 %v3090, %v3250
    %v3283 = vmul.f32 %v3091, %v3251
    %v3284 = vmul.f32 %v3092, %v3252
    %v3285 = vmul.f32 %v3093, %v3253
    %v3286 = vmul.f32 %v3094, %v3254
    %v3287 = vmul.f32 %v3095, %v3255
    %v3288 = vmul.f32 %v3096, %v3256
    %v3289 = vmul.f32 %v3097, %v3257
    %v3290 = vlaneseq
    %v3291 = vand.u32 %v3290, 127
    %vm3292 = vcmp.lt.s32.totalorder %v3291, 16
    %v3293 = vsel %vm3292, %v3258, -1e+30
    %v3294 = vsel %vm3292, %v3259, -1e+30
    %v3295 = vsel %vm3292, %v3260, -1e+30
    %v3296 = vsel %vm3292, %v3261, -1e+30
    %v3297 = vsel %vm3292, %v3262, -1e+30
    %v3298 = vsel %vm3292, %v3263, -1e+30
    %v3299 = vsel %vm3292, %v3264, -1e+30
    %v3300 = vsel %vm3292, %v3265, -1e+30
    %v3301 = vsel %vm3292, %v3266, -1e+30
    %v3302 = vsel %vm3292, %v3267, -1e+30
    %v3303 = vsel %vm3292, %v3268, -1e+30
    %v3304 = vsel %vm3292, %v3269, -1e+30
    %v3305 = vsel %vm3292, %v3270, -1e+30
    %v3306 = vsel %vm3292, %v3271, -1e+30
    %v3307 = vsel %vm3292, %v3272, -1e+30
    %v3308 = vsel %vm3292, %v3273, -1e+30
    %v3309 = vsel %vm3292, %v3274, -1e+30
    %v3310 = vsel %vm3292, %v3275, -1e+30
    %v3311 = vsel %vm3292, %v3276, -1e+30
    %v3312 = vsel %vm3292, %v3277, -1e+30
    %v3313 = vsel %vm3292, %v3278, -1e+30
    %v3314 = vsel %vm3292, %v3279, -1e+30
    %v3315 = vsel %vm3292, %v3280, -1e+30
    %v3316 = vsel %vm3292, %v3281, -1e+30
    %v3317 = vsel %vm3292, %v3282, -1e+30
    %v3318 = vsel %vm3292, %v3283, -1e+30
    %v3319 = vsel %vm3292, %v3284, -1e+30
    %v3320 = vsel %vm3292, %v3285, -1e+30
    %v3321 = vsel %vm3292, %v3286, -1e+30
    %v3322 = vsel %vm3292, %v3287, -1e+30
    %v3323 = vsel %vm3292, %v3288, -1e+30
    %v3324 = vsel %vm3292, %v3289, -1e+30
    %3325 = vmax.xlane.f32.xlu0 %v3293
    %v3326 = vpop.xlane.xlu0 %3325
    %3327 = vmax.xlane.f32.xlu0 %v3294
    %v3328 = vpop.xlane.xlu0 %3327
    %3329 = vmax.xlane.f32.xlu0 %v3295
    %v3330 = vpop.xlane.xlu0 %3329
    %3331 = vmax.xlane.f32.xlu0 %v3296
    %v3332 = vpop.xlane.xlu0 %3331
    %3333 = vmax.xlane.f32.xlu0 %v3297
    %v3334 = vpop.xlane.xlu0 %3333
    %3335 = vmax.xlane.f32.xlu0 %v3298
    %v3336 = vpop.xlane.xlu0 %3335
    %3337 = vmax.xlane.f32.xlu0 %v3299
    %v3338 = vpop.xlane.xlu0 %3337
    %3339 = vmax.xlane.f32.xlu0 %v3300
    %v3340 = vpop.xlane.xlu0 %3339
    %3341 = vmax.xlane.f32.xlu0 %v3301
    %v3342 = vpop.xlane.xlu0 %3341
    %3343 = vmax.xlane.f32.xlu0 %v3302
    %v3344 = vpop.xlane.xlu0 %3343
    %3345 = vmax.xlane.f32.xlu0 %v3303
    %v3346 = vpop.xlane.xlu0 %3345
    %3347 = vmax.xlane.f32.xlu0 %v3304
    %v3348 = vpop.xlane.xlu0 %3347
    %3349 = vmax.xlane.f32.xlu0 %v3305
    %v3350 = vpop.xlane.xlu0 %3349
    %3351 = vmax.xlane.f32.xlu0 %v3306
    %v3352 = vpop.xlane.xlu0 %3351
    %3353 = vmax.xlane.f32.xlu0 %v3307
    %v3354 = vpop.xlane.xlu0 %3353
    %3355 = vmax.xlane.f32.xlu0 %v3308
    %v3356 = vpop.xlane.xlu0 %3355
    %3357 = vmax.xlane.f32.xlu0 %v3309
    %v3358 = vpop.xlane.xlu0 %3357
    %3359 = vmax.xlane.f32.xlu0 %v3310
    %v3360 = vpop.xlane.xlu0 %3359
    %3361 = vmax.xlane.f32.xlu0 %v3311
    %v3362 = vpop.xlane.xlu0 %3361
    %3363 = vmax.xlane.f32.xlu0 %v3312
    %v3364 = vpop.xlane.xlu0 %3363
    %3365 = vmax.xlane.f32.xlu0 %v3313
    %v3366 = vpop.xlane.xlu0 %3365
    %3367 = vmax.xlane.f32.xlu0 %v3314
    %v3368 = vpop.xlane.xlu0 %3367
    %3369 = vmax.xlane.f32.xlu0 %v3315
    %v3370 = vpop.xlane.xlu0 %3369
    %3371 = vmax.xlane.f32.xlu0 %v3316
    %v3372 = vpop.xlane.xlu0 %3371
    %3373 = vmax.xlane.f32.xlu0 %v3317
    %v3374 = vpop.xlane.xlu0 %3373
    %3375 = vmax.xlane.f32.xlu0 %v3318
    %v3376 = vpop.xlane.xlu0 %3375
    %3377 = vmax.xlane.f32.xlu0 %v3319
    %v3378 = vpop.xlane.xlu0 %3377
    %3379 = vmax.xlane.f32.xlu0 %v3320
    %v3380 = vpop.xlane.xlu0 %3379
    %3381 = vmax.xlane.f32.xlu0 %v3321
    %v3382 = vpop.xlane.xlu0 %3381
    %3383 = vmax.xlane.f32.xlu0 %v3322
    %v3384 = vpop.xlane.xlu0 %3383
    %3385 = vmax.xlane.f32.xlu0 %v3323
    %v3386 = vpop.xlane.xlu0 %3385
    %3387 = vmax.xlane.f32.xlu0 %v3324
    %v3388 = vpop.xlane.xlu0 %3387
    %v3389 = vsub.f32 %v3293, %v3326
    %v3390 = vsub.f32 %v3294, %v3328
    %v3391 = vsub.f32 %v3295, %v3330
    %v3392 = vsub.f32 %v3296, %v3332
    %v3393 = vsub.f32 %v3297, %v3334
    %v3394 = vsub.f32 %v3298, %v3336
    %v3395 = vsub.f32 %v3299, %v3338
    %v3396 = vsub.f32 %v3300, %v3340
    %v3397 = vsub.f32 %v3301, %v3342
    %v3398 = vsub.f32 %v3302, %v3344
    %v3399 = vsub.f32 %v3303, %v3346
    %v3400 = vsub.f32 %v3304, %v3348
    %v3401 = vsub.f32 %v3305, %v3350
    %v3402 = vsub.f32 %v3306, %v3352
    %v3403 = vsub.f32 %v3307, %v3354
    %v3404 = vsub.f32 %v3308, %v3356
    %v3405 = vsub.f32 %v3309, %v3358
    %v3406 = vsub.f32 %v3310, %v3360
    %v3407 = vsub.f32 %v3311, %v3362
    %v3408 = vsub.f32 %v3312, %v3364
    %v3409 = vsub.f32 %v3313, %v3366
    %v3410 = vsub.f32 %v3314, %v3368
    %v3411 = vsub.f32 %v3315, %v3370
    %v3412 = vsub.f32 %v3316, %v3372
    %v3413 = vsub.f32 %v3317, %v3374
    %v3414 = vsub.f32 %v3318, %v3376
    %v3415 = vsub.f32 %v3319, %v3378
    %v3416 = vsub.f32 %v3320, %v3380
    %v3417 = vsub.f32 %v3321, %v3382
    %v3418 = vsub.f32 %v3322, %v3384
    %v3419 = vsub.f32 %v3323, %v3386
    %v3420 = vsub.f32 %v3324, %v3388
    %v3421 = vmul.f32 %v3389, 1.442695
    %v3422 = vpow.pop %v3421
    %v3423 = vmul.f32 %v3390, 1.442695
    %v3424 = vpow.pop %v3423
    %v3425 = vmul.f32 %v3391, 1.442695
    %v3426 = vpow.pop %v3425
    %v3427 = vmul.f32 %v3392, 1.442695
    %v3428 = vpow.pop %v3427
    %v3429 = vmul.f32 %v3393, 1.442695
    %v3430 = vpow.pop %v3429
    %v3431 = vmul.f32 %v3394, 1.442695
    %v3432 = vpow.pop %v3431
    %v3433 = vmul.f32 %v3395, 1.442695
    %v3434 = vpow.pop %v3433
    %v3435 = vmul.f32 %v3396, 1.442695
    %v3436 = vpow.pop %v3435
    %v3437 = vmul.f32 %v3397, 1.442695
    %v3438 = vpow.pop %v3437
    %v3439 = vmul.f32 %v3398, 1.442695
    %v3440 = vpow.pop %v3439
    %v3441 = vmul.f32 %v3399, 1.442695
    %v3442 = vpow.pop %v3441
    %v3443 = vmul.f32 %v3400, 1.442695
    %v3444 = vpow.pop %v3443
    %v3445 = vmul.f32 %v3401, 1.442695
    %v3446 = vpow.pop %v3445
    %v3447 = vmul.f32 %v3402, 1.442695
    %v3448 = vpow.pop %v3447
    %v3449 = vmul.f32 %v3403, 1.442695
    %v3450 = vpow.pop %v3449
    %v3451 = vmul.f32 %v3404, 1.442695
    %v3452 = vpow.pop %v3451
    %v3453 = vmul.f32 %v3405, 1.442695
    %v3454 = vpow.pop %v3453
    %v3455 = vmul.f32 %v3406, 1.442695
    %v3456 = vpow.pop %v3455
    %v3457 = vmul.f32 %v3407, 1.442695
    %v3458 = vpow.pop %v3457
    %v3459 = vmul.f32 %v3408, 1.442695
    %v3460 = vpow.pop %v3459
    %v3461 = vmul.f32 %v3409, 1.442695
    %v3462 = vpow.pop %v3461
    %v3463 = vmul.f32 %v3410, 1.442695
    %v3464 = vpow.pop %v3463
    %v3465 = vmul.f32 %v3411, 1.442695
    %v3466 = vpow.pop %v3465
    %v3467 = vmul.f32 %v3412, 1.442695
    %v3468 = vpow.pop %v3467
    %v3469 = vmul.f32 %v3413, 1.442695
    %v3470 = vpow.pop %v3469
    %v3471 = vmul.f32 %v3414, 1.442695
    %v3472 = vpow.pop %v3471
    %v3473 = vmul.f32 %v3415, 1.442695
    %v3474 = vpow.pop %v3473
    %v3475 = vmul.f32 %v3416, 1.442695
    %v3476 = vpow.pop %v3475
    %v3477 = vmul.f32 %v3417, 1.442695
    %v3478 = vpow.pop %v3477
    %v3479 = vmul.f32 %v3418, 1.442695
    %v3480 = vpow.pop %v3479
    %v3481 = vmul.f32 %v3419, 1.442695
    %v3482 = vpow.pop %v3481
    %v3483 = vmul.f32 %v3420, 1.442695
    %v3484 = vpow.pop %v3483
    %3485 = vadd.xlane.f32.xlu0 %v3422
    %v3486 = vpop.xlane.xlu0 %3485
    %3487 = vadd.xlane.f32.xlu0 %v3424
    %v3488 = vpop.xlane.xlu0 %3487
    %3489 = vadd.xlane.f32.xlu0 %v3426
    %v3490 = vpop.xlane.xlu0 %3489
    %3491 = vadd.xlane.f32.xlu0 %v3428
    %v3492 = vpop.xlane.xlu0 %3491
    %3493 = vadd.xlane.f32.xlu0 %v3430
    %v3494 = vpop.xlane.xlu0 %3493
    %3495 = vadd.xlane.f32.xlu0 %v3432
    %v3496 = vpop.xlane.xlu0 %3495
    %3497 = vadd.xlane.f32.xlu0 %v3434
    %v3498 = vpop.xlane.xlu0 %3497
    %3499 = vadd.xlane.f32.xlu0 %v3436
    %v3500 = vpop.xlane.xlu0 %3499
    %3501 = vadd.xlane.f32.xlu0 %v3438
    %v3502 = vpop.xlane.xlu0 %3501
    %3503 = vadd.xlane.f32.xlu0 %v3440
    %v3504 = vpop.xlane.xlu0 %3503
    %3505 = vadd.xlane.f32.xlu0 %v3442
    %v3506 = vpop.xlane.xlu0 %3505
    %3507 = vadd.xlane.f32.xlu0 %v3444
    %v3508 = vpop.xlane.xlu0 %3507
    %3509 = vadd.xlane.f32.xlu0 %v3446
    %v3510 = vpop.xlane.xlu0 %3509
    %3511 = vadd.xlane.f32.xlu0 %v3448
    %v3512 = vpop.xlane.xlu0 %3511
    %3513 = vadd.xlane.f32.xlu0 %v3450
    %v3514 = vpop.xlane.xlu0 %3513
    %3515 = vadd.xlane.f32.xlu0 %v3452
    %v3516 = vpop.xlane.xlu0 %3515
    %3517 = vadd.xlane.f32.xlu0 %v3454
    %v3518 = vpop.xlane.xlu0 %3517
    %3519 = vadd.xlane.f32.xlu0 %v3456
    %v3520 = vpop.xlane.xlu0 %3519
    %3521 = vadd.xlane.f32.xlu0 %v3458
    %v3522 = vpop.xlane.xlu0 %3521
    %3523 = vadd.xlane.f32.xlu0 %v3460
    %v3524 = vpop.xlane.xlu0 %3523
    %3525 = vadd.xlane.f32.xlu0 %v3462
    %v3526 = vpop.xlane.xlu0 %3525
    %3527 = vadd.xlane.f32.xlu0 %v3464
    %v3528 = vpop.xlane.xlu0 %3527
    %3529 = vadd.xlane.f32.xlu0 %v3466
    %v3530 = vpop.xlane.xlu0 %3529
    %3531 = vadd.xlane.f32.xlu0 %v3468
    %v3532 = vpop.xlane.xlu0 %3531
    %3533 = vadd.xlane.f32.xlu0 %v3470
    %v3534 = vpop.xlane.xlu0 %3533
    %3535 = vadd.xlane.f32.xlu0 %v3472
    %v3536 = vpop.xlane.xlu0 %3535
    %3537 = vadd.xlane.f32.xlu0 %v3474
    %v3538 = vpop.xlane.xlu0 %3537
    %3539 = vadd.xlane.f32.xlu0 %v3476
    %v3540 = vpop.xlane.xlu0 %3539
    %3541 = vadd.xlane.f32.xlu0 %v3478
    %v3542 = vpop.xlane.xlu0 %3541
    %3543 = vadd.xlane.f32.xlu0 %v3480
    %v3544 = vpop.xlane.xlu0 %3543
    %3545 = vadd.xlane.f32.xlu0 %v3482
    %v3546 = vpop.xlane.xlu0 %3545
    %3547 = vadd.xlane.f32.xlu0 %v3484
    %v3548 = vpop.xlane.xlu0 %3547
    %v3549 = vlog2.pop %v3486
    %v3550 = vmul.f32 %v3549, 0.6931472
    %v3551 = vlog2.pop %v3488
    %v3552 = vmul.f32 %v3551, 0.6931472
    %v3553 = vlog2.pop %v3490
    %v3554 = vmul.f32 %v3553, 0.6931472
    %v3555 = vlog2.pop %v3492
    %v3556 = vmul.f32 %v3555, 0.6931472
    %v3557 = vlog2.pop %v3494
    %v3558 = vmul.f32 %v3557, 0.6931472
    %v3559 = vlog2.pop %v3496
    %v3560 = vmul.f32 %v3559, 0.6931472
    %v3561 = vlog2.pop %v3498
    %v3562 = vmul.f32 %v3561, 0.6931472
    %v3563 = vlog2.pop %v3500
    %v3564 = vmul.f32 %v3563, 0.6931472
    %v3565 = vlog2.pop %v3502
    %v3566 = vmul.f32 %v3565, 0.6931472
    %v3567 = vlog2.pop %v3504
    %v3568 = vmul.f32 %v3567, 0.6931472
    %v3569 = vlog2.pop %v3506
    %v3570 = vmul.f32 %v3569, 0.6931472
    %v3571 = vlog2.pop %v3508
    %v3572 = vmul.f32 %v3571, 0.6931472
    %v3573 = vlog2.pop %v3510
    %v3574 = vmul.f32 %v3573, 0.6931472
    %v3575 = vlog2.pop %v3512
    %v3576 = vmul.f32 %v3575, 0.6931472
    %v3577 = vlog2.pop %v3514
    %v3578 = vmul.f32 %v3577, 0.6931472
    %v3579 = vlog2.pop %v3516
    %v3580 = vmul.f32 %v3579, 0.6931472
    %v3581 = vlog2.pop %v3518
    %v3582 = vmul.f32 %v3581, 0.6931472
    %v3583 = vlog2.pop %v3520
    %v3584 = vmul.f32 %v3583, 0.6931472
    %v3585 = vlog2.pop %v3522
    %v3586 = vmul.f32 %v3585, 0.6931472
    %v3587 = vlog2.pop %v3524
    %v3588 = vmul.f32 %v3587, 0.6931472
    %v3589 = vlog2.pop %v3526
    %v3590 = vmul.f32 %v3589, 0.6931472
    %v3591 = vlog2.pop %v3528
    %v3592 = vmul.f32 %v3591, 0.6931472
    %v3593 = vlog2.pop %v3530
    %v3594 = vmul.f32 %v3593, 0.6931472
    %v3595 = vlog2.pop %v3532
    %v3596 = vmul.f32 %v3595, 0.6931472
    %v3597 = vlog2.pop %v3534
    %v3598 = vmul.f32 %v3597, 0.6931472
    %v3599 = vlog2.pop %v3536
    %v3600 = vmul.f32 %v3599, 0.6931472
    %v3601 = vlog2.pop %v3538
    %v3602 = vmul.f32 %v3601, 0.6931472
    %v3603 = vlog2.pop %v3540
    %v3604 = vmul.f32 %v3603, 0.6931472
    %v3605 = vlog2.pop %v3542
    %v3606 = vmul.f32 %v3605, 0.6931472
    %v3607 = vlog2.pop %v3544
    %v3608 = vmul.f32 %v3607, 0.6931472
    %v3609 = vlog2.pop %v3546
    %v3610 = vmul.f32 %v3609, 0.6931472
    %v3611 = vlog2.pop %v3548
    %v3612 = vmul.f32 %v3611, 0.6931472
    %v3613 = vsub.f32 %v3389, %v3550
    %v3614 = vsub.f32 %v3390, %v3552
    %v3615 = vsub.f32 %v3391, %v3554
    %v3616 = vsub.f32 %v3392, %v3556
    %v3617 = vsub.f32 %v3393, %v3558
    %v3618 = vsub.f32 %v3394, %v3560
    %v3619 = vsub.f32 %v3395, %v3562
    %v3620 = vsub.f32 %v3396, %v3564
    %v3621 = vsub.f32 %v3397, %v3566
    %v3622 = vsub.f32 %v3398, %v3568
    %v3623 = vsub.f32 %v3399, %v3570
    %v3624 = vsub.f32 %v3400, %v3572
    %v3625 = vsub.f32 %v3401, %v3574
    %v3626 = vsub.f32 %v3402, %v3576
    %v3627 = vsub.f32 %v3403, %v3578
    %v3628 = vsub.f32 %v3404, %v3580
    %v3629 = vsub.f32 %v3405, %v3582
    %v3630 = vsub.f32 %v3406, %v3584
    %v3631 = vsub.f32 %v3407, %v3586
    %v3632 = vsub.f32 %v3408, %v3588
    %v3633 = vsub.f32 %v3409, %v3590
    %v3634 = vsub.f32 %v3410, %v3592
    %v3635 = vsub.f32 %v3411, %v3594
    %v3636 = vsub.f32 %v3412, %v3596
    %v3637 = vsub.f32 %v3413, %v3598
    %v3638 = vsub.f32 %v3414, %v3600
    %v3639 = vsub.f32 %v3415, %v3602
    %v3640 = vsub.f32 %v3416, %v3604
    %v3641 = vsub.f32 %v3417, %v3606
    %v3642 = vsub.f32 %v3418, %v3608
    %v3643 = vsub.f32 %v3419, %v3610
    %v3644 = vsub.f32 %v3420, %v3612
    %3645 = vst [vmem:[#allocation13] sm:$0xff] %v3613
    %3646 = vst [vmem:[#allocation13 + $0x8] sm:$0xff] %v3614
    %3647 = vst [vmem:[#allocation13 + $0x10] sm:$0xff] %v3615
    %3648 = vst [vmem:[#allocation13 + $0x18] sm:$0xff] %v3616
    %3649 = vst [vmem:[#allocation13 + $0x20] sm:$0xff] %v3617
    %3650 = vst [vmem:[#allocation13 + $0x28] sm:$0xff] %v3618
    %3651 = vst [vmem:[#allocation13 + $0x30] sm:$0xff] %v3619
    %3652 = vst [vmem:[#allocation13 + $0x38] sm:$0xff] %v3620
    %3653 = vst [vmem:[#allocation13 + $0x40] sm:$0xff] %v3621
    %3654 = vst [vmem:[#allocation13 + $0x48] sm:$0xff] %v3622
    %3655 = vst [vmem:[#allocation13 + $0x50] sm:$0xff] %v3623
    %3656 = vst [vmem:[#allocation13 + $0x58] sm:$0xff] %v3624
    %3657 = vst [vmem:[#allocation13 + $0x60] sm:$0xff] %v3625
    %3658 = vst [vmem:[#allocation13 + $0x68] sm:$0xff] %v3626
    %3659 = vst [vmem:[#allocation13 + $0x70] sm:$0xff] %v3627
    %3660 = vst [vmem:[#allocation13 + $0x78] sm:$0xff] %v3628
    %3661 = vst [vmem:[#allocation13 + $0x80] sm:$0xff] %v3629
    %3662 = vst [vmem:[#allocation13 + $0x88] sm:$0xff] %v3630
    %3663 = vst [vmem:[#allocation13 + $0x90] sm:$0xff] %v3631
    %3664 = vst [vmem:[#allocation13 + $0x98] sm:$0xff] %v3632
    %3665 = vst [vmem:[#allocation13 + $0xa0] sm:$0xff] %v3633
    %3666 = vst [vmem:[#allocation13 + $0xa8] sm:$0xff] %v3634
    %3667 = vst [vmem:[#allocation13 + $0xb0] sm:$0xff] %v3635
    %3668 = vst [vmem:[#allocation13 + $0xb8] sm:$0xff] %v3636
    %3669 = vst [vmem:[#allocation13 + $0xc0] sm:$0xff] %v3637
    %3670 = vst [vmem:[#allocation13 + $0xc8] sm:$0xff] %v3638
    %3671 = vst [vmem:[#allocation13 + $0xd0] sm:$0xff] %v3639
    %3672 = vst [vmem:[#allocation13 + $0xd8] sm:$0xff] %v3640
    %3673 = vst [vmem:[#allocation13 + $0xe0] sm:$0xff] %v3641
    %3674 = vst [vmem:[#allocation13 + $0xe8] sm:$0xff] %v3642
    %3675 = vst [vmem:[#allocation13 + $0xf0] sm:$0xff] %v3643
    %3676 = vst [vmem:[#allocation13 + $0xf8] sm:$0xff] %v3644
    // Predicated region
    $region66: #{tpu_custom_call.1} parent=1 // pred_check
      _
    $region67: #{tpu_custom_call.1} parent=1 // pred_check_branch
      %3678 = sbr.rel (0) target = $region69
    $region68: #{tpu_custom_call.1} parent=1 // pred_region
      %s3680 = ssub.s32 4096, 4096
      %3681 = vsyncadd [#allocation4], %s3680
      %s3682 = sshll.u32 [#allocation13], 4
      %s3683 = int_to_ptr.vmem [resolvable:$true] %s3682
      %3688 = dma.vmem_to_hbm [thread:$0]  %s3683, 4096, %s10, [#allocation4], 128, 128, 8
    $region69: #{tpu_custom_call.1} parent=1 // pred_fallthru
      _
    // Predicated region
    $region70: #{tpu_custom_call.1} parent=1 // pred_check
      _
    $region71: #{tpu_custom_call.1} parent=1 // pred_check_branch
      %3690 = sbr.rel (0) target = $region73
    $region72: #{tpu_custom_call.1} parent=1 // pred_region
      %3691 = dma.done [#allocation4], 4096
    $region73: #{tpu_custom_call.1} parent=1 // pred_fallthru
      _
    %3692 = vsyncpa [#allocation3], 1
    %3693 = vsyncpa [#allocation6], 1
    %3694 = vsyncpa [#allocation9], 1
    %3695 = vsyncpa [#allocation12], 1
    %3696 = vsyncpa [#allocation4], 1

</llo_original>
